<compile_context>
chip_gen: v7x
topology: tpu7x:2x2x1
jax: 0.10.0
libtpu: 0.0.40
codegen_flags: <defaults>
</compile_context>

<pallas_src>
import functools
import math

import jax
import jax.numpy as jnp
from jax.experimental import pallas as pl
from jax.experimental.pallas import tpu as pltpu

LN_EPS = 1e-12  # config.layer_norm_eps


# ----------------------------- in-kernel helpers ----------------------------

def _gelu_erf(x):
    # Exact (erf-based) BERT GELU.  erf computed with the Abramowitz-Stegun
    # 7.1.26 polynomial (|err| < 1.5e-7) to stay on guaranteed Mosaic ops
    # (exp / mul / select) instead of relying on an erf lowering.
    # TODO(synk): replace with jax.lax.erf if/when its Mosaic lowering is guaranteed.
    z = x * (1.0 / math.sqrt(2.0))
    a = jnp.abs(z)
    t = 1.0 / (1.0 + 0.3275911 * a)
    poly = t * (0.254829592 + t * (-0.284496736 + t * (1.421413741
               + t * (-1.453152027 + t * 1.061405429))))
    erf_abs = 1.0 - poly * jnp.exp(-a * a)
    erf = jnp.where(z >= 0.0, erf_abs, -erf_abs)
    return 0.5 * x * (1.0 + erf)


def _layernorm(x, g, b, eps):
    mu = jnp.mean(x, axis=-1, keepdims=True)
    xc = x - mu
    var = jnp.mean(xc * xc, axis=-1, keepdims=True)
    return xc * jax.lax.rsqrt(var + eps) * g + b


# ----------------------------- Pallas kernels ------------------------------

def _mlp_kernel(*refs):
    # refs = (x_ref, w0, b0, w1, b1, ..., out_ref); relu between layers,
    # dropout = identity (eval mode).
    x_ref, out_ref = refs[0], refs[-1]
    wb = refs[1:-1]
    n = len(wb) // 2
    y = x_ref[...]
    for i in range(n):
        if i > 0:
            y = jnp.maximum(y, 0.0)
        y = jnp.dot(y, wb[2 * i][...], preferred_element_type=jnp.float32) + wb[2 * i + 1][...]
    out_ref[...] = y


def pallas_mlp(x, layers):
    """Whole mlp (all layers) fused into a single pallas_call."""
    args = [x]
    for (w, b) in layers:
        args += [w, b]
    m = x.shape[0]
    dout = layers[-1][0].shape[1]
    return pl.pallas_call(
        _mlp_kernel,
        out_shape=jax.ShapeDtypeStruct((m, dout), jnp.float32),
    )(*args)


def _layernorm_kernel(x_ref, g_ref, b_ref, o_ref, *, eps):
    o_ref[...] = _layernorm(x_ref[...], g_ref[...], b_ref[...], eps)


def pallas_layernorm(x, gamma, beta, eps=LN_EPS):
    return pl.pallas_call(
        functools.partial(_layernorm_kernel, eps=eps),
        out_shape=jax.ShapeDtypeStruct(x.shape, jnp.float32),
    )(x, gamma, beta)


def _bert_layer_kernel(x_ref, m_ref, wqkv_ref, bqkv_ref, wo_ref, bo_ref,
                       g1_ref, b1_ref, wi_ref, bi_ref, wo2_ref, bo2_ref,
                       g2_ref, b2_ref, p_ref, o_ref, *, num_heads, scale, eps):
    # One full BertLayer per grid step (one batch element), everything in VMEM.
    x = x_ref[...]                          # (Lp, D)
    Lp, D = x.shape
    Dh = D // num_heads
    mask = m_ref[...]                       # (Lp, Lp) additive mask

    # fused QKV projection: (Lp, 3D)
    qkv = jnp.dot(x, wqkv_ref[...], preferred_element_type=jnp.float32) + bqkv_ref[...]

    ctx_parts = []
    for h in range(num_heads):              # static unroll over heads
        q = qkv[:, h * Dh:(h + 1) * Dh] * scale
        k = qkv[:, D + h * Dh:D + (h + 1) * Dh]
        v = qkv[:, 2 * D + h * Dh:2 * D + (h + 1) * Dh]
        s = jax.lax.dot_general(q, k, (((1,), (1,)), ((), ())),
                                preferred_element_type=jnp.float32) + mask
        s = s - jnp.max(s, axis=-1, keepdims=True)
        e = jnp.exp(s)
        p = e * pl.reciprocal(jnp.sum(e, axis=-1, keepdims=True), approx=True)
        p_ref[h] = p                        # attention probs for this head
        ctx_parts.append(jnp.dot(p, v, preferred_element_type=jnp.float32))
    ctx = jnp.concatenate(ctx_parts, axis=-1)   # (Lp, D), lane-dense

    # BertSelfOutput: dense + residual + LayerNorm
    y = jnp.dot(ctx, wo_ref[...], preferred_element_type=jnp.float32) + bo_ref[...] + x
    y1 = _layernorm(y, g1_ref[...], b1_ref[...], eps)

    # BertIntermediate (GELU) + BertOutput: dense + residual + LayerNorm
    inter = jnp.dot(y1, wi_ref[...], preferred_element_type=jnp.float32) + bi_ref[...]
    inter = _gelu_erf(inter)
    z = jnp.dot(inter, wo2_ref[...], preferred_element_type=jnp.float32) + bo2_ref[...] + y1
    o_ref[...] = _layernorm(z, g2_ref[...], b2_ref[...], eps)


def pallas_bert_layer(x, mask2d, p, num_heads):
    B, Lp, D = x.shape
    H = num_heads
    I = p["wi"].shape[1]
    scale = 1.0 / math.sqrt(D // H)

    def full2(shape):
        return pl.BlockSpec(shape, lambda b: (0, 0))

    in_specs = [
        pl.BlockSpec((pl.Squeezed(), Lp, D), lambda b: (b, 0, 0)),    # x
        pl.BlockSpec((pl.Squeezed(), Lp, Lp), lambda b: (b, 0, 0)),   # mask
        full2((D, 3 * D)), full2((1, 3 * D)),                          # wqkv, bqkv
        full2((D, D)), full2((1, D)), full2((1, D)), full2((1, D)),    # wo, bo, ln1
        full2((D, I)), full2((1, I)),                                  # wi, bi
        full2((I, D)), full2((1, D)), full2((1, D)), full2((1, D)),    # wo2, bo2, ln2
    ]
    out_specs = (
        pl.BlockSpec((pl.Squeezed(), H, Lp, Lp), lambda b: (b, 0, 0, 0)),
        pl.BlockSpec((pl.Squeezed(), Lp, D), lambda b: (b, 0, 0)),
    )
    probs, out = pl.pallas_call(
        functools.partial(_bert_layer_kernel, num_heads=H, scale=scale, eps=LN_EPS),
        out_shape=(jax.ShapeDtypeStruct((B, H, Lp, Lp), jnp.float32),
                   jax.ShapeDtypeStruct((B, Lp, D), jnp.float32)),
        grid=(B,),
        in_specs=in_specs,
        out_specs=out_specs,
        compiler_params=pltpu.CompilerParams(dimension_semantics=("parallel",)),
    )(x, mask2d, p["wqkv"], p["bqkv"], p["wo"], p["bo"], p["ln1_g"], p["ln1_b"],
      p["wi"], p["bi"], p["wo2"], p["bo2"], p["ln2_g"], p["ln2_b"])
    return probs, out


# ----------------------------- model forward --------------------------------

def vqa_forward(params, ifv, ifv_7x7, qtokens, num_heads):
    bsz, nbox, _ = ifv.shape
    qlength = qtokens.shape[1]
    D = params["qembed"].shape[1]
    L = qlength + nbox + 49
    Lp = ((L + 7) // 8) * 8          # pad seq axis to a sublane multiple of 8

    # availability mask: -1e10 on padded question tokens and on seq padding
    qmask = (qtokens <= 0).astype(jnp.float32) * -1e10
    imask = jnp.zeros((bsz, nbox + 49), jnp.float32)
    padm = jnp.full((bsz, Lp - L), -1e10, jnp.float32)
    avail = jnp.concatenate([qmask, imask, padm], axis=1)          # (bsz, Lp)
    mask2d = avail[:, None, :] + avail[:, :, None]                 # (bsz, Lp, Lp)

    et = params["embed_type"]
    vtype = jnp.concatenate([
        jnp.broadcast_to(et[0][None, None, :], (1, qlength, D)),
        jnp.broadcast_to(et[1][None, None, :], (1, nbox, D)),
        jnp.broadcast_to(et[2][None, None, :], (1, 49, D)),
    ], axis=1)                                                     # (1, L, D)
    qloc = params["embed_qloc"][:qlength][None]                    # (1, qlength, D)
    iloc = params["embed_iloc_7x7"][None]                          # (1, 49, D)

    q = jnp.take(params["qembed"], qtokens, axis=0)                # (bsz, qlength, D)
    i = pallas_mlp(ifv.reshape(bsz * nbox, -1), params["it"]).reshape(bsz, nbox, D)
    i77 = pallas_mlp(ifv_7x7.reshape(bsz * 49, -1), params["it2"]).reshape(bsz, 49, D)

    h = jnp.concatenate([q + qloc, i, i77 + iloc], axis=1) + vtype  # (bsz, L, D)
    h = jnp.pad(h, ((0, 0), (0, Lp - L), (0, 0)))                   # zero-pad seq

    # simple_bert_encoder: LayerNorm -> dropout(id) -> BertLayer stack
    x = pallas_layernorm(h.reshape(bsz * Lp, D),
                         params["enc_ln_g"], params["enc_ln_b"]).reshape(bsz, Lp, D)
    atts = []
    for lp in params["layers"]:
        probs, x = pallas_bert_layer(x, mask2d, lp, num_heads)
        atts.append(probs[:, :, :L, :L])     # drop padded rows/cols

    fv = x[:, 0, :]                          # hs[-1][:, 0, :]
    a = pallas_mlp(fv, params["vqa"])        # (bsz, nanswers)
    return a, atts


# ----------------------------- param init -----------------------------------

def init_params(key, cfg):
    D = cfg["hidden_size"]
    keys = iter(jax.random.split(key, 128))

    def lin(din, dout):
        w = jax.random.normal(next(keys), (din, dout), jnp.float32) * 0.05
        b = jax.random.normal(next(keys), (1, dout), jnp.float32) * 0.01
        return w, b

    def mlp_params(din, nh, dout, nlayers):
        if nlayers == 1:
            return [lin(din, dout)]
        layers = [lin(din, nh)]
        for _ in range(1, nlayers - 1):
            layers.append(lin(nh, nh))
        layers.append(lin(nh, dout))
        return layers

    params = {}
    params["it"] = mlp_params(cfg["nhimage"], cfg["nh"], D, cfg["nlayers"])
    params["it2"] = mlp_params(cfg["nhimage"], cfg["nh"], D, cfg["nlayers"])
    params["vqa"] = mlp_params(D, cfg["nh"], cfg["nanswers"], 2)

    qembed = jax.random.normal(next(keys), (cfg["nwords"] + 1, D), jnp.float32) * 0.02
    params["qembed"] = qembed.at[0].set(0.0)   # padding_idx=0 row is zero
    params["embed_type"] = jax.random.normal(next(keys), (3, D), jnp.float32) * 0.02
    params["embed_qloc"] = jax.random.normal(next(keys), (cfg["max_qlength"], D), jnp.float32) * 0.02
    params["embed_iloc_7x7"] = jax.random.normal(next(keys), (49, D), jnp.float32) * 0.02
    params["enc_ln_g"] = jnp.ones((1, D), jnp.float32)
    params["enc_ln_b"] = jnp.zeros((1, D), jnp.float32)

    I = cfg["intermediate_size"]
    layers = []
    for _ in range(cfg["num_hidden_layers"]):
        wq, bq = lin(D, D); wk, bk = lin(D, D); wv, bv = lin(D, D)
        wo, bo = lin(D, D); wi, bi = lin(D, I); wo2, bo2 = lin(I, D)
        layers.append(dict(
            wqkv=jnp.concatenate([wq, wk, wv], axis=1),     # packed (D, 3D)
            bqkv=jnp.concatenate([bq, bk, bv], axis=1),     # packed (1, 3D)
            wo=wo, bo=bo,
            ln1_g=jnp.ones((1, D), jnp.float32), ln1_b=jnp.zeros((1, D), jnp.float32),
            wi=wi, bi=bi, wo2=wo2, bo2=bo2,
            ln2_g=jnp.ones((1, D), jnp.float32), ln2_b=jnp.zeros((1, D), jnp.float32)))
    params["layers"] = layers
    return params


# --------------------------------- main --------------------------------------

if __name__ == "__main__":
    cfg = dict(nhimage=16, nh=32, hidden_size=32, nwords=20, nlayers=2,
               nanswers=10, max_qlength=16, num_hidden_layers=2,
               num_attention_heads=4, intermediate_size=64)
    bsz, nbox, qlength = 2, 4, 8

    key = jax.random.PRNGKey(0)
    kp, k1, k2, k3 = jax.random.split(key, 4)
    params = init_params(kp, cfg)

    ifv = jax.random.normal(k1, (bsz, nbox, cfg["nhimage"]), jnp.float32)
    ifv_7x7 = jax.random.normal(k2, (bsz, 49, cfg["nhimage"]), jnp.float32)
    qtokens = jax.random.randint(k3, (bsz, qlength), 0, cfg["nwords"] + 1,
                                 dtype=jnp.int32)
    qtokens = qtokens.at[:, -2:].set(0)   # exercise the padding mask

    fwd = jax.jit(functools.partial(vqa_forward,
                                    num_heads=cfg["num_attention_heads"]))
    a, atts = fwd(params, ifv, ifv_7x7, qtokens)
    jax.block_until_ready((a, atts))

    L = qlength + nbox + 49
    assert a.shape == (bsz, cfg["nanswers"])
    assert len(atts) == cfg["num_hidden_layers"]
    assert atts[0].shape == (bsz, cfg["num_attention_heads"], L, L)
    assert bool(jnp.all(jnp.isfinite(a)))
    print("KERNEL_OK")
</pallas_src>

<mosaic_0001>
module attributes {stable_mosaic.version = 11 : i64} {
  func.func @_mlp_kernel(%arg0: memref<8x16xf32, #tpu.memory_space<vmem>>, %arg1: memref<16x32xf32, #tpu.memory_space<vmem>>, %arg2: memref<1x32xf32, #tpu.memory_space<vmem>>, %arg3: memref<32x32xf32, #tpu.memory_space<vmem>>, %arg4: memref<1x32xf32, #tpu.memory_space<vmem>>, %arg5: memref<8x32xf32, #tpu.memory_space<vmem>>) attributes {dimension_semantics = [], scalar_prefetch = 0 : i64, scratch_operands = 0 : i64, tpu.core_type = #tpu.core_type<tc>} {
    %c0 = arith.constant 0 : index
    %c0_0 = arith.constant 0 : index
    %0 = vector.load %arg0[%c0, %c0_0] : memref<8x16xf32, #tpu.memory_space<vmem>>, vector<8x16xf32>
    %c0_1 = arith.constant 0 : index
    %c0_2 = arith.constant 0 : index
    %1 = vector.load %arg1[%c0_1, %c0_2] : memref<16x32xf32, #tpu.memory_space<vmem>>, vector<16x32xf32>
    %cst = arith.constant dense<0.000000e+00> : vector<8x32xf32>
    %2 = tpu.matmul %0, %1, %cst {dimension_numbers = #tpu.dot_dimension_numbers<[1], [0], [0], [1], [0, 0, 1, 1], [], []>} : vector<8x16xf32>, vector<16x32xf32>, vector<8x32xf32> -> vector<8x32xf32>
    %c0_3 = arith.constant 0 : index
    %c0_4 = arith.constant 0 : index
    %3 = vector.load %arg2[%c0_3, %c0_4] : memref<1x32xf32, #tpu.memory_space<vmem>>, vector<1x32xf32>
    %4 = vector.broadcast %3 : vector<1x32xf32> to vector<8x32xf32>
    %5 = arith.addf %2, %4 : vector<8x32xf32>
    %cst_5 = arith.constant 0.000000e+00 : f32
    %6 = vector.broadcast %cst_5 : f32 to vector<8x32xf32>
    %7 = arith.maximumf %5, %6 : vector<8x32xf32>
    %c0_6 = arith.constant 0 : index
    %c0_7 = arith.constant 0 : index
    %8 = vector.load %arg3[%c0_6, %c0_7] : memref<32x32xf32, #tpu.memory_space<vmem>>, vector<32x32xf32>
    %cst_8 = arith.constant dense<0.000000e+00> : vector<8x32xf32>
    %9 = tpu.matmul %7, %8, %cst_8 {dimension_numbers = #tpu.dot_dimension_numbers<[1], [0], [0], [1], [0, 0, 1, 1], [], []>} : vector<8x32xf32>, vector<32x32xf32>, vector<8x32xf32> -> vector<8x32xf32>
    %c0_9 = arith.constant 0 : index
    %c0_10 = arith.constant 0 : index
    %10 = vector.load %arg4[%c0_9, %c0_10] : memref<1x32xf32, #tpu.memory_space<vmem>>, vector<1x32xf32>
    %11 = vector.broadcast %10 : vector<1x32xf32> to vector<8x32xf32>
    %12 = arith.addf %9, %11 : vector<8x32xf32>
    %c0_11 = arith.constant 0 : index
    %c0_12 = arith.constant 0 : index
    %13 = vector.load %arg5[%c0_11, %c0_12] : memref<8x32xf32, #tpu.memory_space<vmem>>, vector<8x32xf32>
    tpu.vector_store %arg5[%c0_11, %c0_12], %12 {strides = array<i32>} : memref<8x32xf32, #tpu.memory_space<vmem>>, vector<8x32xf32>,
    return
  }
}

module attributes {stable_mosaic.version = 11 : i64} {
  func.func @_mlp_kernel(%arg0: memref<98x16xf32, #tpu.memory_space<vmem>>, %arg1: memref<16x32xf32, #tpu.memory_space<vmem>>, %arg2: memref<1x32xf32, #tpu.memory_space<vmem>>, %arg3: memref<32x32xf32, #tpu.memory_space<vmem>>, %arg4: memref<1x32xf32, #tpu.memory_space<vmem>>, %arg5: memref<98x32xf32, #tpu.memory_space<vmem>>) attributes {dimension_semantics = [], scalar_prefetch = 0 : i64, scratch_operands = 0 : i64, tpu.core_type = #tpu.core_type<tc>} {
    %c0 = arith.constant 0 : index
    %c0_0 = arith.constant 0 : index
    %0 = vector.load %arg0[%c0, %c0_0] : memref<98x16xf32, #tpu.memory_space<vmem>>, vector<98x16xf32>
    %c0_1 = arith.constant 0 : index
    %c0_2 = arith.constant 0 : index
    %1 = vector.load %arg1[%c0_1, %c0_2] : memref<16x32xf32, #tpu.memory_space<vmem>>, vector<16x32xf32>
    %cst = arith.constant dense<0.000000e+00> : vector<98x32xf32>
    %2 = tpu.matmul %0, %1, %cst {dimension_numbers = #tpu.dot_dimension_numbers<[1], [0], [0], [1], [0, 0, 1, 1], [], []>} : vector<98x16xf32>, vector<16x32xf32>, vector<98x32xf32> -> vector<98x32xf32>
    %c0_3 = arith.constant 0 : index
    %c0_4 = arith.constant 0 : index
    %3 = vector.load %arg2[%c0_3, %c0_4] : memref<1x32xf32, #tpu.memory_space<vmem>>, vector<1x32xf32>
    %4 = vector.broadcast %3 : vector<1x32xf32> to vector<98x32xf32>
    %5 = arith.addf %2, %4 : vector<98x32xf32>
    %cst_5 = arith.constant 0.000000e+00 : f32
    %6 = vector.broadcast %cst_5 : f32 to vector<98x32xf32>
    %7 = arith.maximumf %5, %6 : vector<98x32xf32>
    %c0_6 = arith.constant 0 : index
    %c0_7 = arith.constant 0 : index
    %8 = vector.load %arg3[%c0_6, %c0_7] : memref<32x32xf32, #tpu.memory_space<vmem>>, vector<32x32xf32>
    %cst_8 = arith.constant dense<0.000000e+00> : vector<98x32xf32>
    %9 = tpu.matmul %7, %8, %cst_8 {dimension_numbers = #tpu.dot_dimension_numbers<[1], [0], [0], [1], [0, 0, 1, 1], [], []>} : vector<98x32xf32>, vector<32x32xf32>, vector<98x32xf32> -> vector<98x32xf32>
    %c0_9 = arith.constant 0 : index
    %c0_10 = arith.constant 0 : index
    %10 = vector.load %arg4[%c0_9, %c0_10] : memref<1x32xf32, #tpu.memory_space<vmem>>, vector<1x32xf32>
    %11 = vector.broadcast %10 : vector<1x32xf32> to vector<98x32xf32>
    %12 = arith.addf %9, %11 : vector<98x32xf32>
    %c0_11 = arith.constant 0 : index
    %c0_12 = arith.constant 0 : index
    %13 = vector.load %arg5[%c0_11, %c0_12] : memref<98x32xf32, #tpu.memory_space<vmem>>, vector<98x32xf32>
    tpu.vector_store %arg5[%c0_11, %c0_12], %12 {strides = array<i32>} : memref<98x32xf32, #tpu.memory_space<vmem>>, vector<98x32xf32>,
    return
  }
}

module attributes {stable_mosaic.version = 11 : i64} {
  func.func @_layernorm_kernel(%arg0: memref<128x32xf32, #tpu.memory_space<vmem>>, %arg1: memref<1x32xf32, #tpu.memory_space<vmem>>, %arg2: memref<1x32xf32, #tpu.memory_space<vmem>>, %arg3: memref<128x32xf32, #tpu.memory_space<vmem>>) attributes {dimension_semantics = [], scalar_prefetch = 0 : i64, scratch_operands = 0 : i64, tpu.core_type = #tpu.core_type<tc>} {
    %c0 = arith.constant 0 : index
    %c0_0 = arith.constant 0 : index
    %0 = vector.load %arg0[%c0, %c0_0] : memref<128x32xf32, #tpu.memory_space<vmem>>, vector<128x32xf32>
    %c0_1 = arith.constant 0 : index
    %c0_2 = arith.constant 0 : index
    %1 = vector.load %arg1[%c0_1, %c0_2] : memref<1x32xf32, #tpu.memory_space<vmem>>, vector<1x32xf32>
    %c0_3 = arith.constant 0 : index
    %c0_4 = arith.constant 0 : index
    %2 = vector.load %arg2[%c0_3, %c0_4] : memref<1x32xf32, #tpu.memory_space<vmem>>, vector<1x32xf32>
    %cst = arith.constant dense<0.000000e+00> : vector<128xf32>
    %3 = vector.multi_reduction <add>, %0, %cst [1] : vector<128x32xf32> to vector<128xf32>
    %4 = vector.shape_cast %3 : vector<128xf32> to vector<128x1xf32>
    %cst_5 = arith.constant 3.200000e+01 : f32
    %5 = vector.broadcast %cst_5 : f32 to vector<128x1xf32>
    %6 = arith.divf %4, %5 : vector<128x1xf32>
    %7 = vector.broadcast %6 : vector<128x1xf32> to vector<128x32xf32>
    %8 = arith.subf %0, %7 : vector<128x32xf32>
    %9 = arith.mulf %8, %8 : vector<128x32xf32>
    %cst_6 = arith.constant dense<0.000000e+00> : vector<128xf32>
    %10 = vector.multi_reduction <add>, %9, %cst_6 [1] : vector<128x32xf32> to vector<128xf32>
    %11 = vector.shape_cast %10 : vector<128xf32> to vector<128x1xf32>
    %cst_7 = arith.constant 3.200000e+01 : f32
    %12 = vector.broadcast %cst_7 : f32 to vector<128x1xf32>
    %13 = arith.divf %11, %12 : vector<128x1xf32>
    %cst_8 = arith.constant 9.99999996E-13 : f32
    %14 = vector.broadcast %cst_8 : f32 to vector<128x1xf32>
    %15 = arith.addf %13, %14 : vector<128x1xf32>
    %16 = math.rsqrt %15 : vector<128x1xf32>
    %17 = vector.broadcast %16 : vector<128x1xf32> to vector<128x32xf32>
    %18 = arith.mulf %8, %17 : vector<128x32xf32>
    %19 = vector.broadcast %1 : vector<1x32xf32> to vector<128x32xf32>
    %20 = arith.mulf %18, %19 : vector<128x32xf32>
    %21 = vector.broadcast %2 : vector<1x32xf32> to vector<128x32xf32>
    %22 = arith.addf %20, %21 : vector<128x32xf32>
    %c0_9 = arith.constant 0 : index
    %c0_10 = arith.constant 0 : index
    %23 = vector.load %arg3[%c0_9, %c0_10] : memref<128x32xf32, #tpu.memory_space<vmem>>, vector<128x32xf32>
    tpu.vector_store %arg3[%c0_9, %c0_10], %22 {strides = array<i32>} : memref<128x32xf32, #tpu.memory_space<vmem>>, vector<128x32xf32>,
    return
  }
}

module attributes {stable_mosaic.version = 11 : i64} {
  func.func @_bert_layer_kernel(%arg0: i32, %arg1: memref<1x64x32xf32, #tpu.memory_space<vmem>>, %arg2: memref<1x64x64xf32, #tpu.memory_space<vmem>>, %arg3: memref<32x96xf32, #tpu.memory_space<vmem>>, %arg4: memref<1x96xf32, #tpu.memory_space<vmem>>, %arg5: memref<32x32xf32, #tpu.memory_space<vmem>>, %arg6: memref<1x32xf32, #tpu.memory_space<vmem>>, %arg7: memref<1x32xf32, #tpu.memory_space<vmem>>, %arg8: memref<1x32xf32, #tpu.memory_space<vmem>>, %arg9: memref<32x64xf32, #tpu.memory_space<vmem>>, %arg10: memref<1x64xf32, #tpu.memory_space<vmem>>, %arg11: memref<64x32xf32, #tpu.memory_space<vmem>>, %arg12: memref<1x32xf32, #tpu.memory_space<vmem>>, %arg13: memref<1x32xf32, #tpu.memory_space<vmem>>, %arg14: memref<1x32xf32, #tpu.memory_space<vmem>>, %arg15: memref<1x4x64x64xf32, #tpu.memory_space<vmem>>, %arg16: memref<1x64x32xf32, #tpu.memory_space<vmem>>) attributes {dimension_semantics = [#tpu.dimension_semantics<parallel>], iteration_bounds = array<i64: 2>, scalar_prefetch = 0 : i64, scratch_operands = 0 : i64, tpu.core_type = #tpu.core_type<tc>, window_params = [{transform_indices = @transform_0, window_bounds = array<i64: 1, 64, 32>}, {transform_indices = @transform_1, window_bounds = array<i64: 1, 64, 64>}, {pipeline_mode = #tpu.pipeline_mode<synchronous>, transform_indices = @transform_2, window_bounds = array<i64: 32, 96>}, {pipeline_mode = #tpu.pipeline_mode<synchronous>, transform_indices = @transform_3, window_bounds = array<i64: 1, 96>}, {pipeline_mode = #tpu.pipeline_mode<synchronous>, transform_indices = @transform_4, window_bounds = array<i64: 32, 32>}, {pipeline_mode = #tpu.pipeline_mode<synchronous>, transform_indices = @transform_5, window_bounds = array<i64: 1, 32>}, {pipeline_mode = #tpu.pipeline_mode<synchronous>, transform_indices = @transform_6, window_bounds = array<i64: 1, 32>}, {pipeline_mode = #tpu.pipeline_mode<synchronous>, transform_indices = @transform_7, window_bounds = array<i64: 1, 32>}, {pipeline_mode = #tpu.pipeline_mode<synchronous>, transform_indices = @transform_8, window_bounds = array<i64: 32, 64>}, {pipeline_mode = #tpu.pipeline_mode<synchronous>, transform_indices = @transform_9, window_bounds = array<i64: 1, 64>}, {pipeline_mode = #tpu.pipeline_mode<synchronous>, transform_indices = @transform_10, window_bounds = array<i64: 64, 32>}, {pipeline_mode = #tpu.pipeline_mode<synchronous>, transform_indices = @transform_11, window_bounds = array<i64: 1, 32>}, {pipeline_mode = #tpu.pipeline_mode<synchronous>, transform_indices = @transform_12, window_bounds = array<i64: 1, 32>}, {pipeline_mode = #tpu.pipeline_mode<synchronous>, transform_indices = @transform_13, window_bounds = array<i64: 1, 32>}, {transform_indices = @transform_14, window_bounds = array<i64: 1, 4, 64, 64>}, {transform_indices = @transform_15, window_bounds = array<i64: 1, 64, 32>}]} {
    %c0 = arith.constant 0 : index
    %c0_0 = arith.constant 0 : index
    %c0_1 = arith.constant 0 : index
    %0 = vector.load %arg1[%c0, %c0_0, %c0_1] : memref<1x64x32xf32, #tpu.memory_space<vmem>>, vector<1x64x32xf32>
    %1 = vector.shape_cast %0 : vector<1x64x32xf32> to vector<64x32xf32>
    %c0_2 = arith.constant 0 : index
    %c0_3 = arith.constant 0 : index
    %c0_4 = arith.constant 0 : index
    %2 = vector.load %arg2[%c0_2, %c0_3, %c0_4] : memref<1x64x64xf32, #tpu.memory_space<vmem>>, vector<1x64x64xf32>
    %3 = vector.shape_cast %2 : vector<1x64x64xf32> to vector<64x64xf32>
    %c0_5 = arith.constant 0 : index
    %c0_6 = arith.constant 0 : index
    %4 = vector.load %arg3[%c0_5, %c0_6] : memref<32x96xf32, #tpu.memory_space<vmem>>, vector<32x96xf32>
    %cst = arith.constant dense<0.000000e+00> : vector<64x96xf32>
    %5 = tpu.matmul %1, %4, %cst {dimension_numbers = #tpu.dot_dimension_numbers<[1], [0], [0], [1], [0, 0, 1, 1], [], []>} : vector<64x32xf32>, vector<32x96xf32>, vector<64x96xf32> -> vector<64x96xf32>
    %c0_7 = arith.constant 0 : index
    %c0_8 = arith.constant 0 : index
    %6 = vector.load %arg4[%c0_7, %c0_8] : memref<1x96xf32, #tpu.memory_space<vmem>>, vector<1x96xf32>
    %7 = vector.broadcast %6 : vector<1x96xf32> to vector<64x96xf32>
    %8 = arith.addf %5, %7 : vector<64x96xf32>
    %9 = vector.extract_strided_slice %8 {offsets = [0, 0], sizes = [64, 8], strides = [1, 1]} : vector<64x96xf32> to vector<64x8xf32>
    %cst_9 = arith.constant 0.353553385 : f32
    %10 = vector.broadcast %cst_9 : f32 to vector<64x8xf32>
    %11 = arith.mulf %9, %10 : vector<64x8xf32>
    %12 = vector.extract_strided_slice %8 {offsets = [0, 32], sizes = [64, 8], strides = [1, 1]} : vector<64x96xf32> to vector<64x8xf32>
    %13 = vector.extract_strided_slice %8 {offsets = [0, 64], sizes = [64, 8], strides = [1, 1]} : vector<64x96xf32> to vector<64x8xf32>
    %cst_10 = arith.constant dense<0.000000e+00> : vector<64x64xf32>
    %14 = tpu.matmul %11, %12, %cst_10 {dimension_numbers = #tpu.dot_dimension_numbers<[1], [1], [0], [0], [0, 0, 1, 0], [], []>} : vector<64x8xf32>, vector<64x8xf32>, vector<64x64xf32> -> vector<64x64xf32>
    %15 = arith.addf %14, %3 : vector<64x64xf32>
    %cst_11 = arith.constant dense<0xFF800000> : vector<64xf32>
    %16 = vector.multi_reduction <maximumf>, %15, %cst_11 [1] : vector<64x64xf32> to vector<64xf32>
    %17 = vector.shape_cast %16 : vector<64xf32> to vector<64x1xf32>
    %18 = vector.broadcast %17 : vector<64x1xf32> to vector<64x64xf32>
    %19 = arith.subf %15, %18 : vector<64x64xf32>
    %20 = math.exp %19 : vector<64x64xf32>
    %cst_12 = arith.constant dense<0.000000e+00> : vector<64xf32>
    %21 = vector.multi_reduction <add>, %20, %cst_12 [1] : vector<64x64xf32> to vector<64xf32>
    %22 = vector.shape_cast %21 : vector<64xf32> to vector<64x1xf32>
    %23 = tpu.reciprocal %22 {approx = true} : vector<64x1xf32> -> vector<64x1xf32>
    %24 = vector.broadcast %23 : vector<64x1xf32> to vector<64x64xf32>
    %25 = arith.mulf %20, %24 : vector<64x64xf32>
    %c0_13 = arith.constant 0 : index
    %c0_14 = arith.constant 0 : index
    %c0_15 = arith.constant 0 : index
    %c0_16 = arith.constant 0 : index
    %26 = vector.load %arg15[%c0_13, %c0_14, %c0_15, %c0_16] : memref<1x4x64x64xf32, #tpu.memory_space<vmem>>, vector<1x1x64x64xf32>
    %27 = vector.shape_cast %26 : vector<1x1x64x64xf32> to vector<64x64xf32>
    %28 = vector.shape_cast %25 : vector<64x64xf32> to vector<1x1x64x64xf32>
    tpu.vector_store %arg15[%c0_13, %c0_14, %c0_15, %c0_16], %28 {strides = array<i32>} : memref<1x4x64x64xf32, #tpu.memory_space<vmem>>, vector<1x1x64x64xf32>,
    %cst_17 = arith.constant dense<0.000000e+00> : vector<64x8xf32>
    %29 = tpu.matmul %25, %13, %cst_17 {dimension_numbers = #tpu.dot_dimension_numbers<[1], [0], [0], [1], [0, 0, 1, 1], [], []>} : vector<64x64xf32>, vector<64x8xf32>, vector<64x8xf32> -> vector<64x8xf32>
    %30 = vector.extract_strided_slice %8 {offsets = [0, 8], sizes = [64, 8], strides = [1, 1]} : vector<64x96xf32> to vector<64x8xf32>
    %cst_18 = arith.constant 0.353553385 : f32
    %31 = vector.broadcast %cst_18 : f32 to vector<64x8xf32>
    %32 = arith.mulf %30, %31 : vector<64x8xf32>
    %33 = vector.extract_strided_slice %8 {offsets = [0, 40], sizes = [64, 8], strides = [1, 1]} : vector<64x96xf32> to vector<64x8xf32>
    %34 = vector.extract_strided_slice %8 {offsets = [0, 72], sizes = [64, 8], strides = [1, 1]} : vector<64x96xf32> to vector<64x8xf32>
    %cst_19 = arith.constant dense<0.000000e+00> : vector<64x64xf32>
    %35 = tpu.matmul %32, %33, %cst_19 {dimension_numbers = #tpu.dot_dimension_numbers<[1], [1], [0], [0], [0, 0, 1, 0], [], []>} : vector<64x8xf32>, vector<64x8xf32>, vector<64x64xf32> -> vector<64x64xf32>
    %36 = arith.addf %35, %3 : vector<64x64xf32>
    %cst_20 = arith.constant dense<0xFF800000> : vector<64xf32>
    %37 = vector.multi_reduction <maximumf>, %36, %cst_20 [1] : vector<64x64xf32> to vector<64xf32>
    %38 = vector.shape_cast %37 : vector<64xf32> to vector<64x1xf32>
    %39 = vector.broadcast %38 : vector<64x1xf32> to vector<64x64xf32>
    %40 = arith.subf %36, %39 : vector<64x64xf32>
    %41 = math.exp %40 : vector<64x64xf32>
    %cst_21 = arith.constant dense<0.000000e+00> : vector<64xf32>
    %42 = vector.multi_reduction <add>, %41, %cst_21 [1] : vector<64x64xf32> to vector<64xf32>
    %43 = vector.shape_cast %42 : vector<64xf32> to vector<64x1xf32>
    %44 = tpu.reciprocal %43 {approx = true} : vector<64x1xf32> -> vector<64x1xf32>
    %45 = vector.broadcast %44 : vector<64x1xf32> to vector<64x64xf32>
    %46 = arith.mulf %41, %45 : vector<64x64xf32>
    %c0_22 = arith.constant 0 : index
    %c1 = arith.constant 1 : index
    %c0_23 = arith.constant 0 : index
    %c0_24 = arith.constant 0 : index
    %47 = vector.load %arg15[%c0_22, %c1, %c0_23, %c0_24] : memref<1x4x64x64xf32, #tpu.memory_space<vmem>>, vector<1x1x64x64xf32>
    %48 = vector.shape_cast %47 : vector<1x1x64x64xf32> to vector<64x64xf32>
    %49 = vector.shape_cast %46 : vector<64x64xf32> to vector<1x1x64x64xf32>
    tpu.vector_store %arg15[%c0_22, %c1, %c0_23, %c0_24], %49 {strides = array<i32>} : memref<1x4x64x64xf32, #tpu.memory_space<vmem>>, vector<1x1x64x64xf32>,
    %cst_25 = arith.constant dense<0.000000e+00> : vector<64x8xf32>
    %50 = tpu.matmul %46, %34, %cst_25 {dimension_numbers = #tpu.dot_dimension_numbers<[1], [0], [0], [1], [0, 0, 1, 1], [], []>} : vector<64x64xf32>, vector<64x8xf32>, vector<64x8xf32> -> vector<64x8xf32>
    %51 = vector.extract_strided_slice %8 {offsets = [0, 16], sizes = [64, 8], strides = [1, 1]} : vector<64x96xf32> to vector<64x8xf32>
    %cst_26 = arith.constant 0.353553385 : f32
    %52 = vector.broadcast %cst_26 : f32 to vector<64x8xf32>
    %53 = arith.mulf %51, %52 : vector<64x8xf32>
    %54 = vector.extract_strided_slice %8 {offsets = [0, 48], sizes = [64, 8], strides = [1, 1]} : vector<64x96xf32> to vector<64x8xf32>
    %55 = vector.extract_strided_slice %8 {offsets = [0, 80], sizes = [64, 8], strides = [1, 1]} : vector<64x96xf32> to vector<64x8xf32>
    %cst_27 = arith.constant dense<0.000000e+00> : vector<64x64xf32>
    %56 = tpu.matmul %53, %54, %cst_27 {dimension_numbers = #tpu.dot_dimension_numbers<[1], [1], [0], [0], [0, 0, 1, 0], [], []>} : vector<64x8xf32>, vector<64x8xf32>, vector<64x64xf32> -> vector<64x64xf32>
    %57 = arith.addf %56, %3 : vector<64x64xf32>
    %cst_28 = arith.constant dense<0xFF800000> : vector<64xf32>
    %58 = vector.multi_reduction <maximumf>, %57, %cst_28 [1] : vector<64x64xf32> to vector<64xf32>
    %59 = vector.shape_cast %58 : vector<64xf32> to vector<64x1xf32>
    %60 = vector.broadcast %59 : vector<64x1xf32> to vector<64x64xf32>
    %61 = arith.subf %57, %60 : vector<64x64xf32>
    %62 = math.exp %61 : vector<64x64xf32>
    %cst_29 = arith.constant dense<0.000000e+00> : vector<64xf32>
    %63 = vector.multi_reduction <add>, %62, %cst_29 [1] : vector<64x64xf32> to vector<64xf32>
    %64 = vector.shape_cast %63 : vector<64xf32> to vector<64x1xf32>
    %65 = tpu.reciprocal %64 {approx = true} : vector<64x1xf32> -> vector<64x1xf32>
    %66 = vector.broadcast %65 : vector<64x1xf32> to vector<64x64xf32>
    %67 = arith.mulf %62, %66 : vector<64x64xf32>
    %c0_30 = arith.constant 0 : index
    %c2 = arith.constant 2 : index
    %c0_31 = arith.constant 0 : index
    %c0_32 = arith.constant 0 : index
    %68 = vector.load %arg15[%c0_30, %c2, %c0_31, %c0_32] : memref<1x4x64x64xf32, #tpu.memory_space<vmem>>, vector<1x1x64x64xf32>
    %69 = vector.shape_cast %68 : vector<1x1x64x64xf32> to vector<64x64xf32>
    %70 = vector.shape_cast %67 : vector<64x64xf32> to vector<1x1x64x64xf32>
    tpu.vector_store %arg15[%c0_30, %c2, %c0_31, %c0_32], %70 {strides = array<i32>} : memref<1x4x64x64xf32, #tpu.memory_space<vmem>>, vector<1x1x64x64xf32>,
    %cst_33 = arith.constant dense<0.000000e+00> : vector<64x8xf32>
    %71 = tpu.matmul %67, %55, %cst_33 {dimension_numbers = #tpu.dot_dimension_numbers<[1], [0], [0], [1], [0, 0, 1, 1], [], []>} : vector<64x64xf32>, vector<64x8xf32>, vector<64x8xf32> -> vector<64x8xf32>
    %72 = vector.extract_strided_slice %8 {offsets = [0, 24], sizes = [64, 8], strides = [1, 1]} : vector<64x96xf32> to vector<64x8xf32>
    %cst_34 = arith.constant 0.353553385 : f32
    %73 = vector.broadcast %cst_34 : f32 to vector<64x8xf32>
    %74 = arith.mulf %72, %73 : vector<64x8xf32>
    %75 = vector.extract_strided_slice %8 {offsets = [0, 56], sizes = [64, 8], strides = [1, 1]} : vector<64x96xf32> to vector<64x8xf32>
    %76 = vector.extract_strided_slice %8 {offsets = [0, 88], sizes = [64, 8], strides = [1, 1]} : vector<64x96xf32> to vector<64x8xf32>
    %cst_35 = arith.constant dense<0.000000e+00> : vector<64x64xf32>
    %77 = tpu.matmul %74, %75, %cst_35 {dimension_numbers = #tpu.dot_dimension_numbers<[1], [1], [0], [0], [0, 0, 1, 0], [], []>} : vector<64x8xf32>, vector<64x8xf32>, vector<64x64xf32> -> vector<64x64xf32>
    %78 = arith.addf %77, %3 : vector<64x64xf32>
    %cst_36 = arith.constant dense<0xFF800000> : vector<64xf32>
    %79 = vector.multi_reduction <maximumf>, %78, %cst_36 [1] : vector<64x64xf32> to vector<64xf32>
    %80 = vector.shape_cast %79 : vector<64xf32> to vector<64x1xf32>
    %81 = vector.broadcast %80 : vector<64x1xf32> to vector<64x64xf32>
    %82 = arith.subf %78, %81 : vector<64x64xf32>
    %83 = math.exp %82 : vector<64x64xf32>
    %cst_37 = arith.constant dense<0.000000e+00> : vector<64xf32>
    %84 = vector.multi_reduction <add>, %83, %cst_37 [1] : vector<64x64xf32> to vector<64xf32>
    %85 = vector.shape_cast %84 : vector<64xf32> to vector<64x1xf32>
    %86 = tpu.reciprocal %85 {approx = true} : vector<64x1xf32> -> vector<64x1xf32>
    %87 = vector.broadcast %86 : vector<64x1xf32> to vector<64x64xf32>
    %88 = arith.mulf %83, %87 : vector<64x64xf32>
    %c0_38 = arith.constant 0 : index
    %c3 = arith.constant 3 : index
    %c0_39 = arith.constant 0 : index
    %c0_40 = arith.constant 0 : index
    %89 = vector.load %arg15[%c0_38, %c3, %c0_39, %c0_40] : memref<1x4x64x64xf32, #tpu.memory_space<vmem>>, vector<1x1x64x64xf32>
    %90 = vector.shape_cast %89 : vector<1x1x64x64xf32> to vector<64x64xf32>
    %91 = vector.shape_cast %88 : vector<64x64xf32> to vector<1x1x64x64xf32>
    tpu.vector_store %arg15[%c0_38, %c3, %c0_39, %c0_40], %91 {strides = array<i32>} : memref<1x4x64x64xf32, #tpu.memory_space<vmem>>, vector<1x1x64x64xf32>,
    %cst_41 = arith.constant dense<0.000000e+00> : vector<64x8xf32>
    %92 = tpu.matmul %88, %76, %cst_41 {dimension_numbers = #tpu.dot_dimension_numbers<[1], [0], [0], [1], [0, 0, 1, 1], [], []>} : vector<64x64xf32>, vector<64x8xf32>, vector<64x8xf32> -> vector<64x8xf32>
    %93 = tpu.concatenate %29, %50, %71, %92 in 1 : vector<64x8xf32>, vector<64x8xf32>, vector<64x8xf32>, vector<64x8xf32> -> vector<64x32xf32>
    %c0_42 = arith.constant 0 : index
    %c0_43 = arith.constant 0 : index
    %94 = vector.load %arg5[%c0_42, %c0_43] : memref<32x32xf32, #tpu.memory_space<vmem>>, vector<32x32xf32>
    %cst_44 = arith.constant dense<0.000000e+00> : vector<64x32xf32>
    %95 = tpu.matmul %93, %94, %cst_44 {dimension_numbers = #tpu.dot_dimension_numbers<[1], [0], [0], [1], [0, 0, 1, 1], [], []>} : vector<64x32xf32>, vector<32x32xf32>, vector<64x32xf32> -> vector<64x32xf32>
    %c0_45 = arith.constant 0 : index
    %c0_46 = arith.constant 0 : index
    %96 = vector.load %arg6[%c0_45, %c0_46] : memref<1x32xf32, #tpu.memory_space<vmem>>, vector<1x32xf32>
    %97 = vector.broadcast %96 : vector<1x32xf32> to vector<64x32xf32>
    %98 = arith.addf %95, %97 : vector<64x32xf32>
    %99 = arith.addf %98, %1 : vector<64x32xf32>
    %c0_47 = arith.constant 0 : index
    %c0_48 = arith.constant 0 : index
    %100 = vector.load %arg7[%c0_47, %c0_48] : memref<1x32xf32, #tpu.memory_space<vmem>>, vector<1x32xf32>
    %c0_49 = arith.constant 0 : index
    %c0_50 = arith.constant 0 : index
    %101 = vector.load %arg8[%c0_49, %c0_50] : memref<1x32xf32, #tpu.memory_space<vmem>>, vector<1x32xf32>
    %cst_51 = arith.constant dense<0.000000e+00> : vector<64xf32>
    %102 = vector.multi_reduction <add>, %99, %cst_51 [1] : vector<64x32xf32> to vector<64xf32>
    %103 = vector.shape_cast %102 : vector<64xf32> to vector<64x1xf32>
    %cst_52 = arith.constant 3.200000e+01 : f32
    %104 = vector.broadcast %cst_52 : f32 to vector<64x1xf32>
    %105 = arith.divf %103, %104 : vector<64x1xf32>
    %106 = vector.broadcast %105 : vector<64x1xf32> to vector<64x32xf32>
    %107 = arith.subf %99, %106 : vector<64x32xf32>
    %108 = arith.mulf %107, %107 : vector<64x32xf32>
    %cst_53 = arith.constant dense<0.000000e+00> : vector<64xf32>
    %109 = vector.multi_reduction <add>, %108, %cst_53 [1] : vector<64x32xf32> to vector<64xf32>
    %110 = vector.shape_cast %109 : vector<64xf32> to vector<64x1xf32>
    %cst_54 = arith.constant 3.200000e+01 : f32
    %111 = vector.broadcast %cst_54 : f32 to vector<64x1xf32>
    %112 = arith.divf %110, %111 : vector<64x1xf32>
    %cst_55 = arith.constant 9.99999996E-13 : f32
    %113 = vector.broadcast %cst_55 : f32 to vector<64x1xf32>
    %114 = arith.addf %112, %113 : vector<64x1xf32>
    %115 = math.rsqrt %114 : vector<64x1xf32>
    %116 = vector.broadcast %115 : vector<64x1xf32> to vector<64x32xf32>
    %117 = arith.mulf %107, %116 : vector<64x32xf32>
    %118 = vector.broadcast %100 : vector<1x32xf32> to vector<64x32xf32>
    %119 = arith.mulf %117, %118 : vector<64x32xf32>
    %120 = vector.broadcast %101 : vector<1x32xf32> to vector<64x32xf32>
    %121 = arith.addf %119, %120 : vector<64x32xf32>
    %c0_56 = arith.constant 0 : index
    %c0_57 = arith.constant 0 : index
    %122 = vector.load %arg9[%c0_56, %c0_57] : memref<32x64xf32, #tpu.memory_space<vmem>>, vector<32x64xf32>
    %cst_58 = arith.constant dense<0.000000e+00> : vector<64x64xf32>
    %123 = tpu.matmul %121, %122, %cst_58 {dimension_numbers = #tpu.dot_dimension_numbers<[1], [0], [0], [1], [0, 0, 1, 1], [], []>} : vector<64x32xf32>, vector<32x64xf32>, vector<64x64xf32> -> vector<64x64xf32>
    %c0_59 = arith.constant 0 : index
    %c0_60 = arith.constant 0 : index
    %124 = vector.load %arg10[%c0_59, %c0_60] : memref<1x64xf32, #tpu.memory_space<vmem>>, vector<1x64xf32>
    %125 = vector.broadcast %124 : vector<1x64xf32> to vector<64x64xf32>
    %126 = arith.addf %123, %125 : vector<64x64xf32>
    %cst_61 = arith.constant 0.707106769 : f32
    %127 = vector.broadcast %cst_61 : f32 to vector<64x64xf32>
    %128 = arith.mulf %126, %127 : vector<64x64xf32>
    %129 = math.absf %128 : vector<64x64xf32>
    %cst_62 = arith.constant 0.327591091 : f32
    %130 = vector.broadcast %cst_62 : f32 to vector<64x64xf32>
    %131 = arith.mulf %130, %129 : vector<64x64xf32>
    %cst_63 = arith.constant 1.000000e+00 : f32
    %132 = vector.broadcast %cst_63 : f32 to vector<64x64xf32>
    %133 = arith.addf %132, %131 : vector<64x64xf32>
    %cst_64 = arith.constant 1.000000e+00 : f32
    %134 = vector.broadcast %cst_64 : f32 to vector<64x64xf32>
    %135 = arith.divf %134, %133 : vector<64x64xf32>
    %cst_65 = arith.constant 1.06140542 : f32
    %136 = vector.broadcast %cst_65 : f32 to vector<64x64xf32>
    %137 = arith.mulf %135, %136 : vector<64x64xf32>
    %cst_66 = arith.constant -1.45315206 : f32
    %138 = vector.broadcast %cst_66 : f32 to vector<64x64xf32>
    %139 = arith.addf %138, %137 : vector<64x64xf32>
    %140 = arith.mulf %135, %139 : vector<64x64xf32>
    %cst_67 = arith.constant 1.42141378 : f32
    %141 = vector.broadcast %cst_67 : f32 to vector<64x64xf32>
    %142 = arith.addf %141, %140 : vector<64x64xf32>
    %143 = arith.mulf %135, %142 : vector<64x64xf32>
    %cst_68 = arith.constant -0.284496725 : f32
    %144 = vector.broadcast %cst_68 : f32 to vector<64x64xf32>
    %145 = arith.addf %144, %143 : vector<64x64xf32>
    %146 = arith.mulf %135, %145 : vector<64x64xf32>
    %cst_69 = arith.constant 0.254829586 : f32
    %147 = vector.broadcast %cst_69 : f32 to vector<64x64xf32>
    %148 = arith.addf %147, %146 : vector<64x64xf32>
    %149 = arith.mulf %135, %148 : vector<64x64xf32>
    %cst_70 = arith.constant 0.000000e+00 : f32
    %150 = vector.broadcast %cst_70 : f32 to vector<64x64xf32>
    %151 = arith.subf %150, %129 : vector<64x64xf32>
    %152 = arith.mulf %151, %129 : vector<64x64xf32>
    %153 = math.exp %152 : vector<64x64xf32>
    %154 = arith.mulf %149, %153 : vector<64x64xf32>
    %cst_71 = arith.constant 1.000000e+00 : f32
    %155 = vector.broadcast %cst_71 : f32 to vector<64x64xf32>
    %156 = arith.subf %155, %154 : vector<64x64xf32>
    %cst_72 = arith.constant 0.000000e+00 : f32
    %157 = vector.broadcast %cst_72 : f32 to vector<64x64xf32>
    %158 = arith.cmpf oge, %128, %157 : vector<64x64xf32>
    %cst_73 = arith.constant 0.000000e+00 : f32
    %159 = vector.broadcast %cst_73 : f32 to vector<64x64xf32>
    %160 = arith.subf %159, %156 : vector<64x64xf32>
    %161 = arith.select %158, %156, %160 : vector<64x64xi1>, vector<64x64xf32>
    %cst_74 = arith.constant 5.000000e-01 : f32
    %162 = vector.broadcast %cst_74 : f32 to vector<64x64xf32>
    %163 = arith.mulf %162, %126 : vector<64x64xf32>
    %cst_75 = arith.constant 1.000000e+00 : f32
    %164 = vector.broadcast %cst_75 : f32 to vector<64x64xf32>
    %165 = arith.addf %164, %161 : vector<64x64xf32>
    %166 = arith.mulf %163, %165 : vector<64x64xf32>
    %c0_76 = arith.constant 0 : index
    %c0_77 = arith.constant 0 : index
    %167 = vector.load %arg11[%c0_76, %c0_77] : memref<64x32xf32, #tpu.memory_space<vmem>>, vector<64x32xf32>
    %cst_78 = arith.constant dense<0.000000e+00> : vector<64x32xf32>
    %168 = tpu.matmul %166, %167, %cst_78 {dimension_numbers = #tpu.dot_dimension_numbers<[1], [0], [0], [1], [0, 0, 1, 1], [], []>} : vector<64x64xf32>, vector<64x32xf32>, vector<64x32xf32> -> vector<64x32xf32>
    %c0_79 = arith.constant 0 : index
    %c0_80 = arith.constant 0 : index
    %169 = vector.load %arg12[%c0_79, %c0_80] : memref<1x32xf32, #tpu.memory_space<vmem>>, vector<1x32xf32>
    %170 = vector.broadcast %169 : vector<1x32xf32> to vector<64x32xf32>
    %171 = arith.addf %168, %170 : vector<64x32xf32>
    %172 = arith.addf %171, %121 : vector<64x32xf32>
    %c0_81 = arith.constant 0 : index
    %c0_82 = arith.constant 0 : index
    %173 = vector.load %arg13[%c0_81, %c0_82] : memref<1x32xf32, #tpu.memory_space<vmem>>, vector<1x32xf32>
    %c0_83 = arith.constant 0 : index
    %c0_84 = arith.constant 0 : index
    %174 = vector.load %arg14[%c0_83, %c0_84] : memref<1x32xf32, #tpu.memory_space<vmem>>, vector<1x32xf32>
    %cst_85 = arith.constant dense<0.000000e+00> : vector<64xf32>
    %175 = vector.multi_reduction <add>, %172, %cst_85 [1] : vector<64x32xf32> to vector<64xf32>
    %176 = vector.shape_cast %175 : vector<64xf32> to vector<64x1xf32>
    %cst_86 = arith.constant 3.200000e+01 : f32
    %177 = vector.broadcast %cst_86 : f32 to vector<64x1xf32>
    %178 = arith.divf %176, %177 : vector<64x1xf32>
    %179 = vector.broadcast %178 : vector<64x1xf32> to vector<64x32xf32>
    %180 = arith.subf %172, %179 : vector<64x32xf32>
    %181 = arith.mulf %180, %180 : vector<64x32xf32>
    %cst_87 = arith.constant dense<0.000000e+00> : vector<64xf32>
    %182 = vector.multi_reduction <add>, %181, %cst_87 [1] : vector<64x32xf32> to vector<64xf32>
    %183 = vector.shape_cast %182 : vector<64xf32> to vector<64x1xf32>
    %cst_88 = arith.constant 3.200000e+01 : f32
    %184 = vector.broadcast %cst_88 : f32 to vector<64x1xf32>
    %185 = arith.divf %183, %184 : vector<64x1xf32>
    %cst_89 = arith.constant 9.99999996E-13 : f32
    %186 = vector.broadcast %cst_89 : f32 to vector<64x1xf32>
    %187 = arith.addf %185, %186 : vector<64x1xf32>
    %188 = math.rsqrt %187 : vector<64x1xf32>
    %189 = vector.broadcast %188 : vector<64x1xf32> to vector<64x32xf32>
    %190 = arith.mulf %180, %189 : vector<64x32xf32>
    %191 = vector.broadcast %173 : vector<1x32xf32> to vector<64x32xf32>
    %192 = arith.mulf %190, %191 : vector<64x32xf32>
    %193 = vector.broadcast %174 : vector<1x32xf32> to vector<64x32xf32>
    %194 = arith.addf %192, %193 : vector<64x32xf32>
    %c0_90 = arith.constant 0 : index
    %c0_91 = arith.constant 0 : index
    %c0_92 = arith.constant 0 : index
    %195 = vector.load %arg16[%c0_90, %c0_91, %c0_92] : memref<1x64x32xf32, #tpu.memory_space<vmem>>, vector<1x64x32xf32>
    %196 = vector.shape_cast %195 : vector<1x64x32xf32> to vector<64x32xf32>
    %197 = vector.shape_cast %194 : vector<64x32xf32> to vector<1x64x32xf32>
    tpu.vector_store %arg16[%c0_90, %c0_91, %c0_92], %197 {strides = array<i32>} : memref<1x64x32xf32, #tpu.memory_space<vmem>>, vector<1x64x32xf32>,
    return
  }
  func.func @transform_0(%arg0: i32) -> (i32, i32, i32) {
    %c0_i32 = arith.constant 0 : i32
    %c0_i32_0 = arith.constant 0 : i32
    %c0_i32_1 = arith.constant 0 : i32
    return %arg0, %c0_i32, %c0_i32_0 : i32, i32, i32
  }
  func.func @transform_1(%arg0: i32) -> (i32, i32, i32) {
    %c0_i32 = arith.constant 0 : i32
    %c0_i32_0 = arith.constant 0 : i32
    %c0_i32_1 = arith.constant 0 : i32
    return %arg0, %c0_i32, %c0_i32_0 : i32, i32, i32
  }
  func.func @transform_2(%arg0: i32) -> (i32, i32) {
    %c0_i32 = arith.constant 0 : i32
    %c0_i32_0 = arith.constant 0 : i32
    %c0_i32_1 = arith.constant 0 : i32
    return %c0_i32, %c0_i32_0 : i32, i32
  }
  func.func @transform_3(%arg0: i32) -> (i32, i32) {
    %c0_i32 = arith.constant 0 : i32
    %c0_i32_0 = arith.constant 0 : i32
    %c0_i32_1 = arith.constant 0 : i32
    return %c0_i32, %c0_i32_0 : i32, i32
  }
  func.func @transform_4(%arg0: i32) -> (i32, i32) {
    %c0_i32 = arith.constant 0 : i32
    %c0_i32_0 = arith.constant 0 : i32
    %c0_i32_1 = arith.constant 0 : i32
    return %c0_i32, %c0_i32_0 : i32, i32
  }
  func.func @transform_5(%arg0: i32) -> (i32, i32) {
    %c0_i32 = arith.constant 0 : i32
    %c0_i32_0 = arith.constant 0 : i32
    %c0_i32_1 = arith.constant 0 : i32
    return %c0_i32, %c0_i32_0 : i32, i32
  }
  func.func @transform_6(%arg0: i32) -> (i32, i32) {
    %c0_i32 = arith.constant 0 : i32
    %c0_i32_0 = arith.constant 0 : i32
    %c0_i32_1 = arith.constant 0 : i32
    return %c0_i32, %c0_i32_0 : i32, i32
  }
  func.func @transform_7(%arg0: i32) -> (i32, i32) {
    %c0_i32 = arith.constant 0 : i32
    %c0_i32_0 = arith.constant 0 : i32
    %c0_i32_1 = arith.constant 0 : i32
    return %c0_i32, %c0_i32_0 : i32, i32
  }
  func.func @transform_8(%arg0: i32) -> (i32, i32) {
    %c0_i32 = arith.constant 0 : i32
    %c0_i32_0 = arith.constant 0 : i32
    %c0_i32_1 = arith.constant 0 : i32
    return %c0_i32, %c0_i32_0 : i32, i32
  }
  func.func @transform_9(%arg0: i32) -> (i32, i32) {
    %c0_i32 = arith.constant 0 : i32
    %c0_i32_0 = arith.constant 0 : i32
    %c0_i32_1 = arith.constant 0 : i32
    return %c0_i32, %c0_i32_0 : i32, i32
  }
  func.func @transform_10(%arg0: i32) -> (i32, i32) {
    %c0_i32 = arith.constant 0 : i32
    %c0_i32_0 = arith.constant 0 : i32
    %c0_i32_1 = arith.constant 0 : i32
    return %c0_i32, %c0_i32_0 : i32, i32
  }
  func.func @transform_11(%arg0: i32) -> (i32, i32) {
    %c0_i32 = arith.constant 0 : i32
    %c0_i32_0 = arith.constant 0 : i32
    %c0_i32_1 = arith.constant 0 : i32
    return %c0_i32, %c0_i32_0 : i32, i32
  }
  func.func @transform_12(%arg0: i32) -> (i32, i32) {
    %c0_i32 = arith.constant 0 : i32
    %c0_i32_0 = arith.constant 0 : i32
    %c0_i32_1 = arith.constant 0 : i32
    return %c0_i32, %c0_i32_0 : i32, i32
  }
  func.func @transform_13(%arg0: i32) -> (i32, i32) {
    %c0_i32 = arith.constant 0 : i32
    %c0_i32_0 = arith.constant 0 : i32
    %c0_i32_1 = arith.constant 0 : i32
    return %c0_i32, %c0_i32_0 : i32, i32
  }
  func.func @transform_14(%arg0: i32) -> (i32, i32, i32, i32) {
    %c0_i32 = arith.constant 0 : i32
    %c0_i32_0 = arith.constant 0 : i32
    %c0_i32_1 = arith.constant 0 : i32
    %c0_i32_2 = arith.constant 0 : i32
    return %arg0, %c0_i32, %c0_i32_0, %c0_i32_1 : i32, i32, i32, i32
  }
  func.func @transform_15(%arg0: i32) -> (i32, i32, i32) {
    %c0_i32 = arith.constant 0 : i32
    %c0_i32_0 = arith.constant 0 : i32
    %c0_i32_1 = arith.constant 0 : i32
    return %arg0, %c0_i32, %c0_i32_0 : i32, i32, i32
  }
}

module attributes {stable_mosaic.version = 11 : i64} {
  func.func @_mlp_kernel(%arg0: memref<2x32xf32, #tpu.memory_space<vmem>>, %arg1: memref<32x32xf32, #tpu.memory_space<vmem>>, %arg2: memref<1x32xf32, #tpu.memory_space<vmem>>, %arg3: memref<32x10xf32, #tpu.memory_space<vmem>>, %arg4: memref<1x10xf32, #tpu.memory_space<vmem>>, %arg5: memref<2x10xf32, #tpu.memory_space<vmem>>) attributes {dimension_semantics = [], scalar_prefetch = 0 : i64, scratch_operands = 0 : i64, tpu.core_type = #tpu.core_type<tc>} {
    %c0 = arith.constant 0 : index
    %c0_0 = arith.constant 0 : index
    %0 = vector.load %arg0[%c0, %c0_0] : memref<2x32xf32, #tpu.memory_space<vmem>>, vector<2x32xf32>
    %c0_1 = arith.constant 0 : index
    %c0_2 = arith.constant 0 : index
    %1 = vector.load %arg1[%c0_1, %c0_2] : memref<32x32xf32, #tpu.memory_space<vmem>>, vector<32x32xf32>
    %cst = arith.constant dense<0.000000e+00> : vector<2x32xf32>
    %2 = tpu.matmul %0, %1, %cst {dimension_numbers = #tpu.dot_dimension_numbers<[1], [0], [0], [1], [0, 0, 1, 1], [], []>} : vector<2x32xf32>, vector<32x32xf32>, vector<2x32xf32> -> vector<2x32xf32>
    %c0_3 = arith.constant 0 : index
    %c0_4 = arith.constant 0 : index
    %3 = vector.load %arg2[%c0_3, %c0_4] : memref<1x32xf32, #tpu.memory_space<vmem>>, vector<1x32xf32>
    %4 = vector.broadcast %3 : vector<1x32xf32> to vector<2x32xf32>
    %5 = arith.addf %2, %4 : vector<2x32xf32>
    %cst_5 = arith.constant 0.000000e+00 : f32
    %6 = vector.broadcast %cst_5 : f32 to vector<2x32xf32>
    %7 = arith.maximumf %5, %6 : vector<2x32xf32>
    %c0_6 = arith.constant 0 : index
    %c0_7 = arith.constant 0 : index
    %8 = vector.load %arg3[%c0_6, %c0_7] : memref<32x10xf32, #tpu.memory_space<vmem>>, vector<32x10xf32>
    %cst_8 = arith.constant dense<0.000000e+00> : vector<2x10xf32>
    %9 = tpu.matmul %7, %8, %cst_8 {dimension_numbers = #tpu.dot_dimension_numbers<[1], [0], [0], [1], [0, 0, 1, 1], [], []>} : vector<2x32xf32>, vector<32x10xf32>, vector<2x10xf32> -> vector<2x10xf32>
    %c0_9 = arith.constant 0 : index
    %c0_10 = arith.constant 0 : index
    %10 = vector.load %arg4[%c0_9, %c0_10] : memref<1x10xf32, #tpu.memory_space<vmem>>, vector<1x10xf32>
    %11 = vector.broadcast %10 : vector<1x10xf32> to vector<2x10xf32>
    %12 = arith.addf %9, %11 : vector<2x10xf32>
    %c0_11 = arith.constant 0 : index
    %c0_12 = arith.constant 0 : index
    %13 = vector.load %arg5[%c0_11, %c0_12] : memref<2x10xf32, #tpu.memory_space<vmem>>, vector<2x10xf32>
    tpu.vector_store %arg5[%c0_11, %c0_12], %12 {strides = array<i32>} : memref<2x10xf32, #tpu.memory_space<vmem>>, vector<2x10xf32>,
    return
  }
}

</mosaic_0001>

<llo_original>
// kernel: vqa_forward.6
$region0: #{vqa_forward.6}
  #allocation0 [shape = 'u32[]', space=smem, size = 0x4, offset = 0x4, fixed_abs, tag = 'smem constant byte address 0x4 - core index']
  #allocation1 [shape = 'u32[144,128]{1,0:T(1,128)}', space=vmem, size = 0x12000, scoped, tag = 'internal scratch']
  %s0 = inlined_call_operand.vmem [shape: f32[8,16], index: 0, kind: input, shape index: {}]
  %s1 = inlined_call_operand.vmem [shape: f32[16,32], index: 1, kind: input, shape index: {}]
  %s2 = inlined_call_operand.vmem [shape: f32[1,32], index: 2, kind: input, shape index: {}]
  %s3 = inlined_call_operand.vmem [shape: f32[32,32], index: 3, kind: input, shape index: {}]
  %s4 = inlined_call_operand.vmem [shape: f32[1,32], index: 4, kind: input, shape index: {}]
  %s5 = inlined_call_operand.vmem [shape: f32[8,32], index: 5, kind: output, shape index: {}]
  %s6 = sld [smem:[#allocation0]]
  $region30: #{vqa_forward.6} parent=0
    _
  %s8 = ssub.s32 1, %s6
  %s9 = scalar_select 0, %s8, %s6
  // Predicated region
  $region2: #{vqa_forward.6} parent=0 // pred_check
    _
  $region3: #{vqa_forward.6} parent=0 // pred_check_branch
    %11 = sbr.rel (0) target = $region5
  $region4: #{vqa_forward.6} parent=0 // pred_region
    _
  $region5: #{vqa_forward.6} parent=0 // pred_fallthru
    _
  // Predicated region
  $region6: #{vqa_forward.6} parent=0 // pred_check
    _
  $region7: #{vqa_forward.6} parent=0 // pred_check_branch
    %13 = sbr.rel (0) target = $region9
  $region8: #{vqa_forward.6} parent=0 // pred_region
    _
  $region9: #{vqa_forward.6} parent=0 // pred_fallthru
    _
  // Predicated region
  $region10: #{vqa_forward.6} parent=0 // pred_check
    _
  $region11: #{vqa_forward.6} parent=0 // pred_check_branch
    %15 = sbr.rel (0) target = $region13
  $region12: #{vqa_forward.6} parent=0 // pred_region
    _
  $region13: #{vqa_forward.6} parent=0 // pred_fallthru
    _
  // Predicated region
  $region14: #{vqa_forward.6} parent=0 // pred_check
    _
  $region15: #{vqa_forward.6} parent=0 // pred_check_branch
    %17 = sbr.rel (0) target = $region17
  $region16: #{vqa_forward.6} parent=0 // pred_region
    _
  $region17: #{vqa_forward.6} parent=0 // pred_fallthru
    _
  // Predicated region
  $region18: #{vqa_forward.6} parent=0 // pred_check
    _
  $region19: #{vqa_forward.6} parent=0 // pred_check_branch
    %19 = sbr.rel (0) target = $region21
  $region20: #{vqa_forward.6} parent=0 // pred_region
    _
  $region21: #{vqa_forward.6} parent=0 // pred_fallthru
    _
  %v20 = vld [vmem:[%s0] sm:$0xff]
  %v21 = vld [vmem:[%s1] sm:$0xff]
  %v22 = vld [vmem:[%s1 + $0x8] sm:$0xff]
  %v23 = vld [vmem:[%s2] sm:$0x1]
  %v25 = vlaneseq
  %v26 = vshrl.u32 %v25, 7
  %v27 = vsub.s32 0, %v26
  %v28 = vrot.slane %v23, %v27
  %vm30 = vcmask 130048
  %v32 = vsel %vm30, %v20, 0
  %34 = vmatprep.subr.mxu0 0.0
  %35 = vmatpush1.msra.mxu0 %v21
  %36 = vmatprep.subr.mxu0 0.0
  %37 = vmatpush1.msra.mxu0 %v22
  %38 = vmatprep.subr.mxu0 0.0
  %39 = vmatpush1.msra.mxu0 0.0
  %40 = vmatprep.subr.mxu0 0.0
  %41 = vmatpush1.msra.mxu0 0.0
  %42 = vmatprep.subr.mxu0 0.0
  %43 = vmatpush1.msra.mxu0 0.0
  %44 = vmatprep.subr.mxu0 0.0
  %45 = vmatpush1.msra.mxu0 0.0
  %46 = vmatprep.subr.mxu0 0.0
  %47 = vmatpush1.msra.mxu0 0.0
  %48 = vmatprep.subr.mxu0 0.0
  %49 = vmatpush1.msra.mxu0 0.0
  %50 = vmatprep.subr.mxu0 0.0
  %51 = vmatpush1.msra.mxu0 0.0
  %52 = vmatprep.subr.mxu0 0.0
  %53 = vmatpush1.msra.mxu0 0.0
  %54 = vmatprep.subr.mxu0 0.0
  %55 = vmatpush1.msra.mxu0 0.0
  %56 = vmatprep.subr.mxu0 0.0
  %57 = vmatpush1.msra.mxu0 0.0
  %58 = vmatprep.subr.mxu0 0.0
  %59 = vmatpush1.msra.mxu0 0.0
  %60 = vmatprep.subr.mxu0 0.0
  %61 = vmatpush1.msra.mxu0 0.0
  %62 = vmatprep.subr.mxu0 0.0
  %63 = vmatpush1.msra.mxu0 0.0
  %64 = vmatprep.subr.mxu0 0.0
  %65 = vmatpush1.msra.mxu0 0.0
  %66 = vmatprep.subr.mxu0 0.0
  %67 = vmatpush1.msra.mxu0 0.0
  %68 = vmatprep.subr.mxu0 0.0
  %69 = vmatpush1.msra.mxu0 0.0
  %70 = vmatprep.subr.mxu0 0.0
  %71 = vmatpush1.msra.mxu0 0.0
  %72 = vmatprep.subr.mxu0 0.0
  %73 = vmatpush1.msra.mxu0 0.0
  %74 = vmatprep.subr.mxu0 0.0
  %75 = vmatpush1.msra.mxu0 0.0
  %76 = vmatprep.subr.mxu0 0.0
  %77 = vmatpush1.msra.mxu0 0.0
  %78 = vmatprep.subr.mxu0 0.0
  %79 = vmatpush1.msra.mxu0 0.0
  %80 = vmatprep.subr.mxu0 0.0
  %81 = vmatpush1.msra.mxu0 0.0
  %82 = vmatprep.subr.mxu0 0.0
  %83 = vmatpush1.msra.mxu0 0.0
  %84 = vmatprep.subr.mxu0 0.0
  %85 = vmatpush1.msra.mxu0 0.0
  %86 = vmatprep.subr.mxu0 0.0
  %87 = vmatpush1.msra.mxu0 0.0
  %88 = vmatprep.subr.mxu0 0.0
  %89 = vmatpush1.msra.mxu0 0.0
  %90 = vmatprep.subr.mxu0 0.0
  %91 = vmatpush1.msra.mxu0 0.0
  %92 = vmatprep.subr.mxu0 0.0
  %93 = vmatpush1.msra.mxu0 0.0
  %94 = vmatprep.subr.mxu0 0.0
  %95 = vmatpush1.msra.mxu0 0.0
  %96 = vmatprep.subr.mxu0 0.0
  %97 = vmatpush1.msra.mxu0 0.0
  %98 = vmatprep.mubr.f32.mxu0 0.0
  %99 = vmatmul.mubr.f32.gmra.mrb[0].mxu0 %v32
  %v100 = vpop.f32.mrb[0].mxu0
  %v101 = vadd.f32 %v28, %v100
  %v102 = vpop.f32.mrb[0].mxu0
  %103 = vdwg.mxu0
  %v104 = vmax.f32 %v101, 0.0
  %v105 = vld [vmem:[%s3] sm:$0xff]
  %v106 = vld [vmem:[%s3 + $0x8] sm:$0xff]
  %v107 = vld [vmem:[%s3 + $0x10] sm:$0xff]
  %v108 = vld [vmem:[%s3 + $0x18] sm:$0xff]
  %v109 = vld [vmem:[%s4] sm:$0x1]
  %v111 = vlaneseq
  %v112 = vshrl.u32 %v111, 7
  %v113 = vsub.s32 0, %v112
  %v114 = vrot.slane %v109, %v113
  %vm116 = vcmask 261120
  %v118 = vsel %vm116, %v104, 0
  %120 = vmatprep.subr.mxu0 0.0
  %121 = vmatpush1.msra.mxu0 %v105
  %122 = vmatprep.subr.mxu0 0.0
  %123 = vmatpush1.msra.mxu0 %v106
  %124 = vmatprep.subr.mxu0 0.0
  %125 = vmatpush1.msra.mxu0 %v107
  %126 = vmatprep.subr.mxu0 0.0
  %127 = vmatpush1.msra.mxu0 %v108
  %128 = vmatprep.subr.mxu0 0.0
  %129 = vmatpush1.msra.mxu0 0.0
  %130 = vmatprep.subr.mxu0 0.0
  %131 = vmatpush1.msra.mxu0 0.0
  %132 = vmatprep.subr.mxu0 0.0
  %133 = vmatpush1.msra.mxu0 0.0
  %134 = vmatprep.subr.mxu0 0.0
  %135 = vmatpush1.msra.mxu0 0.0
  %136 = vmatprep.subr.mxu0 0.0
  %137 = vmatpush1.msra.mxu0 0.0
  %138 = vmatprep.subr.mxu0 0.0
  %139 = vmatpush1.msra.mxu0 0.0
  %140 = vmatprep.subr.mxu0 0.0
  %141 = vmatpush1.msra.mxu0 0.0
  %142 = vmatprep.subr.mxu0 0.0
  %143 = vmatpush1.msra.mxu0 0.0
  %144 = vmatprep.subr.mxu0 0.0
  %145 = vmatpush1.msra.mxu0 0.0
  %146 = vmatprep.subr.mxu0 0.0
  %147 = vmatpush1.msra.mxu0 0.0
  %148 = vmatprep.subr.mxu0 0.0
  %149 = vmatpush1.msra.mxu0 0.0
  %150 = vmatprep.subr.mxu0 0.0
  %151 = vmatpush1.msra.mxu0 0.0
  %152 = vmatprep.subr.mxu0 0.0
  %153 = vmatpush1.msra.mxu0 0.0
  %154 = vmatprep.subr.mxu0 0.0
  %155 = vmatpush1.msra.mxu0 0.0
  %156 = vmatprep.subr.mxu0 0.0
  %157 = vmatpush1.msra.mxu0 0.0
  %158 = vmatprep.subr.mxu0 0.0
  %159 = vmatpush1.msra.mxu0 0.0
  %160 = vmatprep.subr.mxu0 0.0
  %161 = vmatpush1.msra.mxu0 0.0
  %162 = vmatprep.subr.mxu0 0.0
  %163 = vmatpush1.msra.mxu0 0.0
  %164 = vmatprep.subr.mxu0 0.0
  %165 = vmatpush1.msra.mxu0 0.0
  %166 = vmatprep.subr.mxu0 0.0
  %167 = vmatpush1.msra.mxu0 0.0
  %168 = vmatprep.subr.mxu0 0.0
  %169 = vmatpush1.msra.mxu0 0.0
  %170 = vmatprep.subr.mxu0 0.0
  %171 = vmatpush1.msra.mxu0 0.0
  %172 = vmatprep.subr.mxu0 0.0
  %173 = vmatpush1.msra.mxu0 0.0
  %174 = vmatprep.subr.mxu0 0.0
  %175 = vmatpush1.msra.mxu0 0.0
  %176 = vmatprep.subr.mxu0 0.0
  %177 = vmatpush1.msra.mxu0 0.0
  %178 = vmatprep.subr.mxu0 0.0
  %179 = vmatpush1.msra.mxu0 0.0
  %180 = vmatprep.subr.mxu0 0.0
  %181 = vmatpush1.msra.mxu0 0.0
  %182 = vmatprep.subr.mxu0 0.0
  %183 = vmatpush1.msra.mxu0 0.0
  %184 = vmatprep.mubr.f32.mxu0 0.0
  %185 = vmatmul.mubr.f32.gmra.mrb[0].mxu0 %v118
  %v186 = vpop.f32.mrb[0].mxu0
  %v187 = vadd.f32 %v114, %v186
  %v188 = vpop.f32.mrb[0].mxu0
  %189 = vdwg.mxu0
  %190 = vst.msk [vmem:[%s5] sm:$0xff] %vm116, %v187
  // Predicated region
  $region22: #{vqa_forward.6} parent=0 // pred_check
    _
  $region23: #{vqa_forward.6} parent=0 // pred_check_branch
    %192 = sbr.rel (0) target = $region25
  $region24: #{vqa_forward.6} parent=0 // pred_region
    _
  $region25: #{vqa_forward.6} parent=0 // pred_fallthru
    _
  // Predicated region
  $region26: #{vqa_forward.6} parent=0 // pred_check
    _
  $region27: #{vqa_forward.6} parent=0 // pred_check_branch
    %194 = sbr.rel (0) target = $region29
  $region28: #{vqa_forward.6} parent=0 // pred_region
    _
  $region29: #{vqa_forward.6} parent=0 // pred_fallthru
    _

// kernel: vqa_forward.7
$region0: #{vqa_forward.7}
  #allocation0 [shape = 'u32[]', space=smem, size = 0x4, offset = 0x4, fixed_abs, tag = 'smem constant byte address 0x4 - core index']
  #allocation1 [shape = 'u32[144,128]{1,0:T(1,128)}', space=vmem, size = 0x12000, scoped, tag = 'internal scratch']
  %s0 = inlined_call_operand.vmem [shape: f32[98,16], index: 0, kind: input, shape index: {}]
  %s1 = inlined_call_operand.vmem [shape: f32[16,32], index: 1, kind: input, shape index: {}]
  %s2 = inlined_call_operand.vmem [shape: f32[1,32], index: 2, kind: input, shape index: {}]
  %s3 = inlined_call_operand.vmem [shape: f32[32,32], index: 3, kind: input, shape index: {}]
  %s4 = inlined_call_operand.vmem [shape: f32[1,32], index: 4, kind: input, shape index: {}]
  %s5 = inlined_call_operand.vmem [shape: f32[98,32], index: 5, kind: output, shape index: {}]
  %s6 = sld [smem:[#allocation0]]
  $region30: #{vqa_forward.7} parent=0
    _
  %s8 = ssub.s32 1, %s6
  %s9 = scalar_select 0, %s8, %s6
  // Predicated region
  $region2: #{vqa_forward.7} parent=0 // pred_check
    _
  $region3: #{vqa_forward.7} parent=0 // pred_check_branch
    %11 = sbr.rel (0) target = $region5
  $region4: #{vqa_forward.7} parent=0 // pred_region
    _
  $region5: #{vqa_forward.7} parent=0 // pred_fallthru
    _
  // Predicated region
  $region6: #{vqa_forward.7} parent=0 // pred_check
    _
  $region7: #{vqa_forward.7} parent=0 // pred_check_branch
    %13 = sbr.rel (0) target = $region9
  $region8: #{vqa_forward.7} parent=0 // pred_region
    _
  $region9: #{vqa_forward.7} parent=0 // pred_fallthru
    _
  // Predicated region
  $region10: #{vqa_forward.7} parent=0 // pred_check
    _
  $region11: #{vqa_forward.7} parent=0 // pred_check_branch
    %15 = sbr.rel (0) target = $region13
  $region12: #{vqa_forward.7} parent=0 // pred_region
    _
  $region13: #{vqa_forward.7} parent=0 // pred_fallthru
    _
  // Predicated region
  $region14: #{vqa_forward.7} parent=0 // pred_check
    _
  $region15: #{vqa_forward.7} parent=0 // pred_check_branch
    %17 = sbr.rel (0) target = $region17
  $region16: #{vqa_forward.7} parent=0 // pred_region
    _
  $region17: #{vqa_forward.7} parent=0 // pred_fallthru
    _
  // Predicated region
  $region18: #{vqa_forward.7} parent=0 // pred_check
    _
  $region19: #{vqa_forward.7} parent=0 // pred_check_branch
    %19 = sbr.rel (0) target = $region21
  $region20: #{vqa_forward.7} parent=0 // pred_region
    _
  $region21: #{vqa_forward.7} parent=0 // pred_fallthru
    _
  %v20 = vld [vmem:[%s0] sm:$0xff]
  %v21 = vld [vmem:[%s0 + $0x8] sm:$0xff]
  %v22 = vld [vmem:[%s0 + $0x10] sm:$0xff]
  %v23 = vld [vmem:[%s0 + $0x18] sm:$0xff]
  %v24 = vld [vmem:[%s0 + $0x20] sm:$0xff]
  %v25 = vld [vmem:[%s0 + $0x28] sm:$0xff]
  %v26 = vld [vmem:[%s0 + $0x30] sm:$0xff]
  %v27 = vld [vmem:[%s0 + $0x38] sm:$0xff]
  %v28 = vld [vmem:[%s0 + $0x40] sm:$0xff]
  %v29 = vld [vmem:[%s0 + $0x48] sm:$0xff]
  %v30 = vld [vmem:[%s0 + $0x50] sm:$0xff]
  %v31 = vld [vmem:[%s0 + $0x58] sm:$0xff]
  %v32 = vld [vmem:[%s0 + $0x60] sm:$0x3]
  %v33 = vld [vmem:[%s1] sm:$0xff]
  %v34 = vld [vmem:[%s1 + $0x8] sm:$0xff]
  %v35 = vld [vmem:[%s2] sm:$0x1]
  %v37 = vlaneseq
  %v38 = vshrl.u32 %v37, 7
  %v39 = vsub.s32 0, %v38
  %v40 = vrot.slane %v35, %v39
  %vm42 = vcmask 130048
  %v44 = vsel %vm42, %v20, 0
  %v47 = vsel %vm42, %v21, 0
  %v50 = vsel %vm42, %v22, 0
  %v53 = vsel %vm42, %v23, 0
  %v56 = vsel %vm42, %v24, 0
  %v59 = vsel %vm42, %v25, 0
  %v62 = vsel %vm42, %v26, 0
  %v65 = vsel %vm42, %v27, 0
  %v68 = vsel %vm42, %v28, 0
  %v71 = vsel %vm42, %v29, 0
  %v74 = vsel %vm42, %v30, 0
  %v77 = vsel %vm42, %v31, 0
  %v80 = vsel %vm42, %v32, 0
  %82 = vmatprep.subr.mxu0 0.0
  %83 = vmatpush1.msra.mxu0 %v33
  %84 = vmatprep.subr.mxu0 0.0
  %85 = vmatpush1.msra.mxu0 %v34
  %86 = vmatprep.subr.mxu0 0.0
  %87 = vmatpush1.msra.mxu0 0.0
  %88 = vmatprep.subr.mxu0 0.0
  %89 = vmatpush1.msra.mxu0 0.0
  %90 = vmatprep.subr.mxu0 0.0
  %91 = vmatpush1.msra.mxu0 0.0
  %92 = vmatprep.subr.mxu0 0.0
  %93 = vmatpush1.msra.mxu0 0.0
  %94 = vmatprep.subr.mxu0 0.0
  %95 = vmatpush1.msra.mxu0 0.0
  %96 = vmatprep.subr.mxu0 0.0
  %97 = vmatpush1.msra.mxu0 0.0
  %98 = vmatprep.subr.mxu0 0.0
  %99 = vmatpush1.msra.mxu0 0.0
  %100 = vmatprep.subr.mxu0 0.0
  %101 = vmatpush1.msra.mxu0 0.0
  %102 = vmatprep.subr.mxu0 0.0
  %103 = vmatpush1.msra.mxu0 0.0
  %104 = vmatprep.subr.mxu0 0.0
  %105 = vmatpush1.msra.mxu0 0.0
  %106 = vmatprep.subr.mxu0 0.0
  %107 = vmatpush1.msra.mxu0 0.0
  %108 = vmatprep.subr.mxu0 0.0
  %109 = vmatpush1.msra.mxu0 0.0
  %110 = vmatprep.subr.mxu0 0.0
  %111 = vmatpush1.msra.mxu0 0.0
  %112 = vmatprep.subr.mxu0 0.0
  %113 = vmatpush1.msra.mxu0 0.0
  %114 = vmatprep.subr.mxu0 0.0
  %115 = vmatpush1.msra.mxu0 0.0
  %116 = vmatprep.subr.mxu0 0.0
  %117 = vmatpush1.msra.mxu0 0.0
  %118 = vmatprep.subr.mxu0 0.0
  %119 = vmatpush1.msra.mxu0 0.0
  %120 = vmatprep.subr.mxu0 0.0
  %121 = vmatpush1.msra.mxu0 0.0
  %122 = vmatprep.subr.mxu0 0.0
  %123 = vmatpush1.msra.mxu0 0.0
  %124 = vmatprep.subr.mxu0 0.0
  %125 = vmatpush1.msra.mxu0 0.0
  %126 = vmatprep.subr.mxu0 0.0
  %127 = vmatpush1.msra.mxu0 0.0
  %128 = vmatprep.subr.mxu0 0.0
  %129 = vmatpush1.msra.mxu0 0.0
  %130 = vmatprep.subr.mxu0 0.0
  %131 = vmatpush1.msra.mxu0 0.0
  %132 = vmatprep.subr.mxu0 0.0
  %133 = vmatpush1.msra.mxu0 0.0
  %134 = vmatprep.subr.mxu0 0.0
  %135 = vmatpush1.msra.mxu0 0.0
  %136 = vmatprep.subr.mxu0 0.0
  %137 = vmatpush1.msra.mxu0 0.0
  %138 = vmatprep.subr.mxu0 0.0
  %139 = vmatpush1.msra.mxu0 0.0
  %140 = vmatprep.subr.mxu0 0.0
  %141 = vmatpush1.msra.mxu0 0.0
  %142 = vmatprep.subr.mxu0 0.0
  %143 = vmatpush1.msra.mxu0 0.0
  %144 = vmatprep.subr.mxu0 0.0
  %145 = vmatpush1.msra.mxu0 0.0
  %146 = vmatprep.mubr.f32.mxu0 0.0
  %147 = vmatmul.mubr.f32.gmra.mrb[0].mxu0 %v44
  %v148 = vpop.f32.mrb[0].mxu0
  %v149 = vadd.f32 %v40, %v148
  %v150 = vpop.f32.mrb[0].mxu0
  %151 = vmatprep.mubr.f32.mxu0 0.0
  %152 = vmatmul.mubr.f32.gmra.mrb[0].mxu0 %v47
  %v153 = vpop.f32.mrb[0].mxu0
  %v154 = vadd.f32 %v40, %v153
  %v155 = vpop.f32.mrb[0].mxu0
  %156 = vmatprep.mubr.f32.mxu0 0.0
  %157 = vmatmul.mubr.f32.gmra.mrb[0].mxu0 %v50
  %v158 = vpop.f32.mrb[0].mxu0
  %v159 = vadd.f32 %v40, %v158
  %v160 = vpop.f32.mrb[0].mxu0
  %161 = vmatprep.mubr.f32.mxu0 0.0
  %162 = vmatmul.mubr.f32.gmra.mrb[0].mxu0 %v53
  %v163 = vpop.f32.mrb[0].mxu0
  %v164 = vadd.f32 %v40, %v163
  %v165 = vpop.f32.mrb[0].mxu0
  %166 = vmatprep.mubr.f32.mxu0 0.0
  %167 = vmatmul.mubr.f32.gmra.mrb[0].mxu0 %v56
  %v168 = vpop.f32.mrb[0].mxu0
  %v169 = vadd.f32 %v40, %v168
  %v170 = vpop.f32.mrb[0].mxu0
  %171 = vmatprep.mubr.f32.mxu0 0.0
  %172 = vmatmul.mubr.f32.gmra.mrb[0].mxu0 %v59
  %v173 = vpop.f32.mrb[0].mxu0
  %v174 = vadd.f32 %v40, %v173
  %v175 = vpop.f32.mrb[0].mxu0
  %176 = vmatprep.mubr.f32.mxu0 0.0
  %177 = vmatmul.mubr.f32.gmra.mrb[0].mxu0 %v62
  %v178 = vpop.f32.mrb[0].mxu0
  %v179 = vadd.f32 %v40, %v178
  %v180 = vpop.f32.mrb[0].mxu0
  %181 = vmatprep.mubr.f32.mxu0 0.0
  %182 = vmatmul.mubr.f32.gmra.mrb[0].mxu0 %v65
  %v183 = vpop.f32.mrb[0].mxu0
  %v184 = vadd.f32 %v40, %v183
  %v185 = vpop.f32.mrb[0].mxu0
  %186 = vmatprep.mubr.f32.mxu0 0.0
  %187 = vmatmul.mubr.f32.gmra.mrb[0].mxu0 %v68
  %v188 = vpop.f32.mrb[0].mxu0
  %v189 = vadd.f32 %v40, %v188
  %v190 = vpop.f32.mrb[0].mxu0
  %191 = vmatprep.mubr.f32.mxu0 0.0
  %192 = vmatmul.mubr.f32.gmra.mrb[0].mxu0 %v71
  %v193 = vpop.f32.mrb[0].mxu0
  %v194 = vadd.f32 %v40, %v193
  %v195 = vpop.f32.mrb[0].mxu0
  %196 = vmatprep.mubr.f32.mxu0 0.0
  %197 = vmatmul.mubr.f32.gmra.mrb[0].mxu0 %v74
  %v198 = vpop.f32.mrb[0].mxu0
  %v199 = vadd.f32 %v40, %v198
  %v200 = vpop.f32.mrb[0].mxu0
  %201 = vmatprep.mubr.f32.mxu0 0.0
  %202 = vmatmul.mubr.f32.gmra.mrb[0].mxu0 %v77
  %v203 = vpop.f32.mrb[0].mxu0
  %v204 = vadd.f32 %v40, %v203
  %v205 = vpop.f32.mrb[0].mxu0
  %206 = vmatprep.mubr.f32.mxu0 0.0
  %207 = vmatmul.mubr.f32.gmra.mrb[0].mxu0 %v80
  %v208 = vpop.f32.mrb[0].mxu0
  %v209 = vadd.f32 %v40, %v208
  %v210 = vpop.f32.mrb[0].mxu0
  %211 = vdwg.mxu0
  %v212 = vmax.f32 %v149, 0.0
  %v213 = vmax.f32 %v154, 0.0
  %v214 = vmax.f32 %v159, 0.0
  %v215 = vmax.f32 %v164, 0.0
  %v216 = vmax.f32 %v169, 0.0
  %v217 = vmax.f32 %v174, 0.0
  %v218 = vmax.f32 %v179, 0.0
  %v219 = vmax.f32 %v184, 0.0
  %v220 = vmax.f32 %v189, 0.0
  %v221 = vmax.f32 %v194, 0.0
  %v222 = vmax.f32 %v199, 0.0
  %v223 = vmax.f32 %v204, 0.0
  %v224 = vmax.f32 %v209, 0.0
  %v225 = vld [vmem:[%s3] sm:$0xff]
  %v226 = vld [vmem:[%s3 + $0x8] sm:$0xff]
  %v227 = vld [vmem:[%s3 + $0x10] sm:$0xff]
  %v228 = vld [vmem:[%s3 + $0x18] sm:$0xff]
  %v229 = vld [vmem:[%s4] sm:$0x1]
  %v231 = vlaneseq
  %v232 = vshrl.u32 %v231, 7
  %v233 = vsub.s32 0, %v232
  %v234 = vrot.slane %v229, %v233
  %vm236 = vcmask 261120
  %v238 = vsel %vm236, %v212, 0
  %v241 = vsel %vm236, %v213, 0
  %v244 = vsel %vm236, %v214, 0
  %v247 = vsel %vm236, %v215, 0
  %v250 = vsel %vm236, %v216, 0
  %v253 = vsel %vm236, %v217, 0
  %v256 = vsel %vm236, %v218, 0
  %v259 = vsel %vm236, %v219, 0
  %v262 = vsel %vm236, %v220, 0
  %v265 = vsel %vm236, %v221, 0
  %v268 = vsel %vm236, %v222, 0
  %v271 = vsel %vm236, %v223, 0
  %v274 = vsel %vm236, %v224, 0
  %276 = vmatprep.subr.mxu0 0.0
  %277 = vmatpush1.msra.mxu0 %v225
  %278 = vmatprep.subr.mxu0 0.0
  %279 = vmatpush1.msra.mxu0 %v226
  %280 = vmatprep.subr.mxu0 0.0
  %281 = vmatpush1.msra.mxu0 %v227
  %282 = vmatprep.subr.mxu0 0.0
  %283 = vmatpush1.msra.mxu0 %v228
  %284 = vmatprep.subr.mxu0 0.0
  %285 = vmatpush1.msra.mxu0 0.0
  %286 = vmatprep.subr.mxu0 0.0
  %287 = vmatpush1.msra.mxu0 0.0
  %288 = vmatprep.subr.mxu0 0.0
  %289 = vmatpush1.msra.mxu0 0.0
  %290 = vmatprep.subr.mxu0 0.0
  %291 = vmatpush1.msra.mxu0 0.0
  %292 = vmatprep.subr.mxu0 0.0
  %293 = vmatpush1.msra.mxu0 0.0
  %294 = vmatprep.subr.mxu0 0.0
  %295 = vmatpush1.msra.mxu0 0.0
  %296 = vmatprep.subr.mxu0 0.0
  %297 = vmatpush1.msra.mxu0 0.0
  %298 = vmatprep.subr.mxu0 0.0
  %299 = vmatpush1.msra.mxu0 0.0
  %300 = vmatprep.subr.mxu0 0.0
  %301 = vmatpush1.msra.mxu0 0.0
  %302 = vmatprep.subr.mxu0 0.0
  %303 = vmatpush1.msra.mxu0 0.0
  %304 = vmatprep.subr.mxu0 0.0
  %305 = vmatpush1.msra.mxu0 0.0
  %306 = vmatprep.subr.mxu0 0.0
  %307 = vmatpush1.msra.mxu0 0.0
  %308 = vmatprep.subr.mxu0 0.0
  %309 = vmatpush1.msra.mxu0 0.0
  %310 = vmatprep.subr.mxu0 0.0
  %311 = vmatpush1.msra.mxu0 0.0
  %312 = vmatprep.subr.mxu0 0.0
  %313 = vmatpush1.msra.mxu0 0.0
  %314 = vmatprep.subr.mxu0 0.0
  %315 = vmatpush1.msra.mxu0 0.0
  %316 = vmatprep.subr.mxu0 0.0
  %317 = vmatpush1.msra.mxu0 0.0
  %318 = vmatprep.subr.mxu0 0.0
  %319 = vmatpush1.msra.mxu0 0.0
  %320 = vmatprep.subr.mxu0 0.0
  %321 = vmatpush1.msra.mxu0 0.0
  %322 = vmatprep.subr.mxu0 0.0
  %323 = vmatpush1.msra.mxu0 0.0
  %324 = vmatprep.subr.mxu0 0.0
  %325 = vmatpush1.msra.mxu0 0.0
  %326 = vmatprep.subr.mxu0 0.0
  %327 = vmatpush1.msra.mxu0 0.0
  %328 = vmatprep.subr.mxu0 0.0
  %329 = vmatpush1.msra.mxu0 0.0
  %330 = vmatprep.subr.mxu0 0.0
  %331 = vmatpush1.msra.mxu0 0.0
  %332 = vmatprep.subr.mxu0 0.0
  %333 = vmatpush1.msra.mxu0 0.0
  %334 = vmatprep.subr.mxu0 0.0
  %335 = vmatpush1.msra.mxu0 0.0
  %336 = vmatprep.subr.mxu0 0.0
  %337 = vmatpush1.msra.mxu0 0.0
  %338 = vmatprep.subr.mxu0 0.0
  %339 = vmatpush1.msra.mxu0 0.0
  %340 = vmatprep.mubr.f32.mxu0 0.0
  %341 = vmatmul.mubr.f32.gmra.mrb[0].mxu0 %v238
  %v342 = vpop.f32.mrb[0].mxu0
  %v343 = vadd.f32 %v234, %v342
  %v344 = vpop.f32.mrb[0].mxu0
  %345 = vmatprep.mubr.f32.mxu0 0.0
  %346 = vmatmul.mubr.f32.gmra.mrb[0].mxu0 %v241
  %v347 = vpop.f32.mrb[0].mxu0
  %v348 = vadd.f32 %v234, %v347
  %v349 = vpop.f32.mrb[0].mxu0
  %350 = vmatprep.mubr.f32.mxu0 0.0
  %351 = vmatmul.mubr.f32.gmra.mrb[0].mxu0 %v244
  %v352 = vpop.f32.mrb[0].mxu0
  %v353 = vadd.f32 %v234, %v352
  %v354 = vpop.f32.mrb[0].mxu0
  %355 = vmatprep.mubr.f32.mxu0 0.0
  %356 = vmatmul.mubr.f32.gmra.mrb[0].mxu0 %v247
  %v357 = vpop.f32.mrb[0].mxu0
  %v358 = vadd.f32 %v234, %v357
  %v359 = vpop.f32.mrb[0].mxu0
  %360 = vmatprep.mubr.f32.mxu0 0.0
  %361 = vmatmul.mubr.f32.gmra.mrb[0].mxu0 %v250
  %v362 = vpop.f32.mrb[0].mxu0
  %v363 = vadd.f32 %v234, %v362
  %v364 = vpop.f32.mrb[0].mxu0
  %365 = vmatprep.mubr.f32.mxu0 0.0
  %366 = vmatmul.mubr.f32.gmra.mrb[0].mxu0 %v253
  %v367 = vpop.f32.mrb[0].mxu0
  %v368 = vadd.f32 %v234, %v367
  %v369 = vpop.f32.mrb[0].mxu0
  %370 = vmatprep.mubr.f32.mxu0 0.0
  %371 = vmatmul.mubr.f32.gmra.mrb[0].mxu0 %v256
  %v372 = vpop.f32.mrb[0].mxu0
  %v373 = vadd.f32 %v234, %v372
  %v374 = vpop.f32.mrb[0].mxu0
  %375 = vmatprep.mubr.f32.mxu0 0.0
  %376 = vmatmul.mubr.f32.gmra.mrb[0].mxu0 %v259
  %v377 = vpop.f32.mrb[0].mxu0
  %v378 = vadd.f32 %v234, %v377
  %v379 = vpop.f32.mrb[0].mxu0
  %380 = vmatprep.mubr.f32.mxu0 0.0
  %381 = vmatmul.mubr.f32.gmra.mrb[0].mxu0 %v262
  %v382 = vpop.f32.mrb[0].mxu0
  %v383 = vadd.f32 %v234, %v382
  %v384 = vpop.f32.mrb[0].mxu0
  %385 = vmatprep.mubr.f32.mxu0 0.0
  %386 = vmatmul.mubr.f32.gmra.mrb[0].mxu0 %v265
  %v387 = vpop.f32.mrb[0].mxu0
  %v388 = vadd.f32 %v234, %v387
  %v389 = vpop.f32.mrb[0].mxu0
  %390 = vmatprep.mubr.f32.mxu0 0.0
  %391 = vmatmul.mubr.f32.gmra.mrb[0].mxu0 %v268
  %v392 = vpop.f32.mrb[0].mxu0
  %v393 = vadd.f32 %v234, %v392
  %v394 = vpop.f32.mrb[0].mxu0
  %395 = vmatprep.mubr.f32.mxu0 0.0
  %396 = vmatmul.mubr.f32.gmra.mrb[0].mxu0 %v271
  %v397 = vpop.f32.mrb[0].mxu0
  %v398 = vadd.f32 %v234, %v397
  %v399 = vpop.f32.mrb[0].mxu0
  %400 = vmatprep.mubr.f32.mxu0 0.0
  %401 = vmatmul.mubr.f32.gmra.mrb[0].mxu0 %v274
  %v402 = vpop.f32.mrb[0].mxu0
  %v403 = vadd.f32 %v234, %v402
  %v404 = vpop.f32.mrb[0].mxu0
  %405 = vdwg.mxu0
  %406 = vst.msk [vmem:[%s5] sm:$0xff] %vm236, %v343
  %407 = vst.msk [vmem:[%s5 + $0x8] sm:$0xff] %vm236, %v348
  %408 = vst.msk [vmem:[%s5 + $0x10] sm:$0xff] %vm236, %v353
  %409 = vst.msk [vmem:[%s5 + $0x18] sm:$0xff] %vm236, %v358
  %410 = vst.msk [vmem:[%s5 + $0x20] sm:$0xff] %vm236, %v363
  %411 = vst.msk [vmem:[%s5 + $0x28] sm:$0xff] %vm236, %v368
  %412 = vst.msk [vmem:[%s5 + $0x30] sm:$0xff] %vm236, %v373
  %413 = vst.msk [vmem:[%s5 + $0x38] sm:$0xff] %vm236, %v378
  %414 = vst.msk [vmem:[%s5 + $0x40] sm:$0xff] %vm236, %v383
  %415 = vst.msk [vmem:[%s5 + $0x48] sm:$0xff] %vm236, %v388
  %416 = vst.msk [vmem:[%s5 + $0x50] sm:$0xff] %vm236, %v393
  %417 = vst.msk [vmem:[%s5 + $0x58] sm:$0xff] %vm236, %v398
  %vm418 = vcmask 254976
  %419 = vst.msk [vmem:[%s5 + $0x60] sm:$0x3] %vm418, %v403
  // Predicated region
  $region22: #{vqa_forward.7} parent=0 // pred_check
    _
  $region23: #{vqa_forward.7} parent=0 // pred_check_branch
    %421 = sbr.rel (0) target = $region25
  $region24: #{vqa_forward.7} parent=0 // pred_region
    _
  $region25: #{vqa_forward.7} parent=0 // pred_fallthru
    _
  // Predicated region
  $region26: #{vqa_forward.7} parent=0 // pred_check
    _
  $region27: #{vqa_forward.7} parent=0 // pred_check_branch
    %423 = sbr.rel (0) target = $region29
  $region28: #{vqa_forward.7} parent=0 // pred_region
    _
  $region29: #{vqa_forward.7} parent=0 // pred_fallthru
    _

// kernel: vqa_forward.8
$region0: #{vqa_forward.8}
  #allocation0 [shape = 'u32[]', space=smem, size = 0x4, offset = 0x4, fixed_abs, tag = 'smem constant byte address 0x4 - core index']
  #allocation1 [shape = 'u32[144,128]{1,0:T(1,128)}', space=vmem, size = 0x12000, scoped, tag = 'internal scratch']
  %s0 = inlined_call_operand.vmem [shape: f32[128,32], index: 0, kind: input, shape index: {}]
  %s1 = inlined_call_operand.vmem [shape: f32[1,32], index: 1, kind: input, shape index: {}]
  %s2 = inlined_call_operand.vmem [shape: f32[1,32], index: 2, kind: input, shape index: {}]
  %s3 = inlined_call_operand.vmem [shape: f32[128,32], index: 3, kind: output, shape index: {}]
  %s4 = sld [smem:[#allocation0]]
  $region22: #{vqa_forward.8} parent=0
    _
  %s6 = ssub.s32 1, %s4
  %s7 = scalar_select 0, %s6, %s4
  // Predicated region
  $region2: #{vqa_forward.8} parent=0 // pred_check
    _
  $region3: #{vqa_forward.8} parent=0 // pred_check_branch
    %9 = sbr.rel (0) target = $region5
  $region4: #{vqa_forward.8} parent=0 // pred_region
    _
  $region5: #{vqa_forward.8} parent=0 // pred_fallthru
    _
  // Predicated region
  $region6: #{vqa_forward.8} parent=0 // pred_check
    _
  $region7: #{vqa_forward.8} parent=0 // pred_check_branch
    %11 = sbr.rel (0) target = $region9
  $region8: #{vqa_forward.8} parent=0 // pred_region
    _
  $region9: #{vqa_forward.8} parent=0 // pred_fallthru
    _
  // Predicated region
  $region10: #{vqa_forward.8} parent=0 // pred_check
    _
  $region11: #{vqa_forward.8} parent=0 // pred_check_branch
    %13 = sbr.rel (0) target = $region13
  $region12: #{vqa_forward.8} parent=0 // pred_region
    _
  $region13: #{vqa_forward.8} parent=0 // pred_fallthru
    _
  %v14 = vld [vmem:[%s0] sm:$0xff]
  %v15 = vld [vmem:[%s0 + $0x8] sm:$0xff]
  %v16 = vld [vmem:[%s0 + $0x10] sm:$0xff]
  %v17 = vld [vmem:[%s0 + $0x18] sm:$0xff]
  %v18 = vld [vmem:[%s0 + $0x20] sm:$0xff]
  %v19 = vld [vmem:[%s0 + $0x28] sm:$0xff]
  %v20 = vld [vmem:[%s0 + $0x30] sm:$0xff]
  %v21 = vld [vmem:[%s0 + $0x38] sm:$0xff]
  %v22 = vld [vmem:[%s0 + $0x40] sm:$0xff]
  %v23 = vld [vmem:[%s0 + $0x48] sm:$0xff]
  %v24 = vld [vmem:[%s0 + $0x50] sm:$0xff]
  %v25 = vld [vmem:[%s0 + $0x58] sm:$0xff]
  %v26 = vld [vmem:[%s0 + $0x60] sm:$0xff]
  %v27 = vld [vmem:[%s0 + $0x68] sm:$0xff]
  %v28 = vld [vmem:[%s0 + $0x70] sm:$0xff]
  %v29 = vld [vmem:[%s0 + $0x78] sm:$0xff]
  %v30 = vld [vmem:[%s1] sm:$0x1]
  %v31 = vld [vmem:[%s2] sm:$0x1]
  %vm32 = vcmask 261120
  %v33 = vsel %vm32, %v14, 0.0
  %34 = vadd.xlane.f32.xlu0 %v33
  %v35 = vpop.xlane.xlu0 %34
  %v36 = vsel %vm32, %v15, 0.0
  %37 = vadd.xlane.f32.xlu0 %v36
  %v38 = vpop.xlane.xlu0 %37
  %v39 = vsel %vm32, %v16, 0.0
  %40 = vadd.xlane.f32.xlu0 %v39
  %v41 = vpop.xlane.xlu0 %40
  %v42 = vsel %vm32, %v17, 0.0
  %43 = vadd.xlane.f32.xlu0 %v42
  %v44 = vpop.xlane.xlu0 %43
  %v45 = vsel %vm32, %v18, 0.0
  %46 = vadd.xlane.f32.xlu0 %v45
  %v47 = vpop.xlane.xlu0 %46
  %v48 = vsel %vm32, %v19, 0.0
  %49 = vadd.xlane.f32.xlu0 %v48
  %v50 = vpop.xlane.xlu0 %49
  %v51 = vsel %vm32, %v20, 0.0
  %52 = vadd.xlane.f32.xlu0 %v51
  %v53 = vpop.xlane.xlu0 %52
  %v54 = vsel %vm32, %v21, 0.0
  %55 = vadd.xlane.f32.xlu0 %v54
  %v56 = vpop.xlane.xlu0 %55
  %v57 = vsel %vm32, %v22, 0.0
  %58 = vadd.xlane.f32.xlu0 %v57
  %v59 = vpop.xlane.xlu0 %58
  %v60 = vsel %vm32, %v23, 0.0
  %61 = vadd.xlane.f32.xlu0 %v60
  %v62 = vpop.xlane.xlu0 %61
  %v63 = vsel %vm32, %v24, 0.0
  %64 = vadd.xlane.f32.xlu0 %v63
  %v65 = vpop.xlane.xlu0 %64
  %v66 = vsel %vm32, %v25, 0.0
  %67 = vadd.xlane.f32.xlu0 %v66
  %v68 = vpop.xlane.xlu0 %67
  %v69 = vsel %vm32, %v26, 0.0
  %70 = vadd.xlane.f32.xlu0 %v69
  %v71 = vpop.xlane.xlu0 %70
  %v72 = vsel %vm32, %v27, 0.0
  %73 = vadd.xlane.f32.xlu0 %v72
  %v74 = vpop.xlane.xlu0 %73
  %v75 = vsel %vm32, %v28, 0.0
  %76 = vadd.xlane.f32.xlu0 %v75
  %v77 = vpop.xlane.xlu0 %76
  %v78 = vsel %vm32, %v29, 0.0
  %79 = vadd.xlane.f32.xlu0 %v78
  %v80 = vpop.xlane.xlu0 %79
  %v81 = vrcp.pop 32.0
  %v82 = vmul.f32 %v35, %v81
  %v83 = vmul.f32 %v38, %v81
  %v84 = vmul.f32 %v41, %v81
  %v85 = vmul.f32 %v44, %v81
  %v86 = vmul.f32 %v47, %v81
  %v87 = vmul.f32 %v50, %v81
  %v88 = vmul.f32 %v53, %v81
  %v89 = vmul.f32 %v56, %v81
  %v90 = vmul.f32 %v59, %v81
  %v91 = vmul.f32 %v62, %v81
  %v92 = vmul.f32 %v65, %v81
  %v93 = vmul.f32 %v68, %v81
  %v94 = vmul.f32 %v71, %v81
  %v95 = vmul.f32 %v74, %v81
  %v96 = vmul.f32 %v77, %v81
  %v97 = vmul.f32 %v80, %v81
  %v98 = vsub.f32 %v14, %v82
  %v99 = vsub.f32 %v15, %v83
  %v100 = vsub.f32 %v16, %v84
  %v101 = vsub.f32 %v17, %v85
  %v102 = vsub.f32 %v18, %v86
  %v103 = vsub.f32 %v19, %v87
  %v104 = vsub.f32 %v20, %v88
  %v105 = vsub.f32 %v21, %v89
  %v106 = vsub.f32 %v22, %v90
  %v107 = vsub.f32 %v23, %v91
  %v108 = vsub.f32 %v24, %v92
  %v109 = vsub.f32 %v25, %v93
  %v110 = vsub.f32 %v26, %v94
  %v111 = vsub.f32 %v27, %v95
  %v112 = vsub.f32 %v28, %v96
  %v113 = vsub.f32 %v29, %v97
  %v114 = vmul.f32 %v98, %v98
  %v115 = vmul.f32 %v99, %v99
  %v116 = vmul.f32 %v100, %v100
  %v117 = vmul.f32 %v101, %v101
  %v118 = vmul.f32 %v102, %v102
  %v119 = vmul.f32 %v103, %v103
  %v120 = vmul.f32 %v104, %v104
  %v121 = vmul.f32 %v105, %v105
  %v122 = vmul.f32 %v106, %v106
  %v123 = vmul.f32 %v107, %v107
  %v124 = vmul.f32 %v108, %v108
  %v125 = vmul.f32 %v109, %v109
  %v126 = vmul.f32 %v110, %v110
  %v127 = vmul.f32 %v111, %v111
  %v128 = vmul.f32 %v112, %v112
  %v129 = vmul.f32 %v113, %v113
  %v130 = vsel %vm32, %v114, 0.0
  %131 = vadd.xlane.f32.xlu0 %v130
  %v132 = vpop.xlane.xlu0 %131
  %v133 = vsel %vm32, %v115, 0.0
  %134 = vadd.xlane.f32.xlu0 %v133
  %v135 = vpop.xlane.xlu0 %134
  %v136 = vsel %vm32, %v116, 0.0
  %137 = vadd.xlane.f32.xlu0 %v136
  %v138 = vpop.xlane.xlu0 %137
  %v139 = vsel %vm32, %v117, 0.0
  %140 = vadd.xlane.f32.xlu0 %v139
  %v141 = vpop.xlane.xlu0 %140
  %v142 = vsel %vm32, %v118, 0.0
  %143 = vadd.xlane.f32.xlu0 %v142
  %v144 = vpop.xlane.xlu0 %143
  %v145 = vsel %vm32, %v119, 0.0
  %146 = vadd.xlane.f32.xlu0 %v145
  %v147 = vpop.xlane.xlu0 %146
  %v148 = vsel %vm32, %v120, 0.0
  %149 = vadd.xlane.f32.xlu0 %v148
  %v150 = vpop.xlane.xlu0 %149
  %v151 = vsel %vm32, %v121, 0.0
  %152 = vadd.xlane.f32.xlu0 %v151
  %v153 = vpop.xlane.xlu0 %152
  %v154 = vsel %vm32, %v122, 0.0
  %155 = vadd.xlane.f32.xlu0 %v154
  %v156 = vpop.xlane.xlu0 %155
  %v157 = vsel %vm32, %v123, 0.0
  %158 = vadd.xlane.f32.xlu0 %v157
  %v159 = vpop.xlane.xlu0 %158
  %v160 = vsel %vm32, %v124, 0.0
  %161 = vadd.xlane.f32.xlu0 %v160
  %v162 = vpop.xlane.xlu0 %161
  %v163 = vsel %vm32, %v125, 0.0
  %164 = vadd.xlane.f32.xlu0 %v163
  %v165 = vpop.xlane.xlu0 %164
  %v166 = vsel %vm32, %v126, 0.0
  %167 = vadd.xlane.f32.xlu0 %v166
  %v168 = vpop.xlane.xlu0 %167
  %v169 = vsel %vm32, %v127, 0.0
  %170 = vadd.xlane.f32.xlu0 %v169
  %v171 = vpop.xlane.xlu0 %170
  %v172 = vsel %vm32, %v128, 0.0
  %173 = vadd.xlane.f32.xlu0 %v172
  %v174 = vpop.xlane.xlu0 %173
  %v175 = vsel %vm32, %v129, 0.0
  %176 = vadd.xlane.f32.xlu0 %v175
  %v177 = vpop.xlane.xlu0 %176
  %v178 = vmul.f32 %v132, %v81
  %v179 = vmul.f32 %v135, %v81
  %v180 = vmul.f32 %v138, %v81
  %v181 = vmul.f32 %v141, %v81
  %v182 = vmul.f32 %v144, %v81
  %v183 = vmul.f32 %v147, %v81
  %v184 = vmul.f32 %v150, %v81
  %v185 = vmul.f32 %v153, %v81
  %v186 = vmul.f32 %v156, %v81
  %v187 = vmul.f32 %v159, %v81
  %v188 = vmul.f32 %v162, %v81
  %v189 = vmul.f32 %v165, %v81
  %v190 = vmul.f32 %v168, %v81
  %v191 = vmul.f32 %v171, %v81
  %v192 = vmul.f32 %v174, %v81
  %v193 = vmul.f32 %v177, %v81
  %v194 = vadd.f32 %v178, 1e-12
  %v195 = vadd.f32 %v179, 1e-12
  %v196 = vadd.f32 %v180, 1e-12
  %v197 = vadd.f32 %v181, 1e-12
  %v198 = vadd.f32 %v182, 1e-12
  %v199 = vadd.f32 %v183, 1e-12
  %v200 = vadd.f32 %v184, 1e-12
  %v201 = vadd.f32 %v185, 1e-12
  %v202 = vadd.f32 %v186, 1e-12
  %v203 = vadd.f32 %v187, 1e-12
  %v204 = vadd.f32 %v188, 1e-12
  %v205 = vadd.f32 %v189, 1e-12
  %v206 = vadd.f32 %v190, 1e-12
  %v207 = vadd.f32 %v191, 1e-12
  %v208 = vadd.f32 %v192, 1e-12
  %v209 = vadd.f32 %v193, 1e-12
  %v210 = vrsqrt.pop %v194
  %v211 = vrsqrt.pop %v195
  %v212 = vrsqrt.pop %v196
  %v213 = vrsqrt.pop %v197
  %v214 = vrsqrt.pop %v198
  %v215 = vrsqrt.pop %v199
  %v216 = vrsqrt.pop %v200
  %v217 = vrsqrt.pop %v201
  %v218 = vrsqrt.pop %v202
  %v219 = vrsqrt.pop %v203
  %v220 = vrsqrt.pop %v204
  %v221 = vrsqrt.pop %v205
  %v222 = vrsqrt.pop %v206
  %v223 = vrsqrt.pop %v207
  %v224 = vrsqrt.pop %v208
  %v225 = vrsqrt.pop %v209
  %v226 = vmul.f32 %v98, %v210
  %v227 = vmul.f32 %v99, %v211
  %v228 = vmul.f32 %v100, %v212
  %v229 = vmul.f32 %v101, %v213
  %v230 = vmul.f32 %v102, %v214
  %v231 = vmul.f32 %v103, %v215
  %v232 = vmul.f32 %v104, %v216
  %v233 = vmul.f32 %v105, %v217
  %v234 = vmul.f32 %v106, %v218
  %v235 = vmul.f32 %v107, %v219
  %v236 = vmul.f32 %v108, %v220
  %v237 = vmul.f32 %v109, %v221
  %v238 = vmul.f32 %v110, %v222
  %v239 = vmul.f32 %v111, %v223
  %v240 = vmul.f32 %v112, %v224
  %v241 = vmul.f32 %v113, %v225
  %v243 = vlaneseq
  %v244 = vshrl.u32 %v243, 7
  %v245 = vsub.s32 0, %v244
  %v246 = vrot.slane %v30, %v245
  %v248 = vmul.f32 %v226, %v246
  %v249 = vmul.f32 %v227, %v246
  %v250 = vmul.f32 %v228, %v246
  %v251 = vmul.f32 %v229, %v246
  %v252 = vmul.f32 %v230, %v246
  %v253 = vmul.f32 %v231, %v246
  %v254 = vmul.f32 %v232, %v246
  %v255 = vmul.f32 %v233, %v246
  %v256 = vmul.f32 %v234, %v246
  %v257 = vmul.f32 %v235, %v246
  %v258 = vmul.f32 %v236, %v246
  %v259 = vmul.f32 %v237, %v246
  %v260 = vmul.f32 %v238, %v246
  %v261 = vmul.f32 %v239, %v246
  %v262 = vmul.f32 %v240, %v246
  %v263 = vmul.f32 %v241, %v246
  %v265 = vlaneseq
  %v266 = vshrl.u32 %v265, 7
  %v267 = vsub.s32 0, %v266
  %v268 = vrot.slane %v31, %v267
  %v270 = vadd.f32 %v248, %v268
  %v271 = vadd.f32 %v249, %v268
  %v272 = vadd.f32 %v250, %v268
  %v273 = vadd.f32 %v251, %v268
  %v274 = vadd.f32 %v252, %v268
  %v275 = vadd.f32 %v253, %v268
  %v276 = vadd.f32 %v254, %v268
  %v277 = vadd.f32 %v255, %v268
  %v278 = vadd.f32 %v256, %v268
  %v279 = vadd.f32 %v257, %v268
  %v280 = vadd.f32 %v258, %v268
  %v281 = vadd.f32 %v259, %v268
  %v282 = vadd.f32 %v260, %v268
  %v283 = vadd.f32 %v261, %v268
  %v284 = vadd.f32 %v262, %v268
  %v285 = vadd.f32 %v263, %v268
  %286 = vst.msk [vmem:[%s3] sm:$0xff] %vm32, %v270
  %287 = vst.msk [vmem:[%s3 + $0x8] sm:$0xff] %vm32, %v271
  %288 = vst.msk [vmem:[%s3 + $0x10] sm:$0xff] %vm32, %v272
  %289 = vst.msk [vmem:[%s3 + $0x18] sm:$0xff] %vm32, %v273
  %290 = vst.msk [vmem:[%s3 + $0x20] sm:$0xff] %vm32, %v274
  %291 = vst.msk [vmem:[%s3 + $0x28] sm:$0xff] %vm32, %v275
  %292 = vst.msk [vmem:[%s3 + $0x30] sm:$0xff] %vm32, %v276
  %293 = vst.msk [vmem:[%s3 + $0x38] sm:$0xff] %vm32, %v277
  %294 = vst.msk [vmem:[%s3 + $0x40] sm:$0xff] %vm32, %v278
  %295 = vst.msk [vmem:[%s3 + $0x48] sm:$0xff] %vm32, %v279
  %296 = vst.msk [vmem:[%s3 + $0x50] sm:$0xff] %vm32, %v280
  %297 = vst.msk [vmem:[%s3 + $0x58] sm:$0xff] %vm32, %v281
  %298 = vst.msk [vmem:[%s3 + $0x60] sm:$0xff] %vm32, %v282
  %299 = vst.msk [vmem:[%s3 + $0x68] sm:$0xff] %vm32, %v283
  %300 = vst.msk [vmem:[%s3 + $0x70] sm:$0xff] %vm32, %v284
  %301 = vst.msk [vmem:[%s3 + $0x78] sm:$0xff] %vm32, %v285
  // Predicated region
  $region14: #{vqa_forward.8} parent=0 // pred_check
    _
  $region15: #{vqa_forward.8} parent=0 // pred_check_branch
    %303 = sbr.rel (0) target = $region17
  $region16: #{vqa_forward.8} parent=0 // pred_region
    _
  $region17: #{vqa_forward.8} parent=0 // pred_fallthru
    _
  // Predicated region
  $region18: #{vqa_forward.8} parent=0 // pred_check
    _
  $region19: #{vqa_forward.8} parent=0 // pred_check_branch
    %305 = sbr.rel (0) target = $region21
  $region20: #{vqa_forward.8} parent=0 // pred_region
    _
  $region21: #{vqa_forward.8} parent=0 // pred_fallthru
    _

// kernel: vqa_forward.11
$region0: #{vqa_forward.11}
  #allocation0 [shape = 'u32[]', space=smem, size = 0x4, offset = 0x4, fixed_abs, tag = 'smem constant byte address 0x4 - core index']
  #allocation1 [shape = 'u32[144,128]{1,0:T(1,128)}', space=vmem, size = 0x12000, scoped, tag = 'internal scratch']
  %s0 = inlined_call_operand.vmem [shape: f32[2,32], index: 0, kind: input, shape index: {}]
  %s1 = inlined_call_operand.vmem [shape: f32[32,32], index: 1, kind: input, shape index: {}]
  %s2 = inlined_call_operand.vmem [shape: f32[1,32], index: 2, kind: input, shape index: {}]
  %s3 = inlined_call_operand.vmem [shape: f32[32,10], index: 3, kind: input, shape index: {}]
  %s4 = inlined_call_operand.vmem [shape: f32[1,10], index: 4, kind: input, shape index: {}]
  %s5 = inlined_call_operand.hbm [shape: f32[2,10], index: 5, kind: output, shape index: {}]
  %s6 = sld [smem:[#allocation0]]
  $region30: #{vqa_forward.11} parent=0
    _
  %s8 = ssub.s32 1, %s6
  %s9 = scalar_select 0, %s8, %s6
  $region1: #{vqa_forward.11} parent=0
    #allocation2 [shape = 'u8[1024]{0}', space=vmem, size = 0x400, scoped, tag = 'output window, operand 0, single buffered']
    #allocation3 [shape = 's32[1]{0}', space=sflag, size = 0x4, scoped, tag = 'scoped memory for vqa_forward.11']
    %10 = vsyncpa [#allocation3], 0
    // Predicated region
    $region2: #{vqa_forward.11} parent=1 // pred_check
      _
    $region3: #{vqa_forward.11} parent=1 // pred_check_branch
      %12 = sbr.rel (0) target = $region5
    $region4: #{vqa_forward.11} parent=1 // pred_region
      _
    $region5: #{vqa_forward.11} parent=1 // pred_fallthru
      _
    // Predicated region
    $region6: #{vqa_forward.11} parent=1 // pred_check
      _
    $region7: #{vqa_forward.11} parent=1 // pred_check_branch
      %14 = sbr.rel (0) target = $region9
    $region8: #{vqa_forward.11} parent=1 // pred_region
      _
    $region9: #{vqa_forward.11} parent=1 // pred_fallthru
      _
    // Predicated region
    $region10: #{vqa_forward.11} parent=1 // pred_check
      _
    $region11: #{vqa_forward.11} parent=1 // pred_check_branch
      %16 = sbr.rel (0) target = $region13
    $region12: #{vqa_forward.11} parent=1 // pred_region
      _
    $region13: #{vqa_forward.11} parent=1 // pred_fallthru
      _
    // Predicated region
    $region14: #{vqa_forward.11} parent=1 // pred_check
      _
    $region15: #{vqa_forward.11} parent=1 // pred_check_branch
      %18 = sbr.rel (0) target = $region17
    $region16: #{vqa_forward.11} parent=1 // pred_region
      _
    $region17: #{vqa_forward.11} parent=1 // pred_fallthru
      _
    // Predicated region
    $region18: #{vqa_forward.11} parent=1 // pred_check
      _
    $region19: #{vqa_forward.11} parent=1 // pred_check_branch
      %20 = sbr.rel (0) target = $region21
    $region20: #{vqa_forward.11} parent=1 // pred_region
      _
    $region21: #{vqa_forward.11} parent=1 // pred_fallthru
      _
    %v21 = vld [vmem:[%s0] sm:$0x3]
    %v22 = vld [vmem:[%s1] sm:$0xff]
    %v23 = vld [vmem:[%s1 + $0x8] sm:$0xff]
    %v24 = vld [vmem:[%s1 + $0x10] sm:$0xff]
    %v25 = vld [vmem:[%s1 + $0x18] sm:$0xff]
    %v26 = vld [vmem:[%s2] sm:$0x1]
    %v28 = vlaneseq
    %v29 = vshrl.u32 %v28, 7
    %v30 = vsub.s32 0, %v29
    %v31 = vrot.slane %v26, %v30
    %vm33 = vcmask 261120
    %v35 = vsel %vm33, %v21, 0
    %37 = vmatprep.subr.mxu0 0.0
    %38 = vmatpush1.msra.mxu0 %v22
    %39 = vmatprep.subr.mxu0 0.0
    %40 = vmatpush1.msra.mxu0 %v23
    %41 = vmatprep.subr.mxu0 0.0
    %42 = vmatpush1.msra.mxu0 %v24
    %43 = vmatprep.subr.mxu0 0.0
    %44 = vmatpush1.msra.mxu0 %v25
    %45 = vmatprep.subr.mxu0 0.0
    %46 = vmatpush1.msra.mxu0 0.0
    %47 = vmatprep.subr.mxu0 0.0
    %48 = vmatpush1.msra.mxu0 0.0
    %49 = vmatprep.subr.mxu0 0.0
    %50 = vmatpush1.msra.mxu0 0.0
    %51 = vmatprep.subr.mxu0 0.0
    %52 = vmatpush1.msra.mxu0 0.0
    %53 = vmatprep.subr.mxu0 0.0
    %54 = vmatpush1.msra.mxu0 0.0
    %55 = vmatprep.subr.mxu0 0.0
    %56 = vmatpush1.msra.mxu0 0.0
    %57 = vmatprep.subr.mxu0 0.0
    %58 = vmatpush1.msra.mxu0 0.0
    %59 = vmatprep.subr.mxu0 0.0
    %60 = vmatpush1.msra.mxu0 0.0
    %61 = vmatprep.subr.mxu0 0.0
    %62 = vmatpush1.msra.mxu0 0.0
    %63 = vmatprep.subr.mxu0 0.0
    %64 = vmatpush1.msra.mxu0 0.0
    %65 = vmatprep.subr.mxu0 0.0
    %66 = vmatpush1.msra.mxu0 0.0
    %67 = vmatprep.subr.mxu0 0.0
    %68 = vmatpush1.msra.mxu0 0.0
    %69 = vmatprep.subr.mxu0 0.0
    %70 = vmatpush1.msra.mxu0 0.0
    %71 = vmatprep.subr.mxu0 0.0
    %72 = vmatpush1.msra.mxu0 0.0
    %73 = vmatprep.subr.mxu0 0.0
    %74 = vmatpush1.msra.mxu0 0.0
    %75 = vmatprep.subr.mxu0 0.0
    %76 = vmatpush1.msra.mxu0 0.0
    %77 = vmatprep.subr.mxu0 0.0
    %78 = vmatpush1.msra.mxu0 0.0
    %79 = vmatprep.subr.mxu0 0.0
    %80 = vmatpush1.msra.mxu0 0.0
    %81 = vmatprep.subr.mxu0 0.0
    %82 = vmatpush1.msra.mxu0 0.0
    %83 = vmatprep.subr.mxu0 0.0
    %84 = vmatpush1.msra.mxu0 0.0
    %85 = vmatprep.subr.mxu0 0.0
    %86 = vmatpush1.msra.mxu0 0.0
    %87 = vmatprep.subr.mxu0 0.0
    %88 = vmatpush1.msra.mxu0 0.0
    %89 = vmatprep.subr.mxu0 0.0
    %90 = vmatpush1.msra.mxu0 0.0
    %91 = vmatprep.subr.mxu0 0.0
    %92 = vmatpush1.msra.mxu0 0.0
    %93 = vmatprep.subr.mxu0 0.0
    %94 = vmatpush1.msra.mxu0 0.0
    %95 = vmatprep.subr.mxu0 0.0
    %96 = vmatpush1.msra.mxu0 0.0
    %97 = vmatprep.subr.mxu0 0.0
    %98 = vmatpush1.msra.mxu0 0.0
    %99 = vmatprep.subr.mxu0 0.0
    %100 = vmatpush1.msra.mxu0 0.0
    %101 = vmatprep.mubr.f32.mxu0 0.0
    %102 = vmatmul.mubr.f32.gmra.mrb[0].mxu0 %v35
    %v103 = vpop.f32.mrb[0].mxu0
    %v104 = vadd.f32 %v31, %v103
    %v105 = vpop.f32.mrb[0].mxu0
    %106 = vdwg.mxu0
    %v107 = vmax.f32 %v104, 0.0
    %v108 = vld [vmem:[%s3] sm:$0xff]
    %v109 = vld [vmem:[%s3 + $0x8] sm:$0xff]
    %v110 = vld [vmem:[%s3 + $0x10] sm:$0xff]
    %v111 = vld [vmem:[%s3 + $0x18] sm:$0xff]
    %v112 = vld [vmem:[%s4] sm:$0x1]
    %v114 = vlaneseq
    %v115 = vshrl.u32 %v114, 7
    %v116 = vsub.s32 0, %v115
    %v117 = vrot.slane %v112, %v116
    %v120 = vsel %vm33, %v107, 0
    %122 = vmatprep.subr.mxu0 0.0
    %123 = vmatpush1.msra.mxu0 %v108
    %124 = vmatprep.subr.mxu0 0.0
    %125 = vmatpush1.msra.mxu0 %v109
    %126 = vmatprep.subr.mxu0 0.0
    %127 = vmatpush1.msra.mxu0 %v110
    %128 = vmatprep.subr.mxu0 0.0
    %129 = vmatpush1.msra.mxu0 %v111
    %130 = vmatprep.subr.mxu0 0.0
    %131 = vmatpush1.msra.mxu0 0.0
    %132 = vmatprep.subr.mxu0 0.0
    %133 = vmatpush1.msra.mxu0 0.0
    %134 = vmatprep.subr.mxu0 0.0
    %135 = vmatpush1.msra.mxu0 0.0
    %136 = vmatprep.subr.mxu0 0.0
    %137 = vmatpush1.msra.mxu0 0.0
    %138 = vmatprep.subr.mxu0 0.0
    %139 = vmatpush1.msra.mxu0 0.0
    %140 = vmatprep.subr.mxu0 0.0
    %141 = vmatpush1.msra.mxu0 0.0
    %142 = vmatprep.subr.mxu0 0.0
    %143 = vmatpush1.msra.mxu0 0.0
    %144 = vmatprep.subr.mxu0 0.0
    %145 = vmatpush1.msra.mxu0 0.0
    %146 = vmatprep.subr.mxu0 0.0
    %147 = vmatpush1.msra.mxu0 0.0
    %148 = vmatprep.subr.mxu0 0.0
    %149 = vmatpush1.msra.mxu0 0.0
    %150 = vmatprep.subr.mxu0 0.0
    %151 = vmatpush1.msra.mxu0 0.0
    %152 = vmatprep.subr.mxu0 0.0
    %153 = vmatpush1.msra.mxu0 0.0
    %154 = vmatprep.subr.mxu0 0.0
    %155 = vmatpush1.msra.mxu0 0.0
    %156 = vmatprep.subr.mxu0 0.0
    %157 = vmatpush1.msra.mxu0 0.0
    %158 = vmatprep.subr.mxu0 0.0
    %159 = vmatpush1.msra.mxu0 0.0
    %160 = vmatprep.subr.mxu0 0.0
    %161 = vmatpush1.msra.mxu0 0.0
    %162 = vmatprep.subr.mxu0 0.0
    %163 = vmatpush1.msra.mxu0 0.0
    %164 = vmatprep.subr.mxu0 0.0
    %165 = vmatpush1.msra.mxu0 0.0
    %166 = vmatprep.subr.mxu0 0.0
    %167 = vmatpush1.msra.mxu0 0.0
    %168 = vmatprep.subr.mxu0 0.0
    %169 = vmatpush1.msra.mxu0 0.0
    %170 = vmatprep.subr.mxu0 0.0
    %171 = vmatpush1.msra.mxu0 0.0
    %172 = vmatprep.subr.mxu0 0.0
    %173 = vmatpush1.msra.mxu0 0.0
    %174 = vmatprep.subr.mxu0 0.0
    %175 = vmatpush1.msra.mxu0 0.0
    %176 = vmatprep.subr.mxu0 0.0
    %177 = vmatpush1.msra.mxu0 0.0
    %178 = vmatprep.subr.mxu0 0.0
    %179 = vmatpush1.msra.mxu0 0.0
    %180 = vmatprep.subr.mxu0 0.0
    %181 = vmatpush1.msra.mxu0 0.0
    %182 = vmatprep.subr.mxu0 0.0
    %183 = vmatpush1.msra.mxu0 0.0
    %184 = vmatprep.subr.mxu0 0.0
    %185 = vmatpush1.msra.mxu0 0.0
    %186 = vmatprep.mubr.f32.mxu0 0.0
    %187 = vmatmul.mubr.f32.gmra.mrb[0].mxu0 %v120
    %v188 = vpop.f32.mrb[0].mxu0
    %v189 = vadd.f32 %v117, %v188
    %v190 = vpop.f32.mrb[0].mxu0
    %191 = vdwg.mxu0
    %vm192 = vcmask 74752
    %193 = vst.msk [vmem:[#allocation2] sm:$0x3] %vm192, %v189
    // Predicated region
    $region22: #{vqa_forward.11} parent=1 // pred_check
      _
    $region23: #{vqa_forward.11} parent=1 // pred_check_branch
      %195 = sbr.rel (0) target = $region25
    $region24: #{vqa_forward.11} parent=1 // pred_region
      %s197 = ssub.s32 32, 32
      %198 = vsyncadd [#allocation3], %s197
      %s200 = sshll.u32 [#allocation2], 4
      %s201 = int_to_ptr.vmem [resolvable:$true] %s200
      %203 = dma.vmem_to_hbm [thread:$0]  %s201, 32, %s5, [#allocation3]
    $region25: #{vqa_forward.11} parent=1 // pred_fallthru
      _
    // Predicated region
    $region26: #{vqa_forward.11} parent=1 // pred_check
      _
    $region27: #{vqa_forward.11} parent=1 // pred_check_branch
      %205 = sbr.rel (0) target = $region29
    $region28: #{vqa_forward.11} parent=1 // pred_region
      %206 = dma.done [#allocation3], 32
    $region29: #{vqa_forward.11} parent=1 // pred_fallthru
      _
    %207 = vsyncpa [#allocation3], 1

// kernel: vqa_forward.9
$region0: #{vqa_forward.9}
  #allocation0 [shape = 'u32[]', space=smem, size = 0x4, offset = 0x4, fixed_abs, tag = 'smem constant byte address 0x4 - core index']
  #allocation1 [shape = 'u32[144,128]{1,0:T(1,128)}', space=vmem, size = 0x12000, scoped, tag = 'internal scratch']
  %s0 = inlined_call_operand.vmem [shape: f32[2,64,32], index: 0, kind: input, shape index: {}]
  %s1 = inlined_call_operand.vmem [shape: f32[2,64,64], index: 1, kind: input, shape index: {}]
  %s2 = inlined_call_operand.vmem [shape: f32[32,96], index: 2, kind: input, shape index: {}]
  %s3 = inlined_call_operand.vmem [shape: f32[1,96], index: 3, kind: input, shape index: {}]
  %s4 = inlined_call_operand.vmem [shape: f32[32,32], index: 4, kind: input, shape index: {}]
  %s5 = inlined_call_operand.vmem [shape: f32[1,32], index: 5, kind: input, shape index: {}]
  %s6 = inlined_call_operand.vmem [shape: f32[1,32], index: 6, kind: input, shape index: {}]
  %s7 = inlined_call_operand.vmem [shape: f32[1,32], index: 7, kind: input, shape index: {}]
  %s8 = inlined_call_operand.vmem [shape: f32[32,64], index: 8, kind: input, shape index: {}]
  %s9 = inlined_call_operand.vmem [shape: f32[1,64], index: 9, kind: input, shape index: {}]
  %s10 = inlined_call_operand.vmem [shape: f32[64,32], index: 10, kind: input, shape index: {}]
  %s11 = inlined_call_operand.vmem [shape: f32[1,32], index: 11, kind: input, shape index: {}]
  %s12 = inlined_call_operand.vmem [shape: f32[1,32], index: 12, kind: input, shape index: {}]
  %s13 = inlined_call_operand.vmem [shape: f32[1,32], index: 13, kind: input, shape index: {}]
  %s14 = inlined_call_operand.vmem [shape: f32[2,4,64,64], index: 14, kind: output, shape index: {0}]
  %s15 = inlined_call_operand.vmem [shape: f32[2,64,32], index: 15, kind: output, shape index: {1}]
  %16 = xla_tuple %s14, %s15
  %s17 = sld [smem:[#allocation0]]
  $region97: #{vqa_forward.9} parent=0
    _
  %s19 = ssub.s32 1, %s17
  %s20 = scalar_select 0, %s19, %s17
  loop: start=0, step=1, limit=4
  $region2: #{vqa_forward.9} parent=0 // loop_pre_header
    _
  $region3: #{vqa_forward.9} parent=0 // loop_header
    %s22 = sphi 0, %s26
    %p23 = scmp.ge.s32.totalorder %s22, 4
    %s32 = sphi 0, %s34
    %s35 = sphi 0, %s32
    %s36 = sphi 0, %s35
    %s52 = sphi 0, %s36
    %s58 = sphi 0, %s60
    %s61 = sphi 0, %s58
    %s62 = sphi 0, %s61
    %s78 = sphi 0, %s62
    %s82 = sphi 0, %s82
    %s84 = sphi 0, %s82
    %s85 = sphi 0, %s84
    %s99 = sphi 0, %s85
    %s103 = sphi 0, %s103
    %s105 = sphi 0, %s103
    %s106 = sphi 0, %s105
    %s120 = sphi 0, %s106
    %s124 = sphi 0, %s124
    %s126 = sphi 0, %s124
    %s127 = sphi 0, %s126
    %s141 = sphi 0, %s127
    %s145 = sphi 0, %s145
    %s147 = sphi 0, %s145
    %s148 = sphi 0, %s147
    %s162 = sphi 0, %s148
    %s166 = sphi 0, %s166
    %s168 = sphi 0, %s166
    %s169 = sphi 0, %s168
    %s183 = sphi 0, %s169
    %s187 = sphi 0, %s187
    %s189 = sphi 0, %s187
    %s190 = sphi 0, %s189
    %s204 = sphi 0, %s190
    %s208 = sphi 0, %s208
    %s210 = sphi 0, %s208
    %s211 = sphi 0, %s210
    %s225 = sphi 0, %s211
    %s229 = sphi 0, %s229
    %s231 = sphi 0, %s229
    %s232 = sphi 0, %s231
    %s246 = sphi 0, %s232
    %s250 = sphi 0, %s250
    %s252 = sphi 0, %s250
    %s253 = sphi 0, %s252
    %s267 = sphi 0, %s253
    %s271 = sphi 0, %s271
    %s273 = sphi 0, %s271
    %s274 = sphi 0, %s273
    %s288 = sphi 0, %s274
    %s292 = sphi 0, %s292
    %s294 = sphi 0, %s292
    %s295 = sphi 0, %s294
    %s309 = sphi 0, %s295
    %s313 = sphi 0, %s313
    %s315 = sphi 0, %s313
    %s316 = sphi 0, %s315
    %s330 = sphi 0, %s316
    %s336 = sphi 0, %s338
    %s339 = sphi 0, %s336
    %s340 = sphi 0, %s339
    %s356 = sphi 0, %s340
    %s362 = sphi 0, %s364
    %s365 = sphi 0, %s362
    %s366 = sphi 0, %s365
    %s382 = sphi 0, %s366
  $region4: #{vqa_forward.9} parent=0 // loop_header_branch
    %25 = sbr.rel (%p23) target = $region8
  $region5: #{vqa_forward.9} parent=0 // loop_body
    %s27 = ssub.s32 %s22, 1
    %s28 = ssub.s32 %s22, 2
    %s29 = sadd.s32 %s22, 1
    %s30 = ssub.s32 %s22, %s29
    %p31 = scmp.eq.s32.totalorder %s30, 0
    %s33 = sadd.s32 %s32, 1
    %s34 = scalar_select %p31, %s32, %s33
    %p37 = pneg %p31
    %p38 = scmp.eq.s32.totalorder %s22, 1
    %p39 = por %p37, %p38
    %p40 = scmp.ne.s32.totalorder %s32, %s35
    %p41 = scmp.eq.s32.totalorder %s22, 0
    %p42 = por %p40, %p41
    %p43 = scmp.ne.s32.totalorder %s32, %s35
    %p44 = scmp.eq.s32.totalorder %s27, 1
    %p45 = por %p43, %p44
    %p46 = scmp.ne.s32.totalorder %s35, %s36
    %p47 = scmp.eq.s32.totalorder %s27, 0
    %p48 = por %p46, %p47
    %p49 = scmp.ne.s32.totalorder %s35, %s36
    %p50 = scmp.eq.s32.totalorder %s28, 1
    %p51 = por %p49, %p50
    %p53 = scmp.ne.s32.totalorder %s36, %s52
    %p54 = scmp.eq.s32.totalorder %s28, 0
    %p55 = por %p53, %p54
    %s56 = ssub.s32 %s22, %s29
    %p57 = scmp.eq.s32.totalorder %s56, 0
    %s59 = sadd.s32 %s58, 1
    %s60 = scalar_select %p57, %s58, %s59
    %p63 = pneg %p57
    %p64 = scmp.eq.s32.totalorder %s22, 1
    %p65 = por %p63, %p64
    %p66 = scmp.ne.s32.totalorder %s58, %s61
    %p67 = scmp.eq.s32.totalorder %s22, 0
    %p68 = por %p66, %p67
    %p69 = scmp.ne.s32.totalorder %s58, %s61
    %p70 = scmp.eq.s32.totalorder %s27, 1
    %p71 = por %p69, %p70
    %p72 = scmp.ne.s32.totalorder %s61, %s62
    %p73 = scmp.eq.s32.totalorder %s27, 0
    %p74 = por %p72, %p73
    %p75 = scmp.ne.s32.totalorder %s61, %s62
    %p76 = scmp.eq.s32.totalorder %s28, 1
    %p77 = por %p75, %p76
    %p79 = scmp.ne.s32.totalorder %s62, %s78
    %p80 = scmp.eq.s32.totalorder %s28, 0
    %p81 = por %p79, %p80
    %s83 = sadd.s32 %s82, 1
    %p86 = scmp.eq.s32.totalorder %s22, 1
    %p87 = scmp.ne.s32.totalorder %s82, %s84
    %p88 = scmp.eq.s32.totalorder %s22, 0
    %p89 = por %p87, %p88
    %p90 = scmp.ne.s32.totalorder %s82, %s84
    %p91 = scmp.eq.s32.totalorder %s27, 1
    %p92 = por %p90, %p91
    %p93 = scmp.ne.s32.totalorder %s84, %s85
    %p94 = scmp.eq.s32.totalorder %s27, 0
    %p95 = por %p93, %p94
    %p96 = scmp.ne.s32.totalorder %s84, %s85
    %p97 = scmp.eq.s32.totalorder %s28, 1
    %p98 = por %p96, %p97
    %p100 = scmp.ne.s32.totalorder %s85, %s99
    %p101 = scmp.eq.s32.totalorder %s28, 0
    %p102 = por %p100, %p101
    %s104 = sadd.s32 %s103, 1
    %p107 = scmp.eq.s32.totalorder %s22, 1
    %p108 = scmp.ne.s32.totalorder %s103, %s105
    %p109 = scmp.eq.s32.totalorder %s22, 0
    %p110 = por %p108, %p109
    %p111 = scmp.ne.s32.totalorder %s103, %s105
    %p112 = scmp.eq.s32.totalorder %s27, 1
    %p113 = por %p111, %p112
    %p114 = scmp.ne.s32.totalorder %s105, %s106
    %p115 = scmp.eq.s32.totalorder %s27, 0
    %p116 = por %p114, %p115
    %p117 = scmp.ne.s32.totalorder %s105, %s106
    %p118 = scmp.eq.s32.totalorder %s28, 1
    %p119 = por %p117, %p118
    %p121 = scmp.ne.s32.totalorder %s106, %s120
    %p122 = scmp.eq.s32.totalorder %s28, 0
    %p123 = por %p121, %p122
    %s125 = sadd.s32 %s124, 1
    %p128 = scmp.eq.s32.totalorder %s22, 1
    %p129 = scmp.ne.s32.totalorder %s124, %s126
    %p130 = scmp.eq.s32.totalorder %s22, 0
    %p131 = por %p129, %p130
    %p132 = scmp.ne.s32.totalorder %s124, %s126
    %p133 = scmp.eq.s32.totalorder %s27, 1
    %p134 = por %p132, %p133
    %p135 = scmp.ne.s32.totalorder %s126, %s127
    %p136 = scmp.eq.s32.totalorder %s27, 0
    %p137 = por %p135, %p136
    %p138 = scmp.ne.s32.totalorder %s126, %s127
    %p139 = scmp.eq.s32.totalorder %s28, 1
    %p140 = por %p138, %p139
    %p142 = scmp.ne.s32.totalorder %s127, %s141
    %p143 = scmp.eq.s32.totalorder %s28, 0
    %p144 = por %p142, %p143
    %s146 = sadd.s32 %s145, 1
    %p149 = scmp.eq.s32.totalorder %s22, 1
    %p150 = scmp.ne.s32.totalorder %s145, %s147
    %p151 = scmp.eq.s32.totalorder %s22, 0
    %p152 = por %p150, %p151
    %p153 = scmp.ne.s32.totalorder %s145, %s147
    %p154 = scmp.eq.s32.totalorder %s27, 1
    %p155 = por %p153, %p154
    %p156 = scmp.ne.s32.totalorder %s147, %s148
    %p157 = scmp.eq.s32.totalorder %s27, 0
    %p158 = por %p156, %p157
    %p159 = scmp.ne.s32.totalorder %s147, %s148
    %p160 = scmp.eq.s32.totalorder %s28, 1
    %p161 = por %p159, %p160
    %p163 = scmp.ne.s32.totalorder %s148, %s162
    %p164 = scmp.eq.s32.totalorder %s28, 0
    %p165 = por %p163, %p164
    %s167 = sadd.s32 %s166, 1
    %p170 = scmp.eq.s32.totalorder %s22, 1
    %p171 = scmp.ne.s32.totalorder %s166, %s168
    %p172 = scmp.eq.s32.totalorder %s22, 0
    %p173 = por %p171, %p172
    %p174 = scmp.ne.s32.totalorder %s166, %s168
    %p175 = scmp.eq.s32.totalorder %s27, 1
    %p176 = por %p174, %p175
    %p177 = scmp.ne.s32.totalorder %s168, %s169
    %p178 = scmp.eq.s32.totalorder %s27, 0
    %p179 = por %p177, %p178
    %p180 = scmp.ne.s32.totalorder %s168, %s169
    %p181 = scmp.eq.s32.totalorder %s28, 1
    %p182 = por %p180, %p181
    %p184 = scmp.ne.s32.totalorder %s169, %s183
    %p185 = scmp.eq.s32.totalorder %s28, 0
    %p186 = por %p184, %p185
    %s188 = sadd.s32 %s187, 1
    %p191 = scmp.eq.s32.totalorder %s22, 1
    %p192 = scmp.ne.s32.totalorder %s187, %s189
    %p193 = scmp.eq.s32.totalorder %s22, 0
    %p194 = por %p192, %p193
    %p195 = scmp.ne.s32.totalorder %s187, %s189
    %p196 = scmp.eq.s32.totalorder %s27, 1
    %p197 = por %p195, %p196
    %p198 = scmp.ne.s32.totalorder %s189, %s190
    %p199 = scmp.eq.s32.totalorder %s27, 0
    %p200 = por %p198, %p199
    %p201 = scmp.ne.s32.totalorder %s189, %s190
    %p202 = scmp.eq.s32.totalorder %s28, 1
    %p203 = por %p201, %p202
    %p205 = scmp.ne.s32.totalorder %s190, %s204
    %p206 = scmp.eq.s32.totalorder %s28, 0
    %p207 = por %p205, %p206
    %s209 = sadd.s32 %s208, 1
    %p212 = scmp.eq.s32.totalorder %s22, 1
    %p213 = scmp.ne.s32.totalorder %s208, %s210
    %p214 = scmp.eq.s32.totalorder %s22, 0
    %p215 = por %p213, %p214
    %p216 = scmp.ne.s32.totalorder %s208, %s210
    %p217 = scmp.eq.s32.totalorder %s27, 1
    %p218 = por %p216, %p217
    %p219 = scmp.ne.s32.totalorder %s210, %s211
    %p220 = scmp.eq.s32.totalorder %s27, 0
    %p221 = por %p219, %p220
    %p222 = scmp.ne.s32.totalorder %s210, %s211
    %p223 = scmp.eq.s32.totalorder %s28, 1
    %p224 = por %p222, %p223
    %p226 = scmp.ne.s32.totalorder %s211, %s225
    %p227 = scmp.eq.s32.totalorder %s28, 0
    %p228 = por %p226, %p227
    %s230 = sadd.s32 %s229, 1
    %p233 = scmp.eq.s32.totalorder %s22, 1
    %p234 = scmp.ne.s32.totalorder %s229, %s231
    %p235 = scmp.eq.s32.totalorder %s22, 0
    %p236 = por %p234, %p235
    %p237 = scmp.ne.s32.totalorder %s229, %s231
    %p238 = scmp.eq.s32.totalorder %s27, 1
    %p239 = por %p237, %p238
    %p240 = scmp.ne.s32.totalorder %s231, %s232
    %p241 = scmp.eq.s32.totalorder %s27, 0
    %p242 = por %p240, %p241
    %p243 = scmp.ne.s32.totalorder %s231, %s232
    %p244 = scmp.eq.s32.totalorder %s28, 1
    %p245 = por %p243, %p244
    %p247 = scmp.ne.s32.totalorder %s232, %s246
    %p248 = scmp.eq.s32.totalorder %s28, 0
    %p249 = por %p247, %p248
    %s251 = sadd.s32 %s250, 1
    %p254 = scmp.eq.s32.totalorder %s22, 1
    %p255 = scmp.ne.s32.totalorder %s250, %s252
    %p256 = scmp.eq.s32.totalorder %s22, 0
    %p257 = por %p255, %p256
    %p258 = scmp.ne.s32.totalorder %s250, %s252
    %p259 = scmp.eq.s32.totalorder %s27, 1
    %p260 = por %p258, %p259
    %p261 = scmp.ne.s32.totalorder %s252, %s253
    %p262 = scmp.eq.s32.totalorder %s27, 0
    %p263 = por %p261, %p262
    %p264 = scmp.ne.s32.totalorder %s252, %s253
    %p265 = scmp.eq.s32.totalorder %s28, 1
    %p266 = por %p264, %p265
    %p268 = scmp.ne.s32.totalorder %s253, %s267
    %p269 = scmp.eq.s32.totalorder %s28, 0
    %p270 = por %p268, %p269
    %s272 = sadd.s32 %s271, 1
    %p275 = scmp.eq.s32.totalorder %s22, 1
    %p276 = scmp.ne.s32.totalorder %s271, %s273
    %p277 = scmp.eq.s32.totalorder %s22, 0
    %p278 = por %p276, %p277
    %p279 = scmp.ne.s32.totalorder %s271, %s273
    %p280 = scmp.eq.s32.totalorder %s27, 1
    %p281 = por %p279, %p280
    %p282 = scmp.ne.s32.totalorder %s273, %s274
    %p283 = scmp.eq.s32.totalorder %s27, 0
    %p284 = por %p282, %p283
    %p285 = scmp.ne.s32.totalorder %s273, %s274
    %p286 = scmp.eq.s32.totalorder %s28, 1
    %p287 = por %p285, %p286
    %p289 = scmp.ne.s32.totalorder %s274, %s288
    %p290 = scmp.eq.s32.totalorder %s28, 0
    %p291 = por %p289, %p290
    %s293 = sadd.s32 %s292, 1
    %p296 = scmp.eq.s32.totalorder %s22, 1
    %p297 = scmp.ne.s32.totalorder %s292, %s294
    %p298 = scmp.eq.s32.totalorder %s22, 0
    %p299 = por %p297, %p298
    %p300 = scmp.ne.s32.totalorder %s292, %s294
    %p301 = scmp.eq.s32.totalorder %s27, 1
    %p302 = por %p300, %p301
    %p303 = scmp.ne.s32.totalorder %s294, %s295
    %p304 = scmp.eq.s32.totalorder %s27, 0
    %p305 = por %p303, %p304
    %p306 = scmp.ne.s32.totalorder %s294, %s295
    %p307 = scmp.eq.s32.totalorder %s28, 1
    %p308 = por %p306, %p307
    %p310 = scmp.ne.s32.totalorder %s295, %s309
    %p311 = scmp.eq.s32.totalorder %s28, 0
    %p312 = por %p310, %p311
    %s314 = sadd.s32 %s313, 1
    %p317 = scmp.eq.s32.totalorder %s22, 1
    %p318 = scmp.ne.s32.totalorder %s313, %s315
    %p319 = scmp.eq.s32.totalorder %s22, 0
    %p320 = por %p318, %p319
    %p321 = scmp.ne.s32.totalorder %s313, %s315
    %p322 = scmp.eq.s32.totalorder %s27, 1
    %p323 = por %p321, %p322
    %p324 = scmp.ne.s32.totalorder %s315, %s316
    %p325 = scmp.eq.s32.totalorder %s27, 0
    %p326 = por %p324, %p325
    %p327 = scmp.ne.s32.totalorder %s315, %s316
    %p328 = scmp.eq.s32.totalorder %s28, 1
    %p329 = por %p327, %p328
    %p331 = scmp.ne.s32.totalorder %s316, %s330
    %p332 = scmp.eq.s32.totalorder %s28, 0
    %p333 = por %p331, %p332
    %s334 = ssub.s32 %s22, %s29
    %p335 = scmp.eq.s32.totalorder %s334, 0
    %s337 = sadd.s32 %s336, 1
    %s338 = scalar_select %p335, %s336, %s337
    %p341 = pneg %p335
    %p342 = scmp.eq.s32.totalorder %s22, 1
    %p343 = por %p341, %p342
    %p344 = scmp.ne.s32.totalorder %s336, %s339
    %p345 = scmp.eq.s32.totalorder %s22, 0
    %p346 = por %p344, %p345
    %p347 = scmp.ne.s32.totalorder %s336, %s339
    %p348 = scmp.eq.s32.totalorder %s27, 1
    %p349 = por %p347, %p348
    %p350 = scmp.ne.s32.totalorder %s339, %s340
    %p351 = scmp.eq.s32.totalorder %s27, 0
    %p352 = por %p350, %p351
    %p353 = scmp.ne.s32.totalorder %s339, %s340
    %p354 = scmp.eq.s32.totalorder %s28, 1
    %p355 = por %p353, %p354
    %p357 = scmp.ne.s32.totalorder %s340, %s356
    %p358 = scmp.eq.s32.totalorder %s28, 0
    %p359 = por %p357, %p358
    %s360 = ssub.s32 %s22, %s29
    %p361 = scmp.eq.s32.totalorder %s360, 0
    %s363 = sadd.s32 %s362, 1
    %s364 = scalar_select %p361, %s362, %s363
    %p367 = pneg %p361
    %p368 = scmp.eq.s32.totalorder %s22, 1
    %p369 = por %p367, %p368
    %p370 = scmp.ne.s32.totalorder %s362, %s365
    %p371 = scmp.eq.s32.totalorder %s22, 0
    %p372 = por %p370, %p371
    %p373 = scmp.ne.s32.totalorder %s362, %s365
    %p374 = scmp.eq.s32.totalorder %s27, 1
    %p375 = por %p373, %p374
    %p376 = scmp.ne.s32.totalorder %s365, %s366
    %p377 = scmp.eq.s32.totalorder %s27, 0
    %p378 = por %p376, %p377
    %p379 = scmp.ne.s32.totalorder %s365, %s366
    %p380 = scmp.eq.s32.totalorder %s28, 1
    %p381 = por %p379, %p380
    %p383 = scmp.ne.s32.totalorder %s366, %s382
    %p384 = scmp.eq.s32.totalorder %s28, 0
    %p385 = por %p383, %p384
    %p386 = scmp.le.s32.totalorder 1, %s22
    %p387 = scmp.lt.s32.totalorder %s22, 3
    %p388 = pnand %p386, %p387
    %p389 = pneg %p388
    // Predicated region
    $region9: #{vqa_forward.9} parent=5 // pred_check
      _
    $region10: #{vqa_forward.9} parent=5 // pred_check_branch
      %391 = sbr.rel (%p388) target = $region12
    $region11: #{vqa_forward.9} parent=5 // pred_region
      %s392 = ssub.s32 %s22, 1
      // Predicated region
      $region13: #{vqa_forward.9} parent=11 // pred_check
        %p393 = pneg %p95
      $region14: #{vqa_forward.9} parent=11 // pred_check_branch
        %395 = sbr.rel (%p393) target = $region16
      $region15: #{vqa_forward.9} parent=11 // pred_region
        _
      $region16: #{vqa_forward.9} parent=11 // pred_fallthru
        _
      // Predicated region
      $region17: #{vqa_forward.9} parent=11 // pred_check
        %p396 = pneg %p116
      $region18: #{vqa_forward.9} parent=11 // pred_check_branch
        %398 = sbr.rel (%p396) target = $region20
      $region19: #{vqa_forward.9} parent=11 // pred_region
        _
      $region20: #{vqa_forward.9} parent=11 // pred_fallthru
        _
      // Predicated region
      $region21: #{vqa_forward.9} parent=11 // pred_check
        %p399 = pneg %p137
      $region22: #{vqa_forward.9} parent=11 // pred_check_branch
        %401 = sbr.rel (%p399) target = $region24
      $region23: #{vqa_forward.9} parent=11 // pred_region
        _
      $region24: #{vqa_forward.9} parent=11 // pred_fallthru
        _
      // Predicated region
      $region25: #{vqa_forward.9} parent=11 // pred_check
        %p402 = pneg %p158
      $region26: #{vqa_forward.9} parent=11 // pred_check_branch
        %404 = sbr.rel (%p402) target = $region28
      $region27: #{vqa_forward.9} parent=11 // pred_region
        _
      $region28: #{vqa_forward.9} parent=11 // pred_fallthru
        _
      // Predicated region
      $region29: #{vqa_forward.9} parent=11 // pred_check
        %p405 = pneg %p179
      $region30: #{vqa_forward.9} parent=11 // pred_check_branch
        %407 = sbr.rel (%p405) target = $region32
      $region31: #{vqa_forward.9} parent=11 // pred_region
        _
      $region32: #{vqa_forward.9} parent=11 // pred_fallthru
        _
      // Predicated region
      $region33: #{vqa_forward.9} parent=11 // pred_check
        %p408 = pneg %p200
      $region34: #{vqa_forward.9} parent=11 // pred_check_branch
        %410 = sbr.rel (%p408) target = $region36
      $region35: #{vqa_forward.9} parent=11 // pred_region
        _
      $region36: #{vqa_forward.9} parent=11 // pred_fallthru
        _
      // Predicated region
      $region37: #{vqa_forward.9} parent=11 // pred_check
        %p411 = pneg %p221
      $region38: #{vqa_forward.9} parent=11 // pred_check_branch
        %413 = sbr.rel (%p411) target = $region40
      $region39: #{vqa_forward.9} parent=11 // pred_region
        _
      $region40: #{vqa_forward.9} parent=11 // pred_fallthru
        _
      // Predicated region
      $region41: #{vqa_forward.9} parent=11 // pred_check
        %p414 = pneg %p242
      $region42: #{vqa_forward.9} parent=11 // pred_check_branch
        %416 = sbr.rel (%p414) target = $region44
      $region43: #{vqa_forward.9} parent=11 // pred_region
        _
      $region44: #{vqa_forward.9} parent=11 // pred_fallthru
        _
      // Predicated region
      $region45: #{vqa_forward.9} parent=11 // pred_check
        %p417 = pneg %p263
      $region46: #{vqa_forward.9} parent=11 // pred_check_branch
        %419 = sbr.rel (%p417) target = $region48
      $region47: #{vqa_forward.9} parent=11 // pred_region
        _
      $region48: #{vqa_forward.9} parent=11 // pred_fallthru
        _
      // Predicated region
      $region49: #{vqa_forward.9} parent=11 // pred_check
        %p420 = pneg %p284
      $region50: #{vqa_forward.9} parent=11 // pred_check_branch
        %422 = sbr.rel (%p420) target = $region52
      $region51: #{vqa_forward.9} parent=11 // pred_region
        _
      $region52: #{vqa_forward.9} parent=11 // pred_fallthru
        _
      // Predicated region
      $region53: #{vqa_forward.9} parent=11 // pred_check
        %p423 = pneg %p305
      $region54: #{vqa_forward.9} parent=11 // pred_check_branch
        %425 = sbr.rel (%p423) target = $region56
      $region55: #{vqa_forward.9} parent=11 // pred_region
        _
      $region56: #{vqa_forward.9} parent=11 // pred_fallthru
        _
      // Predicated region
      $region57: #{vqa_forward.9} parent=11 // pred_check
        %p426 = pneg %p326
      $region58: #{vqa_forward.9} parent=11 // pred_check_branch
        %428 = sbr.rel (%p426) target = $region60
      $region59: #{vqa_forward.9} parent=11 // pred_region
        _
      $region60: #{vqa_forward.9} parent=11 // pred_fallthru
        _
    $region12: #{vqa_forward.9} parent=5 // pred_fallthru
      _
    %p429 = scmp.lt.s32.totalorder %s22, 2
    // Predicated region
    $region61: #{vqa_forward.9} parent=5 // pred_check
      %p430 = pneg %p429
    $region62: #{vqa_forward.9} parent=5 // pred_check_branch
      %432 = sbr.rel (%p430) target = $region64
    $region63: #{vqa_forward.9} parent=5 // pred_region
      // Predicated region
      $region65: #{vqa_forward.9} parent=63 // pred_check
        %p433 = pneg %p42
      $region66: #{vqa_forward.9} parent=63 // pred_check_branch
        %435 = sbr.rel (%p433) target = $region68
      $region67: #{vqa_forward.9} parent=63 // pred_region
        %p436 = scmp.lt.s32.totalorder %s22, 1
        %s437 = scalar_select %p436, %s22, 1
        %s438 = smul.addr %s437, 8
        %s439 = smul.addr %s438, 8
        %s440 = scalar_lea.vmem %s0, %s439
      $region68: #{vqa_forward.9} parent=63 // pred_fallthru
        _
      // Predicated region
      $region69: #{vqa_forward.9} parent=63 // pred_check
        %p441 = pneg %p68
      $region70: #{vqa_forward.9} parent=63 // pred_check_branch
        %443 = sbr.rel (%p441) target = $region72
      $region71: #{vqa_forward.9} parent=63 // pred_region
        %p444 = scmp.lt.s32.totalorder %s22, 1
        %s445 = scalar_select %p444, %s22, 1
        %s446 = smul.addr %s445, 8
        %s447 = smul.addr %s446, 8
        %s448 = scalar_lea.vmem %s1, %s447
      $region72: #{vqa_forward.9} parent=63 // pred_fallthru
        _
    $region64: #{vqa_forward.9} parent=5 // pred_fallthru
      _
    %p449 = scmp.le.s32.totalorder 1, %s22
    %p450 = scmp.lt.s32.totalorder %s22, 3
    %p451 = pnand %p449, %p450
    %p452 = pneg %p451
    // Predicated region
    $region73: #{vqa_forward.9} parent=5 // pred_check
      _
    $region74: #{vqa_forward.9} parent=5 // pred_check_branch
      %454 = sbr.rel (%p451) target = $region76
    $region75: #{vqa_forward.9} parent=5 // pred_region
      %s455 = ssub.s32 %s22, 1
      %p456 = scmp.lt.s32.totalorder %s27, 1
      %s457 = scalar_select %p456, %s27, 1
      %s458 = smul.addr %s457, 8
      %s459 = smul.addr %s458, 8
      %s460 = scalar_lea.vmem %s0, %s459
      %p461 = pneg %p48
      %p462 = pneg %p45
      %p463 = scmp.lt.s32.totalorder %s27, 1
      %s464 = scalar_select %p463, %s27, 1
      %s465 = smul.addr %s464, 8
      %s466 = smul.addr %s465, 8
      %s467 = scalar_lea.vmem %s1, %s466
      %p468 = pneg %p74
      %p469 = pneg %p71
      %p470 = pneg %p95
      %p471 = pneg %p92
      %p472 = pneg %p116
      %p473 = pneg %p113
      %p474 = pneg %p137
      %p475 = pneg %p134
      %p476 = pneg %p158
      %p477 = pneg %p155
      %p478 = pneg %p179
      %p479 = pneg %p176
      %p480 = pneg %p200
      %p481 = pneg %p197
      %p482 = pneg %p221
      %p483 = pneg %p218
      %p484 = pneg %p242
      %p485 = pneg %p239
      %p486 = pneg %p263
      %p487 = pneg %p260
      %p488 = pneg %p284
      %p489 = pneg %p281
      %p490 = pneg %p305
      %p491 = pneg %p302
      %p492 = pneg %p326
      %p493 = pneg %p323
      %p494 = pneg %p352
      %p495 = pneg %p349
      %p496 = scmp.lt.s32.totalorder %s27, 1
      %s497 = scalar_select %p496, %s27, 1
      %s498 = smul.addr %s497, 32
      %s499 = smul.addr %s498, 8
      %s500 = scalar_lea.vmem %s14, %s499
      %p501 = pneg %p378
      %p502 = pneg %p375
      %p503 = scmp.lt.s32.totalorder %s27, 1
      %s504 = scalar_select %p503, %s27, 1
      %s505 = smul.addr %s504, 8
      %s506 = smul.addr %s505, 8
      %s507 = scalar_lea.vmem %s15, %s506
      %p508 = scmp.lt.s32.totalorder %s27, 1
      %s509 = scalar_select %p508, %s27, 1
      %s510 = smul.addr %s509, 8
      %s511 = smul.addr %s510, 8
      %s512 = scalar_lea.vmem %s0, %s511
      %p513 = scmp.lt.s32.totalorder %s27, 1
      %s514 = scalar_select %p513, %s27, 1
      %s515 = smul.addr %s514, 8
      %s516 = smul.addr %s515, 8
      %s517 = scalar_lea.vmem %s1, %s516
      %p518 = scmp.lt.s32.totalorder %s27, 1
      %s519 = scalar_select %p518, %s27, 1
      %s520 = smul.addr %s519, 32
      %s521 = smul.addr %s520, 8
      %s522 = scalar_lea.vmem %s14, %s521
      %p523 = scmp.lt.s32.totalorder %s27, 1
      %s524 = scalar_select %p523, %s27, 1
      %s525 = smul.addr %s524, 8
      %s526 = smul.addr %s525, 8
      %s527 = scalar_lea.vmem %s15, %s526
      %v528 = vld [vmem:[%s512] sm:$0xff]
      %v529 = vld [vmem:[%s512 + $0x8] sm:$0xff]
      %v530 = vld [vmem:[%s512 + $0x10] sm:$0xff]
      %v531 = vld [vmem:[%s512 + $0x18] sm:$0xff]
      %v532 = vld [vmem:[%s512 + $0x20] sm:$0xff]
      %v533 = vld [vmem:[%s512 + $0x28] sm:$0xff]
      %v534 = vld [vmem:[%s512 + $0x30] sm:$0xff]
      %v535 = vld [vmem:[%s512 + $0x38] sm:$0xff]
      %v536 = vld [vmem:[%s517] sm:$0xff]
      %v537 = vld [vmem:[%s517 + $0x8] sm:$0xff]
      %v538 = vld [vmem:[%s517 + $0x10] sm:$0xff]
      %v539 = vld [vmem:[%s517 + $0x18] sm:$0xff]
      %v540 = vld [vmem:[%s517 + $0x20] sm:$0xff]
      %v541 = vld [vmem:[%s517 + $0x28] sm:$0xff]
      %v542 = vld [vmem:[%s517 + $0x30] sm:$0xff]
      %v543 = vld [vmem:[%s517 + $0x38] sm:$0xff]
      %v544 = vld [vmem:[%s2] sm:$0xff]
      %v545 = vld [vmem:[%s2 + $0x8] sm:$0xff]
      %v546 = vld [vmem:[%s2 + $0x10] sm:$0xff]
      %v547 = vld [vmem:[%s2 + $0x18] sm:$0xff]
      %v548 = vld [vmem:[%s3] sm:$0x1]
      %v550 = vlaneseq
      %v551 = vshrl.u32 %v550, 7
      %v552 = vsub.s32 0, %v551
      %v553 = vrot.slane %v548, %v552
      %vm555 = vcmask 261120
      %v557 = vsel %vm555, %v528, 0
      %v560 = vsel %vm555, %v529, 0
      %v563 = vsel %vm555, %v530, 0
      %v566 = vsel %vm555, %v531, 0
      %v569 = vsel %vm555, %v532, 0
      %v572 = vsel %vm555, %v533, 0
      %v575 = vsel %vm555, %v534, 0
      %v578 = vsel %vm555, %v535, 0
      %580 = vmatprep.subr.mxu0 0.0
      %581 = vmatpush1.msra.mxu0 %v544
      %582 = vmatprep.subr.mxu0 0.0
      %583 = vmatpush1.msra.mxu0 %v545
      %584 = vmatprep.subr.mxu0 0.0
      %585 = vmatpush1.msra.mxu0 %v546
      %586 = vmatprep.subr.mxu0 0.0
      %587 = vmatpush1.msra.mxu0 %v547
      %588 = vmatprep.subr.mxu0 0.0
      %589 = vmatpush1.msra.mxu0 0.0
      %590 = vmatprep.subr.mxu0 0.0
      %591 = vmatpush1.msra.mxu0 0.0
      %592 = vmatprep.subr.mxu0 0.0
      %593 = vmatpush1.msra.mxu0 0.0
      %594 = vmatprep.subr.mxu0 0.0
      %595 = vmatpush1.msra.mxu0 0.0
      %596 = vmatprep.subr.mxu0 0.0
      %597 = vmatpush1.msra.mxu0 0.0
      %598 = vmatprep.subr.mxu0 0.0
      %599 = vmatpush1.msra.mxu0 0.0
      %600 = vmatprep.subr.mxu0 0.0
      %601 = vmatpush1.msra.mxu0 0.0
      %602 = vmatprep.subr.mxu0 0.0
      %603 = vmatpush1.msra.mxu0 0.0
      %604 = vmatprep.subr.mxu0 0.0
      %605 = vmatpush1.msra.mxu0 0.0
      %606 = vmatprep.subr.mxu0 0.0
      %607 = vmatpush1.msra.mxu0 0.0
      %608 = vmatprep.subr.mxu0 0.0
      %609 = vmatpush1.msra.mxu0 0.0
      %610 = vmatprep.subr.mxu0 0.0
      %611 = vmatpush1.msra.mxu0 0.0
      %612 = vmatprep.subr.mxu0 0.0
      %613 = vmatpush1.msra.mxu0 0.0
      %614 = vmatprep.subr.mxu0 0.0
      %615 = vmatpush1.msra.mxu0 0.0
      %616 = vmatprep.subr.mxu0 0.0
      %617 = vmatpush1.msra.mxu0 0.0
      %618 = vmatprep.subr.mxu0 0.0
      %619 = vmatpush1.msra.mxu0 0.0
      %620 = vmatprep.subr.mxu0 0.0
      %621 = vmatpush1.msra.mxu0 0.0
      %622 = vmatprep.subr.mxu0 0.0
      %623 = vmatpush1.msra.mxu0 0.0
      %624 = vmatprep.subr.mxu0 0.0
      %625 = vmatpush1.msra.mxu0 0.0
      %626 = vmatprep.subr.mxu0 0.0
      %627 = vmatpush1.msra.mxu0 0.0
      %628 = vmatprep.subr.mxu0 0.0
      %629 = vmatpush1.msra.mxu0 0.0
      %630 = vmatprep.subr.mxu0 0.0
      %631 = vmatpush1.msra.mxu0 0.0
      %632 = vmatprep.subr.mxu0 0.0
      %633 = vmatpush1.msra.mxu0 0.0
      %634 = vmatprep.subr.mxu0 0.0
      %635 = vmatpush1.msra.mxu0 0.0
      %636 = vmatprep.subr.mxu0 0.0
      %637 = vmatpush1.msra.mxu0 0.0
      %638 = vmatprep.subr.mxu0 0.0
      %639 = vmatpush1.msra.mxu0 0.0
      %640 = vmatprep.subr.mxu0 0.0
      %641 = vmatpush1.msra.mxu0 0.0
      %642 = vmatprep.subr.mxu0 0.0
      %643 = vmatpush1.msra.mxu0 0.0
      %644 = vmatprep.mubr.f32.mxu0 0.0
      %645 = vmatmul.mubr.f32.gmra.mrb[0].mxu0 %v557
      %v646 = vpop.f32.mrb[0].mxu0
      %v647 = vadd.f32 %v553, %v646
      %v648 = vpop.f32.mrb[0].mxu0
      %649 = vmatprep.mubr.f32.mxu0 0.0
      %650 = vmatmul.mubr.f32.gmra.mrb[0].mxu0 %v560
      %v651 = vpop.f32.mrb[0].mxu0
      %v652 = vadd.f32 %v553, %v651
      %v653 = vpop.f32.mrb[0].mxu0
      %654 = vmatprep.mubr.f32.mxu0 0.0
      %655 = vmatmul.mubr.f32.gmra.mrb[0].mxu0 %v563
      %v656 = vpop.f32.mrb[0].mxu0
      %v657 = vadd.f32 %v553, %v656
      %v658 = vpop.f32.mrb[0].mxu0
      %659 = vmatprep.mubr.f32.mxu0 0.0
      %660 = vmatmul.mubr.f32.gmra.mrb[0].mxu0 %v566
      %v661 = vpop.f32.mrb[0].mxu0
      %v662 = vadd.f32 %v553, %v661
      %v663 = vpop.f32.mrb[0].mxu0
      %664 = vmatprep.mubr.f32.mxu0 0.0
      %665 = vmatmul.mubr.f32.gmra.mrb[0].mxu0 %v569
      %v666 = vpop.f32.mrb[0].mxu0
      %v667 = vadd.f32 %v553, %v666
      %v668 = vpop.f32.mrb[0].mxu0
      %669 = vmatprep.mubr.f32.mxu0 0.0
      %670 = vmatmul.mubr.f32.gmra.mrb[0].mxu0 %v572
      %v671 = vpop.f32.mrb[0].mxu0
      %v672 = vadd.f32 %v553, %v671
      %v673 = vpop.f32.mrb[0].mxu0
      %674 = vmatprep.mubr.f32.mxu0 0.0
      %675 = vmatmul.mubr.f32.gmra.mrb[0].mxu0 %v575
      %v676 = vpop.f32.mrb[0].mxu0
      %v677 = vadd.f32 %v553, %v676
      %v678 = vpop.f32.mrb[0].mxu0
      %679 = vmatprep.mubr.f32.mxu0 0.0
      %680 = vmatmul.mubr.f32.gmra.mrb[0].mxu0 %v578
      %v681 = vpop.f32.mrb[0].mxu0
      %v682 = vadd.f32 %v553, %v681
      %v683 = vpop.f32.mrb[0].mxu0
      %684 = vdwg.mxu0
      %v685 = vmul.f32 %v647, 0.35355338
      %v686 = vmul.f32 %v652, 0.35355338
      %v687 = vmul.f32 %v657, 0.35355338
      %v688 = vmul.f32 %v662, 0.35355338
      %v689 = vmul.f32 %v667, 0.35355338
      %v690 = vmul.f32 %v672, 0.35355338
      %v691 = vmul.f32 %v677, 0.35355338
      %v692 = vmul.f32 %v682, 0.35355338
      %701 = vrot.lane.b32.xlu0 %v647, 96
      %v702 = vpop.permute.xlu0 %701
      %703 = vrot.lane.b32.xlu0 %v652, 96
      %v704 = vpop.permute.xlu0 %703
      %705 = vrot.lane.b32.xlu0 %v657, 96
      %v706 = vpop.permute.xlu0 %705
      %707 = vrot.lane.b32.xlu0 %v662, 96
      %v708 = vpop.permute.xlu0 %707
      %709 = vrot.lane.b32.xlu0 %v667, 96
      %v710 = vpop.permute.xlu0 %709
      %711 = vrot.lane.b32.xlu0 %v672, 96
      %v712 = vpop.permute.xlu0 %711
      %713 = vrot.lane.b32.xlu0 %v677, 96
      %v714 = vpop.permute.xlu0 %713
      %715 = vrot.lane.b32.xlu0 %v682, 96
      %v716 = vpop.permute.xlu0 %715
      %vm717 = vcmask 64512
      %v719 = vsel %vm717, %v685, 0
      %v722 = vsel %vm717, %v686, 0
      %v725 = vsel %vm717, %v687, 0
      %v728 = vsel %vm717, %v688, 0
      %v731 = vsel %vm717, %v689, 0
      %v734 = vsel %vm717, %v690, 0
      %v737 = vsel %vm717, %v691, 0
      %v740 = vsel %vm717, %v692, 0
      %v742 = vsel %vm717, %v702, 0
      %v744 = vsel %vm717, %v704, 0
      %v746 = vsel %vm717, %v706, 0
      %v748 = vsel %vm717, %v708, 0
      %v750 = vsel %vm717, %v710, 0
      %v752 = vsel %vm717, %v712, 0
      %v754 = vsel %vm717, %v714, 0
      %v756 = vsel %vm717, %v716, 0
      %758 = vmatprep.subr.mxu0 0.0
      %759 = vmatpush1.xpose.msra.mxu0 %v742
      %760 = vmatprep.subr.mxu0 0.0
      %761 = vmatpush1.xpose.msra.mxu0 %v744
      %762 = vmatprep.subr.mxu0 0.0
      %763 = vmatpush1.xpose.msra.mxu0 %v746
      %764 = vmatprep.subr.mxu0 0.0
      %765 = vmatpush1.xpose.msra.mxu0 %v748
      %766 = vmatprep.subr.mxu0 0.0
      %767 = vmatpush1.xpose.msra.mxu0 %v750
      %768 = vmatprep.subr.mxu0 0.0
      %769 = vmatpush1.xpose.msra.mxu0 %v752
      %770 = vmatprep.subr.mxu0 0.0
      %771 = vmatpush1.xpose.msra.mxu0 %v754
      %772 = vmatprep.subr.mxu0 0.0
      %773 = vmatpush1.xpose.msra.mxu0 %v756
      %774 = vmatprep.subr.mxu0 0.0
      %775 = vmatpush1.xpose.msra.mxu0 0.0
      %776 = vmatprep.subr.mxu0 0.0
      %777 = vmatpush1.xpose.msra.mxu0 0.0
      %778 = vmatprep.subr.mxu0 0.0
      %779 = vmatpush1.xpose.msra.mxu0 0.0
      %780 = vmatprep.subr.mxu0 0.0
      %781 = vmatpush1.xpose.msra.mxu0 0.0
      %782 = vmatprep.subr.mxu0 0.0
      %783 = vmatpush1.xpose.msra.mxu0 0.0
      %784 = vmatprep.subr.mxu0 0.0
      %785 = vmatpush1.xpose.msra.mxu0 0.0
      %786 = vmatprep.subr.mxu0 0.0
      %787 = vmatpush1.xpose.msra.mxu0 0.0
      %788 = vmatprep.subr.mxu0 0.0
      %789 = vmatpush1.xpose.msra.mxu0 0.0
      %790 = vmatprep.subr.mxu0 0.0
      %791 = vmatpush1.xpose.msra.mxu0 0.0
      %792 = vmatprep.subr.mxu0 0.0
      %793 = vmatpush1.xpose.msra.mxu0 0.0
      %794 = vmatprep.subr.mxu0 0.0
      %795 = vmatpush1.xpose.msra.mxu0 0.0
      %796 = vmatprep.subr.mxu0 0.0
      %797 = vmatpush1.xpose.msra.mxu0 0.0
      %798 = vmatprep.subr.mxu0 0.0
      %799 = vmatpush1.xpose.msra.mxu0 0.0
      %800 = vmatprep.subr.mxu0 0.0
      %801 = vmatpush1.xpose.msra.mxu0 0.0
      %802 = vmatprep.subr.mxu0 0.0
      %803 = vmatpush1.xpose.msra.mxu0 0.0
      %804 = vmatprep.subr.mxu0 0.0
      %805 = vmatpush1.xpose.msra.mxu0 0.0
      %806 = vmatprep.subr.mxu0 0.0
      %807 = vmatpush1.xpose.msra.mxu0 0.0
      %808 = vmatprep.subr.mxu0 0.0
      %809 = vmatpush1.xpose.msra.mxu0 0.0
      %810 = vmatprep.subr.mxu0 0.0
      %811 = vmatpush1.xpose.msra.mxu0 0.0
      %812 = vmatprep.subr.mxu0 0.0
      %813 = vmatpush1.xpose.msra.mxu0 0.0
      %814 = vmatprep.subr.mxu0 0.0
      %815 = vmatpush1.xpose.msra.mxu0 0.0
      %816 = vmatprep.subr.mxu0 0.0
      %817 = vmatpush1.xpose.msra.mxu0 0.0
      %818 = vmatprep.subr.mxu0 0.0
      %819 = vmatpush1.xpose.msra.mxu0 0.0
      %820 = vmatprep.subr.mxu0 0.0
      %821 = vmatpush1.xpose.msra.mxu0 0.0
      %822 = vmatprep.mubr.f32.mxu0 0.0
      %823 = vmatmul.mubr.f32.gmra.mrb[0].mxu0 %v719
      %v824 = vpop.f32.mrb[0].mxu0
      %v825 = vadd.f32 %v536, %v824
      %v826 = vpop.f32.mrb[0].mxu0
      %827 = vmatprep.mubr.f32.mxu0 0.0
      %828 = vmatmul.mubr.f32.gmra.mrb[0].mxu0 %v722
      %v829 = vpop.f32.mrb[0].mxu0
      %v830 = vadd.f32 %v537, %v829
      %v831 = vpop.f32.mrb[0].mxu0
      %832 = vmatprep.mubr.f32.mxu0 0.0
      %833 = vmatmul.mubr.f32.gmra.mrb[0].mxu0 %v725
      %v834 = vpop.f32.mrb[0].mxu0
      %v835 = vadd.f32 %v538, %v834
      %v836 = vpop.f32.mrb[0].mxu0
      %837 = vmatprep.mubr.f32.mxu0 0.0
      %838 = vmatmul.mubr.f32.gmra.mrb[0].mxu0 %v728
      %v839 = vpop.f32.mrb[0].mxu0
      %v840 = vadd.f32 %v539, %v839
      %v841 = vpop.f32.mrb[0].mxu0
      %842 = vmatprep.mubr.f32.mxu0 0.0
      %843 = vmatmul.mubr.f32.gmra.mrb[0].mxu0 %v731
      %v844 = vpop.f32.mrb[0].mxu0
      %v845 = vadd.f32 %v540, %v844
      %v846 = vpop.f32.mrb[0].mxu0
      %847 = vmatprep.mubr.f32.mxu0 0.0
      %848 = vmatmul.mubr.f32.gmra.mrb[0].mxu0 %v734
      %v849 = vpop.f32.mrb[0].mxu0
      %v850 = vadd.f32 %v541, %v849
      %v851 = vpop.f32.mrb[0].mxu0
      %852 = vmatprep.mubr.f32.mxu0 0.0
      %853 = vmatmul.mubr.f32.gmra.mrb[0].mxu0 %v737
      %v854 = vpop.f32.mrb[0].mxu0
      %v855 = vadd.f32 %v542, %v854
      %v856 = vpop.f32.mrb[0].mxu0
      %857 = vmatprep.mubr.f32.mxu0 0.0
      %858 = vmatmul.mubr.f32.gmra.mrb[0].mxu0 %v740
      %v859 = vpop.f32.mrb[0].mxu0
      %v860 = vadd.f32 %v543, %v859
      %v861 = vpop.f32.mrb[0].mxu0
      %862 = vdwg.mxu0
      %vm863 = vcmask 523264
      %v864 = vsel %vm863, %v825, -inf
      %865 = vmax.xlane.f32.xlu0 %v864
      %v866 = vpop.xlane.xlu0 %865
      %v867 = vsel %vm863, %v830, -inf
      %868 = vmax.xlane.f32.xlu0 %v867
      %v869 = vpop.xlane.xlu0 %868
      %v870 = vsel %vm863, %v835, -inf
      %871 = vmax.xlane.f32.xlu0 %v870
      %v872 = vpop.xlane.xlu0 %871
      %v873 = vsel %vm863, %v840, -inf
      %874 = vmax.xlane.f32.xlu0 %v873
      %v875 = vpop.xlane.xlu0 %874
      %v876 = vsel %vm863, %v845, -inf
      %877 = vmax.xlane.f32.xlu0 %v876
      %v878 = vpop.xlane.xlu0 %877
      %v879 = vsel %vm863, %v850, -inf
      %880 = vmax.xlane.f32.xlu0 %v879
      %v881 = vpop.xlane.xlu0 %880
      %v882 = vsel %vm863, %v855, -inf
      %883 = vmax.xlane.f32.xlu0 %v882
      %v884 = vpop.xlane.xlu0 %883
      %v885 = vsel %vm863, %v860, -inf
      %886 = vmax.xlane.f32.xlu0 %v885
      %v887 = vpop.xlane.xlu0 %886
      %v888 = vsub.f32 %v825, %v866
      %v889 = vsub.f32 %v830, %v869
      %v890 = vsub.f32 %v835, %v872
      %v891 = vsub.f32 %v840, %v875
      %v892 = vsub.f32 %v845, %v878
      %v893 = vsub.f32 %v850, %v881
      %v894 = vsub.f32 %v855, %v884
      %v895 = vsub.f32 %v860, %v887
      %v896 = vmul.f32 %v888, 1.442695
      %v897 = vpow.pop %v896
      %v898 = vmul.f32 %v889, 1.442695
      %v899 = vpow.pop %v898
      %v900 = vmul.f32 %v890, 1.442695
      %v901 = vpow.pop %v900
      %v902 = vmul.f32 %v891, 1.442695
      %v903 = vpow.pop %v902
      %v904 = vmul.f32 %v892, 1.442695
      %v905 = vpow.pop %v904
      %v906 = vmul.f32 %v893, 1.442695
      %v907 = vpow.pop %v906
      %v908 = vmul.f32 %v894, 1.442695
      %v909 = vpow.pop %v908
      %v910 = vmul.f32 %v895, 1.442695
      %v911 = vpow.pop %v910
      %v912 = vsel %vm863, %v897, 0.0
      %913 = vadd.xlane.f32.xlu0 %v912
      %v914 = vpop.xlane.xlu0 %913
      %v915 = vsel %vm863, %v899, 0.0
      %916 = vadd.xlane.f32.xlu0 %v915
      %v917 = vpop.xlane.xlu0 %916
      %v918 = vsel %vm863, %v901, 0.0
      %919 = vadd.xlane.f32.xlu0 %v918
      %v920 = vpop.xlane.xlu0 %919
      %v921 = vsel %vm863, %v903, 0.0
      %922 = vadd.xlane.f32.xlu0 %v921
      %v923 = vpop.xlane.xlu0 %922
      %v924 = vsel %vm863, %v905, 0.0
      %925 = vadd.xlane.f32.xlu0 %v924
      %v926 = vpop.xlane.xlu0 %925
      %v927 = vsel %vm863, %v907, 0.0
      %928 = vadd.xlane.f32.xlu0 %v927
      %v929 = vpop.xlane.xlu0 %928
      %v930 = vsel %vm863, %v909, 0.0
      %931 = vadd.xlane.f32.xlu0 %v930
      %v932 = vpop.xlane.xlu0 %931
      %v933 = vsel %vm863, %v911, 0.0
      %934 = vadd.xlane.f32.xlu0 %v933
      %v935 = vpop.xlane.xlu0 %934
      %v936 = vrcp.pop %v914
      %v937 = vrcp.pop %v917
      %v938 = vrcp.pop %v920
      %v939 = vrcp.pop %v923
      %v940 = vrcp.pop %v926
      %v941 = vrcp.pop %v929
      %v942 = vrcp.pop %v932
      %v943 = vrcp.pop %v935
      %v944 = vmul.f32 %v897, %v936
      %v945 = vmul.f32 %v899, %v937
      %v946 = vmul.f32 %v901, %v938
      %v947 = vmul.f32 %v903, %v939
      %v948 = vmul.f32 %v905, %v940
      %v949 = vmul.f32 %v907, %v941
      %v950 = vmul.f32 %v909, %v942
      %v951 = vmul.f32 %v911, %v943
      %952 = vst.msk [vmem:[%s522] sm:$0xff] %vm863, %v944
      %953 = vst.msk [vmem:[%s522 + $0x8] sm:$0xff] %vm863, %v945
      %954 = vst.msk [vmem:[%s522 + $0x10] sm:$0xff] %vm863, %v946
      %955 = vst.msk [vmem:[%s522 + $0x18] sm:$0xff] %vm863, %v947
      %956 = vst.msk [vmem:[%s522 + $0x20] sm:$0xff] %vm863, %v948
      %957 = vst.msk [vmem:[%s522 + $0x28] sm:$0xff] %vm863, %v949
      %958 = vst.msk [vmem:[%s522 + $0x30] sm:$0xff] %vm863, %v950
      %959 = vst.msk [vmem:[%s522 + $0x38] sm:$0xff] %vm863, %v951
      %960 = vrot.lane.b32.xlu0 %v647, 64
      %v961 = vpop.permute.xlu0 %960
      %962 = vrot.lane.b32.xlu0 %v652, 64
      %v963 = vpop.permute.xlu0 %962
      %964 = vrot.lane.b32.xlu0 %v657, 64
      %v965 = vpop.permute.xlu0 %964
      %966 = vrot.lane.b32.xlu0 %v662, 64
      %v967 = vpop.permute.xlu0 %966
      %968 = vrot.lane.b32.xlu0 %v667, 64
      %v969 = vpop.permute.xlu0 %968
      %970 = vrot.lane.b32.xlu0 %v672, 64
      %v971 = vpop.permute.xlu0 %970
      %972 = vrot.lane.b32.xlu0 %v677, 64
      %v973 = vpop.permute.xlu0 %972
      %974 = vrot.lane.b32.xlu0 %v682, 64
      %v975 = vpop.permute.xlu0 %974
      %v985 = vsel %vm863, %v944, 0
      %v988 = vsel %vm863, %v945, 0
      %v991 = vsel %vm863, %v946, 0
      %v994 = vsel %vm863, %v947, 0
      %v997 = vsel %vm863, %v948, 0
      %v1000 = vsel %vm863, %v949, 0
      %v1003 = vsel %vm863, %v950, 0
      %v1006 = vsel %vm863, %v951, 0
      %1008 = vmatprep.subr.mxu0 0.0
      %1009 = vmatpush1.msra.mxu0 %v961
      %1010 = vmatprep.subr.mxu0 0.0
      %1011 = vmatpush1.msra.mxu0 %v963
      %1012 = vmatprep.subr.mxu0 0.0
      %1013 = vmatpush1.msra.mxu0 %v965
      %1014 = vmatprep.subr.mxu0 0.0
      %1015 = vmatpush1.msra.mxu0 %v967
      %1016 = vmatprep.subr.mxu0 0.0
      %1017 = vmatpush1.msra.mxu0 %v969
      %1018 = vmatprep.subr.mxu0 0.0
      %1019 = vmatpush1.msra.mxu0 %v971
      %1020 = vmatprep.subr.mxu0 0.0
      %1021 = vmatpush1.msra.mxu0 %v973
      %1022 = vmatprep.subr.mxu0 0.0
      %1023 = vmatpush1.msra.mxu0 %v975
      %1024 = vmatprep.subr.mxu0 0.0
      %1025 = vmatpush1.msra.mxu0 0.0
      %1026 = vmatprep.subr.mxu0 0.0
      %1027 = vmatpush1.msra.mxu0 0.0
      %1028 = vmatprep.subr.mxu0 0.0
      %1029 = vmatpush1.msra.mxu0 0.0
      %1030 = vmatprep.subr.mxu0 0.0
      %1031 = vmatpush1.msra.mxu0 0.0
      %1032 = vmatprep.subr.mxu0 0.0
      %1033 = vmatpush1.msra.mxu0 0.0
      %1034 = vmatprep.subr.mxu0 0.0
      %1035 = vmatpush1.msra.mxu0 0.0
      %1036 = vmatprep.subr.mxu0 0.0
      %1037 = vmatpush1.msra.mxu0 0.0
      %1038 = vmatprep.subr.mxu0 0.0
      %1039 = vmatpush1.msra.mxu0 0.0
      %1040 = vmatprep.subr.mxu0 0.0
      %1041 = vmatpush1.msra.mxu0 0.0
      %1042 = vmatprep.subr.mxu0 0.0
      %1043 = vmatpush1.msra.mxu0 0.0
      %1044 = vmatprep.subr.mxu0 0.0
      %1045 = vmatpush1.msra.mxu0 0.0
      %1046 = vmatprep.subr.mxu0 0.0
      %1047 = vmatpush1.msra.mxu0 0.0
      %1048 = vmatprep.subr.mxu0 0.0
      %1049 = vmatpush1.msra.mxu0 0.0
      %1050 = vmatprep.subr.mxu0 0.0
      %1051 = vmatpush1.msra.mxu0 0.0
      %1052 = vmatprep.subr.mxu0 0.0
      %1053 = vmatpush1.msra.mxu0 0.0
      %1054 = vmatprep.subr.mxu0 0.0
      %1055 = vmatpush1.msra.mxu0 0.0
      %1056 = vmatprep.subr.mxu0 0.0
      %1057 = vmatpush1.msra.mxu0 0.0
      %1058 = vmatprep.subr.mxu0 0.0
      %1059 = vmatpush1.msra.mxu0 0.0
      %1060 = vmatprep.subr.mxu0 0.0
      %1061 = vmatpush1.msra.mxu0 0.0
      %1062 = vmatprep.subr.mxu0 0.0
      %1063 = vmatpush1.msra.mxu0 0.0
      %1064 = vmatprep.subr.mxu0 0.0
      %1065 = vmatpush1.msra.mxu0 0.0
      %1066 = vmatprep.subr.mxu0 0.0
      %1067 = vmatpush1.msra.mxu0 0.0
      %1068 = vmatprep.subr.mxu0 0.0
      %1069 = vmatpush1.msra.mxu0 0.0
      %1070 = vmatprep.subr.mxu0 0.0
      %1071 = vmatpush1.msra.mxu0 0.0
      %1072 = vmatprep.mubr.f32.mxu0 0.0
      %1073 = vmatmul.mubr.f32.gmra.mrb[0].mxu0 %v985
      %v1074 = vpop.f32.mrb[0].mxu0
      %v1075 = vadd.f32 0.0, %v1074
      %v1076 = vpop.f32.mrb[0].mxu0
      %1077 = vmatprep.mubr.f32.mxu0 0.0
      %1078 = vmatmul.mubr.f32.gmra.mrb[0].mxu0 %v988
      %v1079 = vpop.f32.mrb[0].mxu0
      %v1080 = vadd.f32 0.0, %v1079
      %v1081 = vpop.f32.mrb[0].mxu0
      %1082 = vmatprep.mubr.f32.mxu0 0.0
      %1083 = vmatmul.mubr.f32.gmra.mrb[0].mxu0 %v991
      %v1084 = vpop.f32.mrb[0].mxu0
      %v1085 = vadd.f32 0.0, %v1084
      %v1086 = vpop.f32.mrb[0].mxu0
      %1087 = vmatprep.mubr.f32.mxu0 0.0
      %1088 = vmatmul.mubr.f32.gmra.mrb[0].mxu0 %v994
      %v1089 = vpop.f32.mrb[0].mxu0
      %v1090 = vadd.f32 0.0, %v1089
      %v1091 = vpop.f32.mrb[0].mxu0
      %1092 = vmatprep.mubr.f32.mxu0 0.0
      %1093 = vmatmul.mubr.f32.gmra.mrb[0].mxu0 %v997
      %v1094 = vpop.f32.mrb[0].mxu0
      %v1095 = vadd.f32 0.0, %v1094
      %v1096 = vpop.f32.mrb[0].mxu0
      %1097 = vmatprep.mubr.f32.mxu0 0.0
      %1098 = vmatmul.mubr.f32.gmra.mrb[0].mxu0 %v1000
      %v1099 = vpop.f32.mrb[0].mxu0
      %v1100 = vadd.f32 0.0, %v1099
      %v1101 = vpop.f32.mrb[0].mxu0
      %1102 = vmatprep.mubr.f32.mxu0 0.0
      %1103 = vmatmul.mubr.f32.gmra.mrb[0].mxu0 %v1003
      %v1104 = vpop.f32.mrb[0].mxu0
      %v1105 = vadd.f32 0.0, %v1104
      %v1106 = vpop.f32.mrb[0].mxu0
      %1107 = vmatprep.mubr.f32.mxu0 0.0
      %1108 = vmatmul.mubr.f32.gmra.mrb[0].mxu0 %v1006
      %v1109 = vpop.f32.mrb[0].mxu0
      %v1110 = vadd.f32 0.0, %v1109
      %v1111 = vpop.f32.mrb[0].mxu0
      %1112 = vdwg.mxu0
      %1113 = vrot.lane.b32.xlu0 %v685, 120
      %v1114 = vpop.permute.xlu0 %1113
      %1115 = vrot.lane.b32.xlu0 %v686, 120
      %v1116 = vpop.permute.xlu0 %1115
      %1117 = vrot.lane.b32.xlu0 %v687, 120
      %v1118 = vpop.permute.xlu0 %1117
      %1119 = vrot.lane.b32.xlu0 %v688, 120
      %v1120 = vpop.permute.xlu0 %1119
      %1121 = vrot.lane.b32.xlu0 %v689, 120
      %v1122 = vpop.permute.xlu0 %1121
      %1123 = vrot.lane.b32.xlu0 %v690, 120
      %v1124 = vpop.permute.xlu0 %1123
      %1125 = vrot.lane.b32.xlu0 %v691, 120
      %v1126 = vpop.permute.xlu0 %1125
      %1127 = vrot.lane.b32.xlu0 %v692, 120
      %v1128 = vpop.permute.xlu0 %1127
      %1129 = vrot.lane.b32.xlu0 %v647, 88
      %v1130 = vpop.permute.xlu0 %1129
      %1131 = vrot.lane.b32.xlu0 %v652, 88
      %v1132 = vpop.permute.xlu0 %1131
      %1133 = vrot.lane.b32.xlu0 %v657, 88
      %v1134 = vpop.permute.xlu0 %1133
      %1135 = vrot.lane.b32.xlu0 %v662, 88
      %v1136 = vpop.permute.xlu0 %1135
      %1137 = vrot.lane.b32.xlu0 %v667, 88
      %v1138 = vpop.permute.xlu0 %1137
      %1139 = vrot.lane.b32.xlu0 %v672, 88
      %v1140 = vpop.permute.xlu0 %1139
      %1141 = vrot.lane.b32.xlu0 %v677, 88
      %v1142 = vpop.permute.xlu0 %1141
      %1143 = vrot.lane.b32.xlu0 %v682, 88
      %v1144 = vpop.permute.xlu0 %1143
      %v1145 = vsel %vm717, %v1114, 0
      %v1147 = vsel %vm717, %v1116, 0
      %v1149 = vsel %vm717, %v1118, 0
      %v1151 = vsel %vm717, %v1120, 0
      %v1153 = vsel %vm717, %v1122, 0
      %v1155 = vsel %vm717, %v1124, 0
      %v1157 = vsel %vm717, %v1126, 0
      %v1159 = vsel %vm717, %v1128, 0
      %v1161 = vsel %vm717, %v1130, 0
      %v1163 = vsel %vm717, %v1132, 0
      %v1165 = vsel %vm717, %v1134, 0
      %v1167 = vsel %vm717, %v1136, 0
      %v1169 = vsel %vm717, %v1138, 0
      %v1171 = vsel %vm717, %v1140, 0
      %v1173 = vsel %vm717, %v1142, 0
      %v1175 = vsel %vm717, %v1144, 0
      %1177 = vmatprep.subr.mxu0 0.0
      %1178 = vmatpush1.xpose.msra.mxu0 %v1161
      %1179 = vmatprep.subr.mxu0 0.0
      %1180 = vmatpush1.xpose.msra.mxu0 %v1163
      %1181 = vmatprep.subr.mxu0 0.0
      %1182 = vmatpush1.xpose.msra.mxu0 %v1165
      %1183 = vmatprep.subr.mxu0 0.0
      %1184 = vmatpush1.xpose.msra.mxu0 %v1167
      %1185 = vmatprep.subr.mxu0 0.0
      %1186 = vmatpush1.xpose.msra.mxu0 %v1169
      %1187 = vmatprep.subr.mxu0 0.0
      %1188 = vmatpush1.xpose.msra.mxu0 %v1171
      %1189 = vmatprep.subr.mxu0 0.0
      %1190 = vmatpush1.xpose.msra.mxu0 %v1173
      %1191 = vmatprep.subr.mxu0 0.0
      %1192 = vmatpush1.xpose.msra.mxu0 %v1175
      %1193 = vmatprep.subr.mxu0 0.0
      %1194 = vmatpush1.xpose.msra.mxu0 0.0
      %1195 = vmatprep.subr.mxu0 0.0
      %1196 = vmatpush1.xpose.msra.mxu0 0.0
      %1197 = vmatprep.subr.mxu0 0.0
      %1198 = vmatpush1.xpose.msra.mxu0 0.0
      %1199 = vmatprep.subr.mxu0 0.0
      %1200 = vmatpush1.xpose.msra.mxu0 0.0
      %1201 = vmatprep.subr.mxu0 0.0
      %1202 = vmatpush1.xpose.msra.mxu0 0.0
      %1203 = vmatprep.subr.mxu0 0.0
      %1204 = vmatpush1.xpose.msra.mxu0 0.0
      %1205 = vmatprep.subr.mxu0 0.0
      %1206 = vmatpush1.xpose.msra.mxu0 0.0
      %1207 = vmatprep.subr.mxu0 0.0
      %1208 = vmatpush1.xpose.msra.mxu0 0.0
      %1209 = vmatprep.subr.mxu0 0.0
      %1210 = vmatpush1.xpose.msra.mxu0 0.0
      %1211 = vmatprep.subr.mxu0 0.0
      %1212 = vmatpush1.xpose.msra.mxu0 0.0
      %1213 = vmatprep.subr.mxu0 0.0
      %1214 = vmatpush1.xpose.msra.mxu0 0.0
      %1215 = vmatprep.subr.mxu0 0.0
      %1216 = vmatpush1.xpose.msra.mxu0 0.0
      %1217 = vmatprep.subr.mxu0 0.0
      %1218 = vmatpush1.xpose.msra.mxu0 0.0
      %1219 = vmatprep.subr.mxu0 0.0
      %1220 = vmatpush1.xpose.msra.mxu0 0.0
      %1221 = vmatprep.subr.mxu0 0.0
      %1222 = vmatpush1.xpose.msra.mxu0 0.0
      %1223 = vmatprep.subr.mxu0 0.0
      %1224 = vmatpush1.xpose.msra.mxu0 0.0
      %1225 = vmatprep.subr.mxu0 0.0
      %1226 = vmatpush1.xpose.msra.mxu0 0.0
      %1227 = vmatprep.subr.mxu0 0.0
      %1228 = vmatpush1.xpose.msra.mxu0 0.0
      %1229 = vmatprep.subr.mxu0 0.0
      %1230 = vmatpush1.xpose.msra.mxu0 0.0
      %1231 = vmatprep.subr.mxu0 0.0
      %1232 = vmatpush1.xpose.msra.mxu0 0.0
      %1233 = vmatprep.subr.mxu0 0.0
      %1234 = vmatpush1.xpose.msra.mxu0 0.0
      %1235 = vmatprep.subr.mxu0 0.0
      %1236 = vmatpush1.xpose.msra.mxu0 0.0
      %1237 = vmatprep.subr.mxu0 0.0
      %1238 = vmatpush1.xpose.msra.mxu0 0.0
      %1239 = vmatprep.subr.mxu0 0.0
      %1240 = vmatpush1.xpose.msra.mxu0 0.0
      %1241 = vmatprep.mubr.f32.mxu0 0.0
      %1242 = vmatmul.mubr.f32.gmra.mrb[0].mxu0 %v1145
      %v1243 = vpop.f32.mrb[0].mxu0
      %v1244 = vadd.f32 %v536, %v1243
      %v1245 = vpop.f32.mrb[0].mxu0
      %1246 = vmatprep.mubr.f32.mxu0 0.0
      %1247 = vmatmul.mubr.f32.gmra.mrb[0].mxu0 %v1147
      %v1248 = vpop.f32.mrb[0].mxu0
      %v1249 = vadd.f32 %v537, %v1248
      %v1250 = vpop.f32.mrb[0].mxu0
      %1251 = vmatprep.mubr.f32.mxu0 0.0
      %1252 = vmatmul.mubr.f32.gmra.mrb[0].mxu0 %v1149
      %v1253 = vpop.f32.mrb[0].mxu0
      %v1254 = vadd.f32 %v538, %v1253
      %v1255 = vpop.f32.mrb[0].mxu0
      %1256 = vmatprep.mubr.f32.mxu0 0.0
      %1257 = vmatmul.mubr.f32.gmra.mrb[0].mxu0 %v1151
      %v1258 = vpop.f32.mrb[0].mxu0
      %v1259 = vadd.f32 %v539, %v1258
      %v1260 = vpop.f32.mrb[0].mxu0
      %1261 = vmatprep.mubr.f32.mxu0 0.0
      %1262 = vmatmul.mubr.f32.gmra.mrb[0].mxu0 %v1153
      %v1263 = vpop.f32.mrb[0].mxu0
      %v1264 = vadd.f32 %v540, %v1263
      %v1265 = vpop.f32.mrb[0].mxu0
      %1266 = vmatprep.mubr.f32.mxu0 0.0
      %1267 = vmatmul.mubr.f32.gmra.mrb[0].mxu0 %v1155
      %v1268 = vpop.f32.mrb[0].mxu0
      %v1269 = vadd.f32 %v541, %v1268
      %v1270 = vpop.f32.mrb[0].mxu0
      %1271 = vmatprep.mubr.f32.mxu0 0.0
      %1272 = vmatmul.mubr.f32.gmra.mrb[0].mxu0 %v1157
      %v1273 = vpop.f32.mrb[0].mxu0
      %v1274 = vadd.f32 %v542, %v1273
      %v1275 = vpop.f32.mrb[0].mxu0
      %1276 = vmatprep.mubr.f32.mxu0 0.0
      %1277 = vmatmul.mubr.f32.gmra.mrb[0].mxu0 %v1159
      %v1278 = vpop.f32.mrb[0].mxu0
      %v1279 = vadd.f32 %v543, %v1278
      %v1280 = vpop.f32.mrb[0].mxu0
      %1281 = vdwg.mxu0
      %v1282 = vsel %vm863, %v1244, -inf
      %1283 = vmax.xlane.f32.xlu0 %v1282
      %v1284 = vpop.xlane.xlu0 %1283
      %v1285 = vsel %vm863, %v1249, -inf
      %1286 = vmax.xlane.f32.xlu0 %v1285
      %v1287 = vpop.xlane.xlu0 %1286
      %v1288 = vsel %vm863, %v1254, -inf
      %1289 = vmax.xlane.f32.xlu0 %v1288
      %v1290 = vpop.xlane.xlu0 %1289
      %v1291 = vsel %vm863, %v1259, -inf
      %1292 = vmax.xlane.f32.xlu0 %v1291
      %v1293 = vpop.xlane.xlu0 %1292
      %v1294 = vsel %vm863, %v1264, -inf
      %1295 = vmax.xlane.f32.xlu0 %v1294
      %v1296 = vpop.xlane.xlu0 %1295
      %v1297 = vsel %vm863, %v1269, -inf
      %1298 = vmax.xlane.f32.xlu0 %v1297
      %v1299 = vpop.xlane.xlu0 %1298
      %v1300 = vsel %vm863, %v1274, -inf
      %1301 = vmax.xlane.f32.xlu0 %v1300
      %v1302 = vpop.xlane.xlu0 %1301
      %v1303 = vsel %vm863, %v1279, -inf
      %1304 = vmax.xlane.f32.xlu0 %v1303
      %v1305 = vpop.xlane.xlu0 %1304
      %v1306 = vsub.f32 %v1244, %v1284
      %v1307 = vsub.f32 %v1249, %v1287
      %v1308 = vsub.f32 %v1254, %v1290
      %v1309 = vsub.f32 %v1259, %v1293
      %v1310 = vsub.f32 %v1264, %v1296
      %v1311 = vsub.f32 %v1269, %v1299
      %v1312 = vsub.f32 %v1274, %v1302
      %v1313 = vsub.f32 %v1279, %v1305
      %v1314 = vmul.f32 %v1306, 1.442695
      %v1315 = vpow.pop %v1314
      %v1316 = vmul.f32 %v1307, 1.442695
      %v1317 = vpow.pop %v1316
      %v1318 = vmul.f32 %v1308, 1.442695
      %v1319 = vpow.pop %v1318
      %v1320 = vmul.f32 %v1309, 1.442695
      %v1321 = vpow.pop %v1320
      %v1322 = vmul.f32 %v1310, 1.442695
      %v1323 = vpow.pop %v1322
      %v1324 = vmul.f32 %v1311, 1.442695
      %v1325 = vpow.pop %v1324
      %v1326 = vmul.f32 %v1312, 1.442695
      %v1327 = vpow.pop %v1326
      %v1328 = vmul.f32 %v1313, 1.442695
      %v1329 = vpow.pop %v1328
      %v1330 = vsel %vm863, %v1315, 0.0
      %1331 = vadd.xlane.f32.xlu0 %v1330
      %v1332 = vpop.xlane.xlu0 %1331
      %v1333 = vsel %vm863, %v1317, 0.0
      %1334 = vadd.xlane.f32.xlu0 %v1333
      %v1335 = vpop.xlane.xlu0 %1334
      %v1336 = vsel %vm863, %v1319, 0.0
      %1337 = vadd.xlane.f32.xlu0 %v1336
      %v1338 = vpop.xlane.xlu0 %1337
      %v1339 = vsel %vm863, %v1321, 0.0
      %1340 = vadd.xlane.f32.xlu0 %v1339
      %v1341 = vpop.xlane.xlu0 %1340
      %v1342 = vsel %vm863, %v1323, 0.0
      %1343 = vadd.xlane.f32.xlu0 %v1342
      %v1344 = vpop.xlane.xlu0 %1343
      %v1345 = vsel %vm863, %v1325, 0.0
      %1346 = vadd.xlane.f32.xlu0 %v1345
      %v1347 = vpop.xlane.xlu0 %1346
      %v1348 = vsel %vm863, %v1327, 0.0
      %1349 = vadd.xlane.f32.xlu0 %v1348
      %v1350 = vpop.xlane.xlu0 %1349
      %v1351 = vsel %vm863, %v1329, 0.0
      %1352 = vadd.xlane.f32.xlu0 %v1351
      %v1353 = vpop.xlane.xlu0 %1352
      %v1354 = vrcp.pop %v1332
      %v1355 = vrcp.pop %v1335
      %v1356 = vrcp.pop %v1338
      %v1357 = vrcp.pop %v1341
      %v1358 = vrcp.pop %v1344
      %v1359 = vrcp.pop %v1347
      %v1360 = vrcp.pop %v1350
      %v1361 = vrcp.pop %v1353
      %v1362 = vmul.f32 %v1315, %v1354
      %v1363 = vmul.f32 %v1317, %v1355
      %v1364 = vmul.f32 %v1319, %v1356
      %v1365 = vmul.f32 %v1321, %v1357
      %v1366 = vmul.f32 %v1323, %v1358
      %v1367 = vmul.f32 %v1325, %v1359
      %v1368 = vmul.f32 %v1327, %v1360
      %v1369 = vmul.f32 %v1329, %v1361
      %s1370 = scalar_lea.vmem %s522, 64
      %1371 = vst.msk [vmem:[%s1370] sm:$0xff] %vm863, %v1362
      %1372 = vst.msk [vmem:[%s1370 + $0x8] sm:$0xff] %vm863, %v1363
      %1373 = vst.msk [vmem:[%s1370 + $0x10] sm:$0xff] %vm863, %v1364
      %1374 = vst.msk [vmem:[%s1370 + $0x18] sm:$0xff] %vm863, %v1365
      %1375 = vst.msk [vmem:[%s1370 + $0x20] sm:$0xff] %vm863, %v1366
      %1376 = vst.msk [vmem:[%s1370 + $0x28] sm:$0xff] %vm863, %v1367
      %1377 = vst.msk [vmem:[%s1370 + $0x30] sm:$0xff] %vm863, %v1368
      %1378 = vst.msk [vmem:[%s1370 + $0x38] sm:$0xff] %vm863, %v1369
      %1379 = vrot.lane.b32.xlu0 %v647, 56
      %v1380 = vpop.permute.xlu0 %1379
      %1381 = vrot.lane.b32.xlu0 %v652, 56
      %v1382 = vpop.permute.xlu0 %1381
      %1383 = vrot.lane.b32.xlu0 %v657, 56
      %v1384 = vpop.permute.xlu0 %1383
      %1385 = vrot.lane.b32.xlu0 %v662, 56
      %v1386 = vpop.permute.xlu0 %1385
      %1387 = vrot.lane.b32.xlu0 %v667, 56
      %v1388 = vpop.permute.xlu0 %1387
      %1389 = vrot.lane.b32.xlu0 %v672, 56
      %v1390 = vpop.permute.xlu0 %1389
      %1391 = vrot.lane.b32.xlu0 %v677, 56
      %v1392 = vpop.permute.xlu0 %1391
      %1393 = vrot.lane.b32.xlu0 %v682, 56
      %v1394 = vpop.permute.xlu0 %1393
      %v1404 = vsel %vm863, %v1362, 0
      %v1407 = vsel %vm863, %v1363, 0
      %v1410 = vsel %vm863, %v1364, 0
      %v1413 = vsel %vm863, %v1365, 0
      %v1416 = vsel %vm863, %v1366, 0
      %v1419 = vsel %vm863, %v1367, 0
      %v1422 = vsel %vm863, %v1368, 0
      %v1425 = vsel %vm863, %v1369, 0
      %1427 = vmatprep.subr.mxu0 0.0
      %1428 = vmatpush1.msra.mxu0 %v1380
      %1429 = vmatprep.subr.mxu0 0.0
      %1430 = vmatpush1.msra.mxu0 %v1382
      %1431 = vmatprep.subr.mxu0 0.0
      %1432 = vmatpush1.msra.mxu0 %v1384
      %1433 = vmatprep.subr.mxu0 0.0
      %1434 = vmatpush1.msra.mxu0 %v1386
      %1435 = vmatprep.subr.mxu0 0.0
      %1436 = vmatpush1.msra.mxu0 %v1388
      %1437 = vmatprep.subr.mxu0 0.0
      %1438 = vmatpush1.msra.mxu0 %v1390
      %1439 = vmatprep.subr.mxu0 0.0
      %1440 = vmatpush1.msra.mxu0 %v1392
      %1441 = vmatprep.subr.mxu0 0.0
      %1442 = vmatpush1.msra.mxu0 %v1394
      %1443 = vmatprep.subr.mxu0 0.0
      %1444 = vmatpush1.msra.mxu0 0.0
      %1445 = vmatprep.subr.mxu0 0.0
      %1446 = vmatpush1.msra.mxu0 0.0
      %1447 = vmatprep.subr.mxu0 0.0
      %1448 = vmatpush1.msra.mxu0 0.0
      %1449 = vmatprep.subr.mxu0 0.0
      %1450 = vmatpush1.msra.mxu0 0.0
      %1451 = vmatprep.subr.mxu0 0.0
      %1452 = vmatpush1.msra.mxu0 0.0
      %1453 = vmatprep.subr.mxu0 0.0
      %1454 = vmatpush1.msra.mxu0 0.0
      %1455 = vmatprep.subr.mxu0 0.0
      %1456 = vmatpush1.msra.mxu0 0.0
      %1457 = vmatprep.subr.mxu0 0.0
      %1458 = vmatpush1.msra.mxu0 0.0
      %1459 = vmatprep.subr.mxu0 0.0
      %1460 = vmatpush1.msra.mxu0 0.0
      %1461 = vmatprep.subr.mxu0 0.0
      %1462 = vmatpush1.msra.mxu0 0.0
      %1463 = vmatprep.subr.mxu0 0.0
      %1464 = vmatpush1.msra.mxu0 0.0
      %1465 = vmatprep.subr.mxu0 0.0
      %1466 = vmatpush1.msra.mxu0 0.0
      %1467 = vmatprep.subr.mxu0 0.0
      %1468 = vmatpush1.msra.mxu0 0.0
      %1469 = vmatprep.subr.mxu0 0.0
      %1470 = vmatpush1.msra.mxu0 0.0
      %1471 = vmatprep.subr.mxu0 0.0
      %1472 = vmatpush1.msra.mxu0 0.0
      %1473 = vmatprep.subr.mxu0 0.0
      %1474 = vmatpush1.msra.mxu0 0.0
      %1475 = vmatprep.subr.mxu0 0.0
      %1476 = vmatpush1.msra.mxu0 0.0
      %1477 = vmatprep.subr.mxu0 0.0
      %1478 = vmatpush1.msra.mxu0 0.0
      %1479 = vmatprep.subr.mxu0 0.0
      %1480 = vmatpush1.msra.mxu0 0.0
      %1481 = vmatprep.subr.mxu0 0.0
      %1482 = vmatpush1.msra.mxu0 0.0
      %1483 = vmatprep.subr.mxu0 0.0
      %1484 = vmatpush1.msra.mxu0 0.0
      %1485 = vmatprep.subr.mxu0 0.0
      %1486 = vmatpush1.msra.mxu0 0.0
      %1487 = vmatprep.subr.mxu0 0.0
      %1488 = vmatpush1.msra.mxu0 0.0
      %1489 = vmatprep.subr.mxu0 0.0
      %1490 = vmatpush1.msra.mxu0 0.0
      %1491 = vmatprep.mubr.f32.mxu0 0.0
      %1492 = vmatmul.mubr.f32.gmra.mrb[0].mxu0 %v1404
      %v1493 = vpop.f32.mrb[0].mxu0
      %v1494 = vadd.f32 0.0, %v1493
      %v1495 = vpop.f32.mrb[0].mxu0
      %1496 = vmatprep.mubr.f32.mxu0 0.0
      %1497 = vmatmul.mubr.f32.gmra.mrb[0].mxu0 %v1407
      %v1498 = vpop.f32.mrb[0].mxu0
      %v1499 = vadd.f32 0.0, %v1498
      %v1500 = vpop.f32.mrb[0].mxu0
      %1501 = vmatprep.mubr.f32.mxu0 0.0
      %1502 = vmatmul.mubr.f32.gmra.mrb[0].mxu0 %v1410
      %v1503 = vpop.f32.mrb[0].mxu0
      %v1504 = vadd.f32 0.0, %v1503
      %v1505 = vpop.f32.mrb[0].mxu0
      %1506 = vmatprep.mubr.f32.mxu0 0.0
      %1507 = vmatmul.mubr.f32.gmra.mrb[0].mxu0 %v1413
      %v1508 = vpop.f32.mrb[0].mxu0
      %v1509 = vadd.f32 0.0, %v1508
      %v1510 = vpop.f32.mrb[0].mxu0
      %1511 = vmatprep.mubr.f32.mxu0 0.0
      %1512 = vmatmul.mubr.f32.gmra.mrb[0].mxu0 %v1416
      %v1513 = vpop.f32.mrb[0].mxu0
      %v1514 = vadd.f32 0.0, %v1513
      %v1515 = vpop.f32.mrb[0].mxu0
      %1516 = vmatprep.mubr.f32.mxu0 0.0
      %1517 = vmatmul.mubr.f32.gmra.mrb[0].mxu0 %v1419
      %v1518 = vpop.f32.mrb[0].mxu0
      %v1519 = vadd.f32 0.0, %v1518
      %v1520 = vpop.f32.mrb[0].mxu0
      %1521 = vmatprep.mubr.f32.mxu0 0.0
      %1522 = vmatmul.mubr.f32.gmra.mrb[0].mxu0 %v1422
      %v1523 = vpop.f32.mrb[0].mxu0
      %v1524 = vadd.f32 0.0, %v1523
      %v1525 = vpop.f32.mrb[0].mxu0
      %1526 = vmatprep.mubr.f32.mxu0 0.0
      %1527 = vmatmul.mubr.f32.gmra.mrb[0].mxu0 %v1425
      %v1528 = vpop.f32.mrb[0].mxu0
      %v1529 = vadd.f32 0.0, %v1528
      %v1530 = vpop.f32.mrb[0].mxu0
      %1531 = vdwg.mxu0
      %1532 = vrot.lane.b32.xlu0 %v685, 112
      %v1533 = vpop.permute.xlu0 %1532
      %1534 = vrot.lane.b32.xlu0 %v686, 112
      %v1535 = vpop.permute.xlu0 %1534
      %1536 = vrot.lane.b32.xlu0 %v687, 112
      %v1537 = vpop.permute.xlu0 %1536
      %1538 = vrot.lane.b32.xlu0 %v688, 112
      %v1539 = vpop.permute.xlu0 %1538
      %1540 = vrot.lane.b32.xlu0 %v689, 112
      %v1541 = vpop.permute.xlu0 %1540
      %1542 = vrot.lane.b32.xlu0 %v690, 112
      %v1543 = vpop.permute.xlu0 %1542
      %1544 = vrot.lane.b32.xlu0 %v691, 112
      %v1545 = vpop.permute.xlu0 %1544
      %1546 = vrot.lane.b32.xlu0 %v692, 112
      %v1547 = vpop.permute.xlu0 %1546
      %1548 = vrot.lane.b32.xlu0 %v647, 80
      %v1549 = vpop.permute.xlu0 %1548
      %1550 = vrot.lane.b32.xlu0 %v652, 80
      %v1551 = vpop.permute.xlu0 %1550
      %1552 = vrot.lane.b32.xlu0 %v657, 80
      %v1553 = vpop.permute.xlu0 %1552
      %1554 = vrot.lane.b32.xlu0 %v662, 80
      %v1555 = vpop.permute.xlu0 %1554
      %1556 = vrot.lane.b32.xlu0 %v667, 80
      %v1557 = vpop.permute.xlu0 %1556
      %1558 = vrot.lane.b32.xlu0 %v672, 80
      %v1559 = vpop.permute.xlu0 %1558
      %1560 = vrot.lane.b32.xlu0 %v677, 80
      %v1561 = vpop.permute.xlu0 %1560
      %1562 = vrot.lane.b32.xlu0 %v682, 80
      %v1563 = vpop.permute.xlu0 %1562
      %v1564 = vsel %vm717, %v1533, 0
      %v1566 = vsel %vm717, %v1535, 0
      %v1568 = vsel %vm717, %v1537, 0
      %v1570 = vsel %vm717, %v1539, 0
      %v1572 = vsel %vm717, %v1541, 0
      %v1574 = vsel %vm717, %v1543, 0
      %v1576 = vsel %vm717, %v1545, 0
      %v1578 = vsel %vm717, %v1547, 0
      %v1580 = vsel %vm717, %v1549, 0
      %v1582 = vsel %vm717, %v1551, 0
      %v1584 = vsel %vm717, %v1553, 0
      %v1586 = vsel %vm717, %v1555, 0
      %v1588 = vsel %vm717, %v1557, 0
      %v1590 = vsel %vm717, %v1559, 0
      %v1592 = vsel %vm717, %v1561, 0
      %v1594 = vsel %vm717, %v1563, 0
      %1596 = vmatprep.subr.mxu0 0.0
      %1597 = vmatpush1.xpose.msra.mxu0 %v1580
      %1598 = vmatprep.subr.mxu0 0.0
      %1599 = vmatpush1.xpose.msra.mxu0 %v1582
      %1600 = vmatprep.subr.mxu0 0.0
      %1601 = vmatpush1.xpose.msra.mxu0 %v1584
      %1602 = vmatprep.subr.mxu0 0.0
      %1603 = vmatpush1.xpose.msra.mxu0 %v1586
      %1604 = vmatprep.subr.mxu0 0.0
      %1605 = vmatpush1.xpose.msra.mxu0 %v1588
      %1606 = vmatprep.subr.mxu0 0.0
      %1607 = vmatpush1.xpose.msra.mxu0 %v1590
      %1608 = vmatprep.subr.mxu0 0.0
      %1609 = vmatpush1.xpose.msra.mxu0 %v1592
      %1610 = vmatprep.subr.mxu0 0.0
      %1611 = vmatpush1.xpose.msra.mxu0 %v1594
      %1612 = vmatprep.subr.mxu0 0.0
      %1613 = vmatpush1.xpose.msra.mxu0 0.0
      %1614 = vmatprep.subr.mxu0 0.0
      %1615 = vmatpush1.xpose.msra.mxu0 0.0
      %1616 = vmatprep.subr.mxu0 0.0
      %1617 = vmatpush1.xpose.msra.mxu0 0.0
      %1618 = vmatprep.subr.mxu0 0.0
      %1619 = vmatpush1.xpose.msra.mxu0 0.0
      %1620 = vmatprep.subr.mxu0 0.0
      %1621 = vmatpush1.xpose.msra.mxu0 0.0
      %1622 = vmatprep.subr.mxu0 0.0
      %1623 = vmatpush1.xpose.msra.mxu0 0.0
      %1624 = vmatprep.subr.mxu0 0.0
      %1625 = vmatpush1.xpose.msra.mxu0 0.0
      %1626 = vmatprep.subr.mxu0 0.0
      %1627 = vmatpush1.xpose.msra.mxu0 0.0
      %1628 = vmatprep.subr.mxu0 0.0
      %1629 = vmatpush1.xpose.msra.mxu0 0.0
      %1630 = vmatprep.subr.mxu0 0.0
      %1631 = vmatpush1.xpose.msra.mxu0 0.0
      %1632 = vmatprep.subr.mxu0 0.0
      %1633 = vmatpush1.xpose.msra.mxu0 0.0
      %1634 = vmatprep.subr.mxu0 0.0
      %1635 = vmatpush1.xpose.msra.mxu0 0.0
      %1636 = vmatprep.subr.mxu0 0.0
      %1637 = vmatpush1.xpose.msra.mxu0 0.0
      %1638 = vmatprep.subr.mxu0 0.0
      %1639 = vmatpush1.xpose.msra.mxu0 0.0
      %1640 = vmatprep.subr.mxu0 0.0
      %1641 = vmatpush1.xpose.msra.mxu0 0.0
      %1642 = vmatprep.subr.mxu0 0.0
      %1643 = vmatpush1.xpose.msra.mxu0 0.0
      %1644 = vmatprep.subr.mxu0 0.0
      %1645 = vmatpush1.xpose.msra.mxu0 0.0
      %1646 = vmatprep.subr.mxu0 0.0
      %1647 = vmatpush1.xpose.msra.mxu0 0.0
      %1648 = vmatprep.subr.mxu0 0.0
      %1649 = vmatpush1.xpose.msra.mxu0 0.0
      %1650 = vmatprep.subr.mxu0 0.0
      %1651 = vmatpush1.xpose.msra.mxu0 0.0
      %1652 = vmatprep.subr.mxu0 0.0
      %1653 = vmatpush1.xpose.msra.mxu0 0.0
      %1654 = vmatprep.subr.mxu0 0.0
      %1655 = vmatpush1.xpose.msra.mxu0 0.0
      %1656 = vmatprep.subr.mxu0 0.0
      %1657 = vmatpush1.xpose.msra.mxu0 0.0
      %1658 = vmatprep.subr.mxu0 0.0
      %1659 = vmatpush1.xpose.msra.mxu0 0.0
      %1660 = vmatprep.mubr.f32.mxu0 0.0
      %1661 = vmatmul.mubr.f32.gmra.mrb[0].mxu0 %v1564
      %v1662 = vpop.f32.mrb[0].mxu0
      %v1663 = vadd.f32 %v536, %v1662
      %v1664 = vpop.f32.mrb[0].mxu0
      %1665 = vmatprep.mubr.f32.mxu0 0.0
      %1666 = vmatmul.mubr.f32.gmra.mrb[0].mxu0 %v1566
      %v1667 = vpop.f32.mrb[0].mxu0
      %v1668 = vadd.f32 %v537, %v1667
      %v1669 = vpop.f32.mrb[0].mxu0
      %1670 = vmatprep.mubr.f32.mxu0 0.0
      %1671 = vmatmul.mubr.f32.gmra.mrb[0].mxu0 %v1568
      %v1672 = vpop.f32.mrb[0].mxu0
      %v1673 = vadd.f32 %v538, %v1672
      %v1674 = vpop.f32.mrb[0].mxu0
      %1675 = vmatprep.mubr.f32.mxu0 0.0
      %1676 = vmatmul.mubr.f32.gmra.mrb[0].mxu0 %v1570
      %v1677 = vpop.f32.mrb[0].mxu0
      %v1678 = vadd.f32 %v539, %v1677
      %v1679 = vpop.f32.mrb[0].mxu0
      %1680 = vmatprep.mubr.f32.mxu0 0.0
      %1681 = vmatmul.mubr.f32.gmra.mrb[0].mxu0 %v1572
      %v1682 = vpop.f32.mrb[0].mxu0
      %v1683 = vadd.f32 %v540, %v1682
      %v1684 = vpop.f32.mrb[0].mxu0
      %1685 = vmatprep.mubr.f32.mxu0 0.0
      %1686 = vmatmul.mubr.f32.gmra.mrb[0].mxu0 %v1574
      %v1687 = vpop.f32.mrb[0].mxu0
      %v1688 = vadd.f32 %v541, %v1687
      %v1689 = vpop.f32.mrb[0].mxu0
      %1690 = vmatprep.mubr.f32.mxu0 0.0
      %1691 = vmatmul.mubr.f32.gmra.mrb[0].mxu0 %v1576
      %v1692 = vpop.f32.mrb[0].mxu0
      %v1693 = vadd.f32 %v542, %v1692
      %v1694 = vpop.f32.mrb[0].mxu0
      %1695 = vmatprep.mubr.f32.mxu0 0.0
      %1696 = vmatmul.mubr.f32.gmra.mrb[0].mxu0 %v1578
      %v1697 = vpop.f32.mrb[0].mxu0
      %v1698 = vadd.f32 %v543, %v1697
      %v1699 = vpop.f32.mrb[0].mxu0
      %1700 = vdwg.mxu0
      %v1701 = vsel %vm863, %v1663, -inf
      %1702 = vmax.xlane.f32.xlu0 %v1701
      %v1703 = vpop.xlane.xlu0 %1702
      %v1704 = vsel %vm863, %v1668, -inf
      %1705 = vmax.xlane.f32.xlu0 %v1704
      %v1706 = vpop.xlane.xlu0 %1705
      %v1707 = vsel %vm863, %v1673, -inf
      %1708 = vmax.xlane.f32.xlu0 %v1707
      %v1709 = vpop.xlane.xlu0 %1708
      %v1710 = vsel %vm863, %v1678, -inf
      %1711 = vmax.xlane.f32.xlu0 %v1710
      %v1712 = vpop.xlane.xlu0 %1711
      %v1713 = vsel %vm863, %v1683, -inf
      %1714 = vmax.xlane.f32.xlu0 %v1713
      %v1715 = vpop.xlane.xlu0 %1714
      %v1716 = vsel %vm863, %v1688, -inf
      %1717 = vmax.xlane.f32.xlu0 %v1716
      %v1718 = vpop.xlane.xlu0 %1717
      %v1719 = vsel %vm863, %v1693, -inf
      %1720 = vmax.xlane.f32.xlu0 %v1719
      %v1721 = vpop.xlane.xlu0 %1720
      %v1722 = vsel %vm863, %v1698, -inf
      %1723 = vmax.xlane.f32.xlu0 %v1722
      %v1724 = vpop.xlane.xlu0 %1723
      %v1725 = vsub.f32 %v1663, %v1703
      %v1726 = vsub.f32 %v1668, %v1706
      %v1727 = vsub.f32 %v1673, %v1709
      %v1728 = vsub.f32 %v1678, %v1712
      %v1729 = vsub.f32 %v1683, %v1715
      %v1730 = vsub.f32 %v1688, %v1718
      %v1731 = vsub.f32 %v1693, %v1721
      %v1732 = vsub.f32 %v1698, %v1724
      %v1733 = vmul.f32 %v1725, 1.442695
      %v1734 = vpow.pop %v1733
      %v1735 = vmul.f32 %v1726, 1.442695
      %v1736 = vpow.pop %v1735
      %v1737 = vmul.f32 %v1727, 1.442695
      %v1738 = vpow.pop %v1737
      %v1739 = vmul.f32 %v1728, 1.442695
      %v1740 = vpow.pop %v1739
      %v1741 = vmul.f32 %v1729, 1.442695
      %v1742 = vpow.pop %v1741
      %v1743 = vmul.f32 %v1730, 1.442695
      %v1744 = vpow.pop %v1743
      %v1745 = vmul.f32 %v1731, 1.442695
      %v1746 = vpow.pop %v1745
      %v1747 = vmul.f32 %v1732, 1.442695
      %v1748 = vpow.pop %v1747
      %v1749 = vsel %vm863, %v1734, 0.0
      %1750 = vadd.xlane.f32.xlu0 %v1749
      %v1751 = vpop.xlane.xlu0 %1750
      %v1752 = vsel %vm863, %v1736, 0.0
      %1753 = vadd.xlane.f32.xlu0 %v1752
      %v1754 = vpop.xlane.xlu0 %1753
      %v1755 = vsel %vm863, %v1738, 0.0
      %1756 = vadd.xlane.f32.xlu0 %v1755
      %v1757 = vpop.xlane.xlu0 %1756
      %v1758 = vsel %vm863, %v1740, 0.0
      %1759 = vadd.xlane.f32.xlu0 %v1758
      %v1760 = vpop.xlane.xlu0 %1759
      %v1761 = vsel %vm863, %v1742, 0.0
      %1762 = vadd.xlane.f32.xlu0 %v1761
      %v1763 = vpop.xlane.xlu0 %1762
      %v1764 = vsel %vm863, %v1744, 0.0
      %1765 = vadd.xlane.f32.xlu0 %v1764
      %v1766 = vpop.xlane.xlu0 %1765
      %v1767 = vsel %vm863, %v1746, 0.0
      %1768 = vadd.xlane.f32.xlu0 %v1767
      %v1769 = vpop.xlane.xlu0 %1768
      %v1770 = vsel %vm863, %v1748, 0.0
      %1771 = vadd.xlane.f32.xlu0 %v1770
      %v1772 = vpop.xlane.xlu0 %1771
      %v1773 = vrcp.pop %v1751
      %v1774 = vrcp.pop %v1754
      %v1775 = vrcp.pop %v1757
      %v1776 = vrcp.pop %v1760
      %v1777 = vrcp.pop %v1763
      %v1778 = vrcp.pop %v1766
      %v1779 = vrcp.pop %v1769
      %v1780 = vrcp.pop %v1772
      %v1781 = vmul.f32 %v1734, %v1773
      %v1782 = vmul.f32 %v1736, %v1774
      %v1783 = vmul.f32 %v1738, %v1775
      %v1784 = vmul.f32 %v1740, %v1776
      %v1785 = vmul.f32 %v1742, %v1777
      %v1786 = vmul.f32 %v1744, %v1778
      %v1787 = vmul.f32 %v1746, %v1779
      %v1788 = vmul.f32 %v1748, %v1780
      %s1789 = scalar_lea.vmem %s522, 128
      %1790 = vst.msk [vmem:[%s1789] sm:$0xff] %vm863, %v1781
      %1791 = vst.msk [vmem:[%s1789 + $0x8] sm:$0xff] %vm863, %v1782
      %1792 = vst.msk [vmem:[%s1789 + $0x10] sm:$0xff] %vm863, %v1783
      %1793 = vst.msk [vmem:[%s1789 + $0x18] sm:$0xff] %vm863, %v1784
      %1794 = vst.msk [vmem:[%s1789 + $0x20] sm:$0xff] %vm863, %v1785
      %1795 = vst.msk [vmem:[%s1789 + $0x28] sm:$0xff] %vm863, %v1786
      %1796 = vst.msk [vmem:[%s1789 + $0x30] sm:$0xff] %vm863, %v1787
      %1797 = vst.msk [vmem:[%s1789 + $0x38] sm:$0xff] %vm863, %v1788
      %1798 = vrot.lane.b32.xlu0 %v647, 48
      %v1799 = vpop.permute.xlu0 %1798
      %1800 = vrot.lane.b32.xlu0 %v652, 48
      %v1801 = vpop.permute.xlu0 %1800
      %1802 = vrot.lane.b32.xlu0 %v657, 48
      %v1803 = vpop.permute.xlu0 %1802
      %1804 = vrot.lane.b32.xlu0 %v662, 48
      %v1805 = vpop.permute.xlu0 %1804
      %1806 = vrot.lane.b32.xlu0 %v667, 48
      %v1807 = vpop.permute.xlu0 %1806
      %1808 = vrot.lane.b32.xlu0 %v672, 48
      %v1809 = vpop.permute.xlu0 %1808
      %1810 = vrot.lane.b32.xlu0 %v677, 48
      %v1811 = vpop.permute.xlu0 %1810
      %1812 = vrot.lane.b32.xlu0 %v682, 48
      %v1813 = vpop.permute.xlu0 %1812
      %v1823 = vsel %vm863, %v1781, 0
      %v1826 = vsel %vm863, %v1782, 0
      %v1829 = vsel %vm863, %v1783, 0
      %v1832 = vsel %vm863, %v1784, 0
      %v1835 = vsel %vm863, %v1785, 0
      %v1838 = vsel %vm863, %v1786, 0
      %v1841 = vsel %vm863, %v1787, 0
      %v1844 = vsel %vm863, %v1788, 0
      %1846 = vmatprep.subr.mxu0 0.0
      %1847 = vmatpush1.msra.mxu0 %v1799
      %1848 = vmatprep.subr.mxu0 0.0
      %1849 = vmatpush1.msra.mxu0 %v1801
      %1850 = vmatprep.subr.mxu0 0.0
      %1851 = vmatpush1.msra.mxu0 %v1803
      %1852 = vmatprep.subr.mxu0 0.0
      %1853 = vmatpush1.msra.mxu0 %v1805
      %1854 = vmatprep.subr.mxu0 0.0
      %1855 = vmatpush1.msra.mxu0 %v1807
      %1856 = vmatprep.subr.mxu0 0.0
      %1857 = vmatpush1.msra.mxu0 %v1809
      %1858 = vmatprep.subr.mxu0 0.0
      %1859 = vmatpush1.msra.mxu0 %v1811
      %1860 = vmatprep.subr.mxu0 0.0
      %1861 = vmatpush1.msra.mxu0 %v1813
      %1862 = vmatprep.subr.mxu0 0.0
      %1863 = vmatpush1.msra.mxu0 0.0
      %1864 = vmatprep.subr.mxu0 0.0
      %1865 = vmatpush1.msra.mxu0 0.0
      %1866 = vmatprep.subr.mxu0 0.0
      %1867 = vmatpush1.msra.mxu0 0.0
      %1868 = vmatprep.subr.mxu0 0.0
      %1869 = vmatpush1.msra.mxu0 0.0
      %1870 = vmatprep.subr.mxu0 0.0
      %1871 = vmatpush1.msra.mxu0 0.0
      %1872 = vmatprep.subr.mxu0 0.0
      %1873 = vmatpush1.msra.mxu0 0.0
      %1874 = vmatprep.subr.mxu0 0.0
      %1875 = vmatpush1.msra.mxu0 0.0
      %1876 = vmatprep.subr.mxu0 0.0
      %1877 = vmatpush1.msra.mxu0 0.0
      %1878 = vmatprep.subr.mxu0 0.0
      %1879 = vmatpush1.msra.mxu0 0.0
      %1880 = vmatprep.subr.mxu0 0.0
      %1881 = vmatpush1.msra.mxu0 0.0
      %1882 = vmatprep.subr.mxu0 0.0
      %1883 = vmatpush1.msra.mxu0 0.0
      %1884 = vmatprep.subr.mxu0 0.0
      %1885 = vmatpush1.msra.mxu0 0.0
      %1886 = vmatprep.subr.mxu0 0.0
      %1887 = vmatpush1.msra.mxu0 0.0
      %1888 = vmatprep.subr.mxu0 0.0
      %1889 = vmatpush1.msra.mxu0 0.0
      %1890 = vmatprep.subr.mxu0 0.0
      %1891 = vmatpush1.msra.mxu0 0.0
      %1892 = vmatprep.subr.mxu0 0.0
      %1893 = vmatpush1.msra.mxu0 0.0
      %1894 = vmatprep.subr.mxu0 0.0
      %1895 = vmatpush1.msra.mxu0 0.0
      %1896 = vmatprep.subr.mxu0 0.0
      %1897 = vmatpush1.msra.mxu0 0.0
      %1898 = vmatprep.subr.mxu0 0.0
      %1899 = vmatpush1.msra.mxu0 0.0
      %1900 = vmatprep.subr.mxu0 0.0
      %1901 = vmatpush1.msra.mxu0 0.0
      %1902 = vmatprep.subr.mxu0 0.0
      %1903 = vmatpush1.msra.mxu0 0.0
      %1904 = vmatprep.subr.mxu0 0.0
      %1905 = vmatpush1.msra.mxu0 0.0
      %1906 = vmatprep.subr.mxu0 0.0
      %1907 = vmatpush1.msra.mxu0 0.0
      %1908 = vmatprep.subr.mxu0 0.0
      %1909 = vmatpush1.msra.mxu0 0.0
      %1910 = vmatprep.mubr.f32.mxu0 0.0
      %1911 = vmatmul.mubr.f32.gmra.mrb[0].mxu0 %v1823
      %v1912 = vpop.f32.mrb[0].mxu0
      %v1913 = vadd.f32 0.0, %v1912
      %v1914 = vpop.f32.mrb[0].mxu0
      %1915 = vmatprep.mubr.f32.mxu0 0.0
      %1916 = vmatmul.mubr.f32.gmra.mrb[0].mxu0 %v1826
      %v1917 = vpop.f32.mrb[0].mxu0
      %v1918 = vadd.f32 0.0, %v1917
      %v1919 = vpop.f32.mrb[0].mxu0
      %1920 = vmatprep.mubr.f32.mxu0 0.0
      %1921 = vmatmul.mubr.f32.gmra.mrb[0].mxu0 %v1829
      %v1922 = vpop.f32.mrb[0].mxu0
      %v1923 = vadd.f32 0.0, %v1922
      %v1924 = vpop.f32.mrb[0].mxu0
      %1925 = vmatprep.mubr.f32.mxu0 0.0
      %1926 = vmatmul.mubr.f32.gmra.mrb[0].mxu0 %v1832
      %v1927 = vpop.f32.mrb[0].mxu0
      %v1928 = vadd.f32 0.0, %v1927
      %v1929 = vpop.f32.mrb[0].mxu0
      %1930 = vmatprep.mubr.f32.mxu0 0.0
      %1931 = vmatmul.mubr.f32.gmra.mrb[0].mxu0 %v1835
      %v1932 = vpop.f32.mrb[0].mxu0
      %v1933 = vadd.f32 0.0, %v1932
      %v1934 = vpop.f32.mrb[0].mxu0
      %1935 = vmatprep.mubr.f32.mxu0 0.0
      %1936 = vmatmul.mubr.f32.gmra.mrb[0].mxu0 %v1838
      %v1937 = vpop.f32.mrb[0].mxu0
      %v1938 = vadd.f32 0.0, %v1937
      %v1939 = vpop.f32.mrb[0].mxu0
      %1940 = vmatprep.mubr.f32.mxu0 0.0
      %1941 = vmatmul.mubr.f32.gmra.mrb[0].mxu0 %v1841
      %v1942 = vpop.f32.mrb[0].mxu0
      %v1943 = vadd.f32 0.0, %v1942
      %v1944 = vpop.f32.mrb[0].mxu0
      %1945 = vmatprep.mubr.f32.mxu0 0.0
      %1946 = vmatmul.mubr.f32.gmra.mrb[0].mxu0 %v1844
      %v1947 = vpop.f32.mrb[0].mxu0
      %v1948 = vadd.f32 0.0, %v1947
      %v1949 = vpop.f32.mrb[0].mxu0
      %1950 = vdwg.mxu0
      %1951 = vrot.lane.b32.xlu0 %v685, 104
      %v1952 = vpop.permute.xlu0 %1951
      %1953 = vrot.lane.b32.xlu0 %v686, 104
      %v1954 = vpop.permute.xlu0 %1953
      %1955 = vrot.lane.b32.xlu0 %v687, 104
      %v1956 = vpop.permute.xlu0 %1955
      %1957 = vrot.lane.b32.xlu0 %v688, 104
      %v1958 = vpop.permute.xlu0 %1957
      %1959 = vrot.lane.b32.xlu0 %v689, 104
      %v1960 = vpop.permute.xlu0 %1959
      %1961 = vrot.lane.b32.xlu0 %v690, 104
      %v1962 = vpop.permute.xlu0 %1961
      %1963 = vrot.lane.b32.xlu0 %v691, 104
      %v1964 = vpop.permute.xlu0 %1963
      %1965 = vrot.lane.b32.xlu0 %v692, 104
      %v1966 = vpop.permute.xlu0 %1965
      %1967 = vrot.lane.b32.xlu0 %v647, 72
      %v1968 = vpop.permute.xlu0 %1967
      %1969 = vrot.lane.b32.xlu0 %v652, 72
      %v1970 = vpop.permute.xlu0 %1969
      %1971 = vrot.lane.b32.xlu0 %v657, 72
      %v1972 = vpop.permute.xlu0 %1971
      %1973 = vrot.lane.b32.xlu0 %v662, 72
      %v1974 = vpop.permute.xlu0 %1973
      %1975 = vrot.lane.b32.xlu0 %v667, 72
      %v1976 = vpop.permute.xlu0 %1975
      %1977 = vrot.lane.b32.xlu0 %v672, 72
      %v1978 = vpop.permute.xlu0 %1977
      %1979 = vrot.lane.b32.xlu0 %v677, 72
      %v1980 = vpop.permute.xlu0 %1979
      %1981 = vrot.lane.b32.xlu0 %v682, 72
      %v1982 = vpop.permute.xlu0 %1981
      %v1983 = vsel %vm717, %v1952, 0
      %v1985 = vsel %vm717, %v1954, 0
      %v1987 = vsel %vm717, %v1956, 0
      %v1989 = vsel %vm717, %v1958, 0
      %v1991 = vsel %vm717, %v1960, 0
      %v1993 = vsel %vm717, %v1962, 0
      %v1995 = vsel %vm717, %v1964, 0
      %v1997 = vsel %vm717, %v1966, 0
      %v1999 = vsel %vm717, %v1968, 0
      %v2001 = vsel %vm717, %v1970, 0
      %v2003 = vsel %vm717, %v1972, 0
      %v2005 = vsel %vm717, %v1974, 0
      %v2007 = vsel %vm717, %v1976, 0
      %v2009 = vsel %vm717, %v1978, 0
      %v2011 = vsel %vm717, %v1980, 0
      %v2013 = vsel %vm717, %v1982, 0
      %2015 = vmatprep.subr.mxu0 0.0
      %2016 = vmatpush1.xpose.msra.mxu0 %v1999
      %2017 = vmatprep.subr.mxu0 0.0
      %2018 = vmatpush1.xpose.msra.mxu0 %v2001
      %2019 = vmatprep.subr.mxu0 0.0
      %2020 = vmatpush1.xpose.msra.mxu0 %v2003
      %2021 = vmatprep.subr.mxu0 0.0
      %2022 = vmatpush1.xpose.msra.mxu0 %v2005
      %2023 = vmatprep.subr.mxu0 0.0
      %2024 = vmatpush1.xpose.msra.mxu0 %v2007
      %2025 = vmatprep.subr.mxu0 0.0
      %2026 = vmatpush1.xpose.msra.mxu0 %v2009
      %2027 = vmatprep.subr.mxu0 0.0
      %2028 = vmatpush1.xpose.msra.mxu0 %v2011
      %2029 = vmatprep.subr.mxu0 0.0
      %2030 = vmatpush1.xpose.msra.mxu0 %v2013
      %2031 = vmatprep.subr.mxu0 0.0
      %2032 = vmatpush1.xpose.msra.mxu0 0.0
      %2033 = vmatprep.subr.mxu0 0.0
      %2034 = vmatpush1.xpose.msra.mxu0 0.0
      %2035 = vmatprep.subr.mxu0 0.0
      %2036 = vmatpush1.xpose.msra.mxu0 0.0
      %2037 = vmatprep.subr.mxu0 0.0
      %2038 = vmatpush1.xpose.msra.mxu0 0.0
      %2039 = vmatprep.subr.mxu0 0.0
      %2040 = vmatpush1.xpose.msra.mxu0 0.0
      %2041 = vmatprep.subr.mxu0 0.0
      %2042 = vmatpush1.xpose.msra.mxu0 0.0
      %2043 = vmatprep.subr.mxu0 0.0
      %2044 = vmatpush1.xpose.msra.mxu0 0.0
      %2045 = vmatprep.subr.mxu0 0.0
      %2046 = vmatpush1.xpose.msra.mxu0 0.0
      %2047 = vmatprep.subr.mxu0 0.0
      %2048 = vmatpush1.xpose.msra.mxu0 0.0
      %2049 = vmatprep.subr.mxu0 0.0
      %2050 = vmatpush1.xpose.msra.mxu0 0.0
      %2051 = vmatprep.subr.mxu0 0.0
      %2052 = vmatpush1.xpose.msra.mxu0 0.0
      %2053 = vmatprep.subr.mxu0 0.0
      %2054 = vmatpush1.xpose.msra.mxu0 0.0
      %2055 = vmatprep.subr.mxu0 0.0
      %2056 = vmatpush1.xpose.msra.mxu0 0.0
      %2057 = vmatprep.subr.mxu0 0.0
      %2058 = vmatpush1.xpose.msra.mxu0 0.0
      %2059 = vmatprep.subr.mxu0 0.0
      %2060 = vmatpush1.xpose.msra.mxu0 0.0
      %2061 = vmatprep.subr.mxu0 0.0
      %2062 = vmatpush1.xpose.msra.mxu0 0.0
      %2063 = vmatprep.subr.mxu0 0.0
      %2064 = vmatpush1.xpose.msra.mxu0 0.0
      %2065 = vmatprep.subr.mxu0 0.0
      %2066 = vmatpush1.xpose.msra.mxu0 0.0
      %2067 = vmatprep.subr.mxu0 0.0
      %2068 = vmatpush1.xpose.msra.mxu0 0.0
      %2069 = vmatprep.subr.mxu0 0.0
      %2070 = vmatpush1.xpose.msra.mxu0 0.0
      %2071 = vmatprep.subr.mxu0 0.0
      %2072 = vmatpush1.xpose.msra.mxu0 0.0
      %2073 = vmatprep.subr.mxu0 0.0
      %2074 = vmatpush1.xpose.msra.mxu0 0.0
      %2075 = vmatprep.subr.mxu0 0.0
      %2076 = vmatpush1.xpose.msra.mxu0 0.0
      %2077 = vmatprep.subr.mxu0 0.0
      %2078 = vmatpush1.xpose.msra.mxu0 0.0
      %2079 = vmatprep.mubr.f32.mxu0 0.0
      %2080 = vmatmul.mubr.f32.gmra.mrb[0].mxu0 %v1983
      %v2081 = vpop.f32.mrb[0].mxu0
      %v2082 = vadd.f32 %v536, %v2081
      %v2083 = vpop.f32.mrb[0].mxu0
      %2084 = vmatprep.mubr.f32.mxu0 0.0
      %2085 = vmatmul.mubr.f32.gmra.mrb[0].mxu0 %v1985
      %v2086 = vpop.f32.mrb[0].mxu0
      %v2087 = vadd.f32 %v537, %v2086
      %v2088 = vpop.f32.mrb[0].mxu0
      %2089 = vmatprep.mubr.f32.mxu0 0.0
      %2090 = vmatmul.mubr.f32.gmra.mrb[0].mxu0 %v1987
      %v2091 = vpop.f32.mrb[0].mxu0
      %v2092 = vadd.f32 %v538, %v2091
      %v2093 = vpop.f32.mrb[0].mxu0
      %2094 = vmatprep.mubr.f32.mxu0 0.0
      %2095 = vmatmul.mubr.f32.gmra.mrb[0].mxu0 %v1989
      %v2096 = vpop.f32.mrb[0].mxu0
      %v2097 = vadd.f32 %v539, %v2096
      %v2098 = vpop.f32.mrb[0].mxu0
      %2099 = vmatprep.mubr.f32.mxu0 0.0
      %2100 = vmatmul.mubr.f32.gmra.mrb[0].mxu0 %v1991
      %v2101 = vpop.f32.mrb[0].mxu0
      %v2102 = vadd.f32 %v540, %v2101
      %v2103 = vpop.f32.mrb[0].mxu0
      %2104 = vmatprep.mubr.f32.mxu0 0.0
      %2105 = vmatmul.mubr.f32.gmra.mrb[0].mxu0 %v1993
      %v2106 = vpop.f32.mrb[0].mxu0
      %v2107 = vadd.f32 %v541, %v2106
      %v2108 = vpop.f32.mrb[0].mxu0
      %2109 = vmatprep.mubr.f32.mxu0 0.0
      %2110 = vmatmul.mubr.f32.gmra.mrb[0].mxu0 %v1995
      %v2111 = vpop.f32.mrb[0].mxu0
      %v2112 = vadd.f32 %v542, %v2111
      %v2113 = vpop.f32.mrb[0].mxu0
      %2114 = vmatprep.mubr.f32.mxu0 0.0
      %2115 = vmatmul.mubr.f32.gmra.mrb[0].mxu0 %v1997
      %v2116 = vpop.f32.mrb[0].mxu0
      %v2117 = vadd.f32 %v543, %v2116
      %v2118 = vpop.f32.mrb[0].mxu0
      %2119 = vdwg.mxu0
      %v2120 = vsel %vm863, %v2082, -inf
      %2121 = vmax.xlane.f32.xlu0 %v2120
      %v2122 = vpop.xlane.xlu0 %2121
      %v2123 = vsel %vm863, %v2087, -inf
      %2124 = vmax.xlane.f32.xlu0 %v2123
      %v2125 = vpop.xlane.xlu0 %2124
      %v2126 = vsel %vm863, %v2092, -inf
      %2127 = vmax.xlane.f32.xlu0 %v2126
      %v2128 = vpop.xlane.xlu0 %2127
      %v2129 = vsel %vm863, %v2097, -inf
      %2130 = vmax.xlane.f32.xlu0 %v2129
      %v2131 = vpop.xlane.xlu0 %2130
      %v2132 = vsel %vm863, %v2102, -inf
      %2133 = vmax.xlane.f32.xlu0 %v2132
      %v2134 = vpop.xlane.xlu0 %2133
      %v2135 = vsel %vm863, %v2107, -inf
      %2136 = vmax.xlane.f32.xlu0 %v2135
      %v2137 = vpop.xlane.xlu0 %2136
      %v2138 = vsel %vm863, %v2112, -inf
      %2139 = vmax.xlane.f32.xlu0 %v2138
      %v2140 = vpop.xlane.xlu0 %2139
      %v2141 = vsel %vm863, %v2117, -inf
      %2142 = vmax.xlane.f32.xlu0 %v2141
      %v2143 = vpop.xlane.xlu0 %2142
      %v2144 = vsub.f32 %v2082, %v2122
      %v2145 = vsub.f32 %v2087, %v2125
      %v2146 = vsub.f32 %v2092, %v2128
      %v2147 = vsub.f32 %v2097, %v2131
      %v2148 = vsub.f32 %v2102, %v2134
      %v2149 = vsub.f32 %v2107, %v2137
      %v2150 = vsub.f32 %v2112, %v2140
      %v2151 = vsub.f32 %v2117, %v2143
      %v2152 = vmul.f32 %v2144, 1.442695
      %v2153 = vpow.pop %v2152
      %v2154 = vmul.f32 %v2145, 1.442695
      %v2155 = vpow.pop %v2154
      %v2156 = vmul.f32 %v2146, 1.442695
      %v2157 = vpow.pop %v2156
      %v2158 = vmul.f32 %v2147, 1.442695
      %v2159 = vpow.pop %v2158
      %v2160 = vmul.f32 %v2148, 1.442695
      %v2161 = vpow.pop %v2160
      %v2162 = vmul.f32 %v2149, 1.442695
      %v2163 = vpow.pop %v2162
      %v2164 = vmul.f32 %v2150, 1.442695
      %v2165 = vpow.pop %v2164
      %v2166 = vmul.f32 %v2151, 1.442695
      %v2167 = vpow.pop %v2166
      %v2168 = vsel %vm863, %v2153, 0.0
      %2169 = vadd.xlane.f32.xlu0 %v2168
      %v2170 = vpop.xlane.xlu0 %2169
      %v2171 = vsel %vm863, %v2155, 0.0
      %2172 = vadd.xlane.f32.xlu0 %v2171
      %v2173 = vpop.xlane.xlu0 %2172
      %v2174 = vsel %vm863, %v2157, 0.0
      %2175 = vadd.xlane.f32.xlu0 %v2174
      %v2176 = vpop.xlane.xlu0 %2175
      %v2177 = vsel %vm863, %v2159, 0.0
      %2178 = vadd.xlane.f32.xlu0 %v2177
      %v2179 = vpop.xlane.xlu0 %2178
      %v2180 = vsel %vm863, %v2161, 0.0
      %2181 = vadd.xlane.f32.xlu0 %v2180
      %v2182 = vpop.xlane.xlu0 %2181
      %v2183 = vsel %vm863, %v2163, 0.0
      %2184 = vadd.xlane.f32.xlu0 %v2183
      %v2185 = vpop.xlane.xlu0 %2184
      %v2186 = vsel %vm863, %v2165, 0.0
      %2187 = vadd.xlane.f32.xlu0 %v2186
      %v2188 = vpop.xlane.xlu0 %2187
      %v2189 = vsel %vm863, %v2167, 0.0
      %2190 = vadd.xlane.f32.xlu0 %v2189
      %v2191 = vpop.xlane.xlu0 %2190
      %v2192 = vrcp.pop %v2170
      %v2193 = vrcp.pop %v2173
      %v2194 = vrcp.pop %v2176
      %v2195 = vrcp.pop %v2179
      %v2196 = vrcp.pop %v2182
      %v2197 = vrcp.pop %v2185
      %v2198 = vrcp.pop %v2188
      %v2199 = vrcp.pop %v2191
      %v2200 = vmul.f32 %v2153, %v2192
      %v2201 = vmul.f32 %v2155, %v2193
      %v2202 = vmul.f32 %v2157, %v2194
      %v2203 = vmul.f32 %v2159, %v2195
      %v2204 = vmul.f32 %v2161, %v2196
      %v2205 = vmul.f32 %v2163, %v2197
      %v2206 = vmul.f32 %v2165, %v2198
      %v2207 = vmul.f32 %v2167, %v2199
      %s2208 = scalar_lea.vmem %s522, 192
      %2209 = vst.msk [vmem:[%s2208] sm:$0xff] %vm863, %v2200
      %2210 = vst.msk [vmem:[%s2208 + $0x8] sm:$0xff] %vm863, %v2201
      %2211 = vst.msk [vmem:[%s2208 + $0x10] sm:$0xff] %vm863, %v2202
      %2212 = vst.msk [vmem:[%s2208 + $0x18] sm:$0xff] %vm863, %v2203
      %2213 = vst.msk [vmem:[%s2208 + $0x20] sm:$0xff] %vm863, %v2204
      %2214 = vst.msk [vmem:[%s2208 + $0x28] sm:$0xff] %vm863, %v2205
      %2215 = vst.msk [vmem:[%s2208 + $0x30] sm:$0xff] %vm863, %v2206
      %2216 = vst.msk [vmem:[%s2208 + $0x38] sm:$0xff] %vm863, %v2207
      %2217 = vrot.lane.b32.xlu0 %v647, 40
      %v2218 = vpop.permute.xlu0 %2217
      %2219 = vrot.lane.b32.xlu0 %v652, 40
      %v2220 = vpop.permute.xlu0 %2219
      %2221 = vrot.lane.b32.xlu0 %v657, 40
      %v2222 = vpop.permute.xlu0 %2221
      %2223 = vrot.lane.b32.xlu0 %v662, 40
      %v2224 = vpop.permute.xlu0 %2223
      %2225 = vrot.lane.b32.xlu0 %v667, 40
      %v2226 = vpop.permute.xlu0 %2225
      %2227 = vrot.lane.b32.xlu0 %v672, 40
      %v2228 = vpop.permute.xlu0 %2227
      %2229 = vrot.lane.b32.xlu0 %v677, 40
      %v2230 = vpop.permute.xlu0 %2229
      %2231 = vrot.lane.b32.xlu0 %v682, 40
      %v2232 = vpop.permute.xlu0 %2231
      %v2242 = vsel %vm863, %v2200, 0
      %v2245 = vsel %vm863, %v2201, 0
      %v2248 = vsel %vm863, %v2202, 0
      %v2251 = vsel %vm863, %v2203, 0
      %v2254 = vsel %vm863, %v2204, 0
      %v2257 = vsel %vm863, %v2205, 0
      %v2260 = vsel %vm863, %v2206, 0
      %v2263 = vsel %vm863, %v2207, 0
      %2265 = vmatprep.subr.mxu0 0.0
      %2266 = vmatpush1.msra.mxu0 %v2218
      %2267 = vmatprep.subr.mxu0 0.0
      %2268 = vmatpush1.msra.mxu0 %v2220
      %2269 = vmatprep.subr.mxu0 0.0
      %2270 = vmatpush1.msra.mxu0 %v2222
      %2271 = vmatprep.subr.mxu0 0.0
      %2272 = vmatpush1.msra.mxu0 %v2224
      %2273 = vmatprep.subr.mxu0 0.0
      %2274 = vmatpush1.msra.mxu0 %v2226
      %2275 = vmatprep.subr.mxu0 0.0
      %2276 = vmatpush1.msra.mxu0 %v2228
      %2277 = vmatprep.subr.mxu0 0.0
      %2278 = vmatpush1.msra.mxu0 %v2230
      %2279 = vmatprep.subr.mxu0 0.0
      %2280 = vmatpush1.msra.mxu0 %v2232
      %2281 = vmatprep.subr.mxu0 0.0
      %2282 = vmatpush1.msra.mxu0 0.0
      %2283 = vmatprep.subr.mxu0 0.0
      %2284 = vmatpush1.msra.mxu0 0.0
      %2285 = vmatprep.subr.mxu0 0.0
      %2286 = vmatpush1.msra.mxu0 0.0
      %2287 = vmatprep.subr.mxu0 0.0
      %2288 = vmatpush1.msra.mxu0 0.0
      %2289 = vmatprep.subr.mxu0 0.0
      %2290 = vmatpush1.msra.mxu0 0.0
      %2291 = vmatprep.subr.mxu0 0.0
      %2292 = vmatpush1.msra.mxu0 0.0
      %2293 = vmatprep.subr.mxu0 0.0
      %2294 = vmatpush1.msra.mxu0 0.0
      %2295 = vmatprep.subr.mxu0 0.0
      %2296 = vmatpush1.msra.mxu0 0.0
      %2297 = vmatprep.subr.mxu0 0.0
      %2298 = vmatpush1.msra.mxu0 0.0
      %2299 = vmatprep.subr.mxu0 0.0
      %2300 = vmatpush1.msra.mxu0 0.0
      %2301 = vmatprep.subr.mxu0 0.0
      %2302 = vmatpush1.msra.mxu0 0.0
      %2303 = vmatprep.subr.mxu0 0.0
      %2304 = vmatpush1.msra.mxu0 0.0
      %2305 = vmatprep.subr.mxu0 0.0
      %2306 = vmatpush1.msra.mxu0 0.0
      %2307 = vmatprep.subr.mxu0 0.0
      %2308 = vmatpush1.msra.mxu0 0.0
      %2309 = vmatprep.subr.mxu0 0.0
      %2310 = vmatpush1.msra.mxu0 0.0
      %2311 = vmatprep.subr.mxu0 0.0
      %2312 = vmatpush1.msra.mxu0 0.0
      %2313 = vmatprep.subr.mxu0 0.0
      %2314 = vmatpush1.msra.mxu0 0.0
      %2315 = vmatprep.subr.mxu0 0.0
      %2316 = vmatpush1.msra.mxu0 0.0
      %2317 = vmatprep.subr.mxu0 0.0
      %2318 = vmatpush1.msra.mxu0 0.0
      %2319 = vmatprep.subr.mxu0 0.0
      %2320 = vmatpush1.msra.mxu0 0.0
      %2321 = vmatprep.subr.mxu0 0.0
      %2322 = vmatpush1.msra.mxu0 0.0
      %2323 = vmatprep.subr.mxu0 0.0
      %2324 = vmatpush1.msra.mxu0 0.0
      %2325 = vmatprep.subr.mxu0 0.0
      %2326 = vmatpush1.msra.mxu0 0.0
      %2327 = vmatprep.subr.mxu0 0.0
      %2328 = vmatpush1.msra.mxu0 0.0
      %2329 = vmatprep.mubr.f32.mxu0 0.0
      %2330 = vmatmul.mubr.f32.gmra.mrb[0].mxu0 %v2242
      %v2331 = vpop.f32.mrb[0].mxu0
      %v2332 = vadd.f32 0.0, %v2331
      %v2333 = vpop.f32.mrb[0].mxu0
      %2334 = vmatprep.mubr.f32.mxu0 0.0
      %2335 = vmatmul.mubr.f32.gmra.mrb[0].mxu0 %v2245
      %v2336 = vpop.f32.mrb[0].mxu0
      %v2337 = vadd.f32 0.0, %v2336
      %v2338 = vpop.f32.mrb[0].mxu0
      %2339 = vmatprep.mubr.f32.mxu0 0.0
      %2340 = vmatmul.mubr.f32.gmra.mrb[0].mxu0 %v2248
      %v2341 = vpop.f32.mrb[0].mxu0
      %v2342 = vadd.f32 0.0, %v2341
      %v2343 = vpop.f32.mrb[0].mxu0
      %2344 = vmatprep.mubr.f32.mxu0 0.0
      %2345 = vmatmul.mubr.f32.gmra.mrb[0].mxu0 %v2251
      %v2346 = vpop.f32.mrb[0].mxu0
      %v2347 = vadd.f32 0.0, %v2346
      %v2348 = vpop.f32.mrb[0].mxu0
      %2349 = vmatprep.mubr.f32.mxu0 0.0
      %2350 = vmatmul.mubr.f32.gmra.mrb[0].mxu0 %v2254
      %v2351 = vpop.f32.mrb[0].mxu0
      %v2352 = vadd.f32 0.0, %v2351
      %v2353 = vpop.f32.mrb[0].mxu0
      %2354 = vmatprep.mubr.f32.mxu0 0.0
      %2355 = vmatmul.mubr.f32.gmra.mrb[0].mxu0 %v2257
      %v2356 = vpop.f32.mrb[0].mxu0
      %v2357 = vadd.f32 0.0, %v2356
      %v2358 = vpop.f32.mrb[0].mxu0
      %2359 = vmatprep.mubr.f32.mxu0 0.0
      %2360 = vmatmul.mubr.f32.gmra.mrb[0].mxu0 %v2260
      %v2361 = vpop.f32.mrb[0].mxu0
      %v2362 = vadd.f32 0.0, %v2361
      %v2363 = vpop.f32.mrb[0].mxu0
      %2364 = vmatprep.mubr.f32.mxu0 0.0
      %2365 = vmatmul.mubr.f32.gmra.mrb[0].mxu0 %v2263
      %v2366 = vpop.f32.mrb[0].mxu0
      %v2367 = vadd.f32 0.0, %v2366
      %v2368 = vpop.f32.mrb[0].mxu0
      %2369 = vdwg.mxu0
      %2378 = vrot.lane.b32.xlu0 %v1494, 8
      %v2379 = vpop.permute.xlu0 %2378
      %2380 = vrot.lane.b32.xlu0 %v1499, 8
      %v2381 = vpop.permute.xlu0 %2380
      %2382 = vrot.lane.b32.xlu0 %v1504, 8
      %v2383 = vpop.permute.xlu0 %2382
      %2384 = vrot.lane.b32.xlu0 %v1509, 8
      %v2385 = vpop.permute.xlu0 %2384
      %2386 = vrot.lane.b32.xlu0 %v1514, 8
      %v2387 = vpop.permute.xlu0 %2386
      %2388 = vrot.lane.b32.xlu0 %v1519, 8
      %v2389 = vpop.permute.xlu0 %2388
      %2390 = vrot.lane.b32.xlu0 %v1524, 8
      %v2391 = vpop.permute.xlu0 %2390
      %2392 = vrot.lane.b32.xlu0 %v1529, 8
      %v2393 = vpop.permute.xlu0 %2392
      %2410 = vrot.lane.b32.xlu0 %v1913, 16
      %v2411 = vpop.permute.xlu0 %2410
      %2412 = vrot.lane.b32.xlu0 %v1918, 16
      %v2413 = vpop.permute.xlu0 %2412
      %2414 = vrot.lane.b32.xlu0 %v1923, 16
      %v2415 = vpop.permute.xlu0 %2414
      %2416 = vrot.lane.b32.xlu0 %v1928, 16
      %v2417 = vpop.permute.xlu0 %2416
      %2418 = vrot.lane.b32.xlu0 %v1933, 16
      %v2419 = vpop.permute.xlu0 %2418
      %2420 = vrot.lane.b32.xlu0 %v1938, 16
      %v2421 = vpop.permute.xlu0 %2420
      %2422 = vrot.lane.b32.xlu0 %v1943, 16
      %v2423 = vpop.permute.xlu0 %2422
      %2424 = vrot.lane.b32.xlu0 %v1948, 16
      %v2425 = vpop.permute.xlu0 %2424
      %2442 = vrot.lane.b32.xlu0 %v2332, 24
      %v2443 = vpop.permute.xlu0 %2442
      %2444 = vrot.lane.b32.xlu0 %v2337, 24
      %v2445 = vpop.permute.xlu0 %2444
      %2446 = vrot.lane.b32.xlu0 %v2342, 24
      %v2447 = vpop.permute.xlu0 %2446
      %2448 = vrot.lane.b32.xlu0 %v2347, 24
      %v2449 = vpop.permute.xlu0 %2448
      %2450 = vrot.lane.b32.xlu0 %v2352, 24
      %v2451 = vpop.permute.xlu0 %2450
      %2452 = vrot.lane.b32.xlu0 %v2357, 24
      %v2453 = vpop.permute.xlu0 %2452
      %2454 = vrot.lane.b32.xlu0 %v2362, 24
      %v2455 = vpop.permute.xlu0 %2454
      %2456 = vrot.lane.b32.xlu0 %v2367, 24
      %v2457 = vpop.permute.xlu0 %2456
      %v2466 = vsel %vm717, %v1075, %v2379
      %v2467 = vsel %vm717, %v1080, %v2381
      %v2468 = vsel %vm717, %v1085, %v2383
      %v2469 = vsel %vm717, %v1090, %v2385
      %v2470 = vsel %vm717, %v1095, %v2387
      %v2471 = vsel %vm717, %v1100, %v2389
      %v2472 = vsel %vm717, %v1105, %v2391
      %v2473 = vsel %vm717, %v1110, %v2393
      %vm2474 = vcmask 130048
      %v2475 = vsel %vm2474, %v2466, %v2411
      %v2476 = vsel %vm2474, %v2467, %v2413
      %v2477 = vsel %vm2474, %v2468, %v2415
      %v2478 = vsel %vm2474, %v2469, %v2417
      %v2479 = vsel %vm2474, %v2470, %v2419
      %v2480 = vsel %vm2474, %v2471, %v2421
      %v2481 = vsel %vm2474, %v2472, %v2423
      %v2482 = vsel %vm2474, %v2473, %v2425
      %vm2483 = vcmask 195584
      %v2484 = vsel %vm2483, %v2475, %v2443
      %v2485 = vsel %vm2483, %v2476, %v2445
      %v2486 = vsel %vm2483, %v2477, %v2447
      %v2487 = vsel %vm2483, %v2478, %v2449
      %v2488 = vsel %vm2483, %v2479, %v2451
      %v2489 = vsel %vm2483, %v2480, %v2453
      %v2490 = vsel %vm2483, %v2481, %v2455
      %v2491 = vsel %vm2483, %v2482, %v2457
      %v2492 = vld [vmem:[%s4] sm:$0xff]
      %v2493 = vld [vmem:[%s4 + $0x8] sm:$0xff]
      %v2494 = vld [vmem:[%s4 + $0x10] sm:$0xff]
      %v2495 = vld [vmem:[%s4 + $0x18] sm:$0xff]
      %v2496 = vld [vmem:[%s5] sm:$0x1]
      %v2498 = vlaneseq
      %v2499 = vshrl.u32 %v2498, 7
      %v2500 = vsub.s32 0, %v2499
      %v2501 = vrot.slane %v2496, %v2500
      %v2504 = vsel %vm555, %v2484, 0
      %v2507 = vsel %vm555, %v2485, 0
      %v2510 = vsel %vm555, %v2486, 0
      %v2513 = vsel %vm555, %v2487, 0
      %v2516 = vsel %vm555, %v2488, 0
      %v2519 = vsel %vm555, %v2489, 0
      %v2522 = vsel %vm555, %v2490, 0
      %v2525 = vsel %vm555, %v2491, 0
      %2527 = vmatprep.subr.mxu0 0.0
      %2528 = vmatpush1.msra.mxu0 %v2492
      %2529 = vmatprep.subr.mxu0 0.0
      %2530 = vmatpush1.msra.mxu0 %v2493
      %2531 = vmatprep.subr.mxu0 0.0
      %2532 = vmatpush1.msra.mxu0 %v2494
      %2533 = vmatprep.subr.mxu0 0.0
      %2534 = vmatpush1.msra.mxu0 %v2495
      %2535 = vmatprep.subr.mxu0 0.0
      %2536 = vmatpush1.msra.mxu0 0.0
      %2537 = vmatprep.subr.mxu0 0.0
      %2538 = vmatpush1.msra.mxu0 0.0
      %2539 = vmatprep.subr.mxu0 0.0
      %2540 = vmatpush1.msra.mxu0 0.0
      %2541 = vmatprep.subr.mxu0 0.0
      %2542 = vmatpush1.msra.mxu0 0.0
      %2543 = vmatprep.subr.mxu0 0.0
      %2544 = vmatpush1.msra.mxu0 0.0
      %2545 = vmatprep.subr.mxu0 0.0
      %2546 = vmatpush1.msra.mxu0 0.0
      %2547 = vmatprep.subr.mxu0 0.0
      %2548 = vmatpush1.msra.mxu0 0.0
      %2549 = vmatprep.subr.mxu0 0.0
      %2550 = vmatpush1.msra.mxu0 0.0
      %2551 = vmatprep.subr.mxu0 0.0
      %2552 = vmatpush1.msra.mxu0 0.0
      %2553 = vmatprep.subr.mxu0 0.0
      %2554 = vmatpush1.msra.mxu0 0.0
      %2555 = vmatprep.subr.mxu0 0.0
      %2556 = vmatpush1.msra.mxu0 0.0
      %2557 = vmatprep.subr.mxu0 0.0
      %2558 = vmatpush1.msra.mxu0 0.0
      %2559 = vmatprep.subr.mxu0 0.0
      %2560 = vmatpush1.msra.mxu0 0.0
      %2561 = vmatprep.subr.mxu0 0.0
      %2562 = vmatpush1.msra.mxu0 0.0
      %2563 = vmatprep.subr.mxu0 0.0
      %2564 = vmatpush1.msra.mxu0 0.0
      %2565 = vmatprep.subr.mxu0 0.0
      %2566 = vmatpush1.msra.mxu0 0.0
      %2567 = vmatprep.subr.mxu0 0.0
      %2568 = vmatpush1.msra.mxu0 0.0
      %2569 = vmatprep.subr.mxu0 0.0
      %2570 = vmatpush1.msra.mxu0 0.0
      %2571 = vmatprep.subr.mxu0 0.0
      %2572 = vmatpush1.msra.mxu0 0.0
      %2573 = vmatprep.subr.mxu0 0.0
      %2574 = vmatpush1.msra.mxu0 0.0
      %2575 = vmatprep.subr.mxu0 0.0
      %2576 = vmatpush1.msra.mxu0 0.0
      %2577 = vmatprep.subr.mxu0 0.0
      %2578 = vmatpush1.msra.mxu0 0.0
      %2579 = vmatprep.subr.mxu0 0.0
      %2580 = vmatpush1.msra.mxu0 0.0
      %2581 = vmatprep.subr.mxu0 0.0
      %2582 = vmatpush1.msra.mxu0 0.0
      %2583 = vmatprep.subr.mxu0 0.0
      %2584 = vmatpush1.msra.mxu0 0.0
      %2585 = vmatprep.subr.mxu0 0.0
      %2586 = vmatpush1.msra.mxu0 0.0
      %2587 = vmatprep.subr.mxu0 0.0
      %2588 = vmatpush1.msra.mxu0 0.0
      %2589 = vmatprep.subr.mxu0 0.0
      %2590 = vmatpush1.msra.mxu0 0.0
      %2591 = vmatprep.mubr.f32.mxu0 0.0
      %2592 = vmatmul.mubr.f32.gmra.mrb[0].mxu0 %v2504
      %v2593 = vpop.f32.mrb[0].mxu0
      %v2594 = vadd.f32 %v2501, %v2593
      %v2595 = vpop.f32.mrb[0].mxu0
      %2596 = vmatprep.mubr.f32.mxu0 0.0
      %2597 = vmatmul.mubr.f32.gmra.mrb[0].mxu0 %v2507
      %v2598 = vpop.f32.mrb[0].mxu0
      %v2599 = vadd.f32 %v2501, %v2598
      %v2600 = vpop.f32.mrb[0].mxu0
      %2601 = vmatprep.mubr.f32.mxu0 0.0
      %2602 = vmatmul.mubr.f32.gmra.mrb[0].mxu0 %v2510
      %v2603 = vpop.f32.mrb[0].mxu0
      %v2604 = vadd.f32 %v2501, %v2603
      %v2605 = vpop.f32.mrb[0].mxu0
      %2606 = vmatprep.mubr.f32.mxu0 0.0
      %2607 = vmatmul.mubr.f32.gmra.mrb[0].mxu0 %v2513
      %v2608 = vpop.f32.mrb[0].mxu0
      %v2609 = vadd.f32 %v2501, %v2608
      %v2610 = vpop.f32.mrb[0].mxu0
      %2611 = vmatprep.mubr.f32.mxu0 0.0
      %2612 = vmatmul.mubr.f32.gmra.mrb[0].mxu0 %v2516
      %v2613 = vpop.f32.mrb[0].mxu0
      %v2614 = vadd.f32 %v2501, %v2613
      %v2615 = vpop.f32.mrb[0].mxu0
      %2616 = vmatprep.mubr.f32.mxu0 0.0
      %2617 = vmatmul.mubr.f32.gmra.mrb[0].mxu0 %v2519
      %v2618 = vpop.f32.mrb[0].mxu0
      %v2619 = vadd.f32 %v2501, %v2618
      %v2620 = vpop.f32.mrb[0].mxu0
      %2621 = vmatprep.mubr.f32.mxu0 0.0
      %2622 = vmatmul.mubr.f32.gmra.mrb[0].mxu0 %v2522
      %v2623 = vpop.f32.mrb[0].mxu0
      %v2624 = vadd.f32 %v2501, %v2623
      %v2625 = vpop.f32.mrb[0].mxu0
      %2626 = vmatprep.mubr.f32.mxu0 0.0
      %2627 = vmatmul.mubr.f32.gmra.mrb[0].mxu0 %v2525
      %v2628 = vpop.f32.mrb[0].mxu0
      %v2629 = vadd.f32 %v2501, %v2628
      %v2630 = vpop.f32.mrb[0].mxu0
      %2631 = vdwg.mxu0
      %v2632 = vadd.f32 %v2594, %v528
      %v2633 = vadd.f32 %v2599, %v529
      %v2634 = vadd.f32 %v2604, %v530
      %v2635 = vadd.f32 %v2609, %v531
      %v2636 = vadd.f32 %v2614, %v532
      %v2637 = vadd.f32 %v2619, %v533
      %v2638 = vadd.f32 %v2624, %v534
      %v2639 = vadd.f32 %v2629, %v535
      %v2640 = vld [vmem:[%s6] sm:$0x1]
      %v2641 = vld [vmem:[%s7] sm:$0x1]
      %v2642 = vsel %vm555, %v2632, 0.0
      %2643 = vadd.xlane.f32.xlu0 %v2642
      %v2644 = vpop.xlane.xlu0 %2643
      %v2645 = vsel %vm555, %v2633, 0.0
      %2646 = vadd.xlane.f32.xlu0 %v2645
      %v2647 = vpop.xlane.xlu0 %2646
      %v2648 = vsel %vm555, %v2634, 0.0
      %2649 = vadd.xlane.f32.xlu0 %v2648
      %v2650 = vpop.xlane.xlu0 %2649
      %v2651 = vsel %vm555, %v2635, 0.0
      %2652 = vadd.xlane.f32.xlu0 %v2651
      %v2653 = vpop.xlane.xlu0 %2652
      %v2654 = vsel %vm555, %v2636, 0.0
      %2655 = vadd.xlane.f32.xlu0 %v2654
      %v2656 = vpop.xlane.xlu0 %2655
      %v2657 = vsel %vm555, %v2637, 0.0
      %2658 = vadd.xlane.f32.xlu0 %v2657
      %v2659 = vpop.xlane.xlu0 %2658
      %v2660 = vsel %vm555, %v2638, 0.0
      %2661 = vadd.xlane.f32.xlu0 %v2660
      %v2662 = vpop.xlane.xlu0 %2661
      %v2663 = vsel %vm555, %v2639, 0.0
      %2664 = vadd.xlane.f32.xlu0 %v2663
      %v2665 = vpop.xlane.xlu0 %2664
      %v2666 = vrcp.pop 32.0
      %v2667 = vmul.f32 %v2644, %v2666
      %v2668 = vmul.f32 %v2647, %v2666
      %v2669 = vmul.f32 %v2650, %v2666
      %v2670 = vmul.f32 %v2653, %v2666
      %v2671 = vmul.f32 %v2656, %v2666
      %v2672 = vmul.f32 %v2659, %v2666
      %v2673 = vmul.f32 %v2662, %v2666
      %v2674 = vmul.f32 %v2665, %v2666
      %v2675 = vsub.f32 %v2632, %v2667
      %v2676 = vsub.f32 %v2633, %v2668
      %v2677 = vsub.f32 %v2634, %v2669
      %v2678 = vsub.f32 %v2635, %v2670
      %v2679 = vsub.f32 %v2636, %v2671
      %v2680 = vsub.f32 %v2637, %v2672
      %v2681 = vsub.f32 %v2638, %v2673
      %v2682 = vsub.f32 %v2639, %v2674
      %v2683 = vmul.f32 %v2675, %v2675
      %v2684 = vmul.f32 %v2676, %v2676
      %v2685 = vmul.f32 %v2677, %v2677
      %v2686 = vmul.f32 %v2678, %v2678
      %v2687 = vmul.f32 %v2679, %v2679
      %v2688 = vmul.f32 %v2680, %v2680
      %v2689 = vmul.f32 %v2681, %v2681
      %v2690 = vmul.f32 %v2682, %v2682
      %v2691 = vsel %vm555, %v2683, 0.0
      %2692 = vadd.xlane.f32.xlu0 %v2691
      %v2693 = vpop.xlane.xlu0 %2692
      %v2694 = vsel %vm555, %v2684, 0.0
      %2695 = vadd.xlane.f32.xlu0 %v2694
      %v2696 = vpop.xlane.xlu0 %2695
      %v2697 = vsel %vm555, %v2685, 0.0
      %2698 = vadd.xlane.f32.xlu0 %v2697
      %v2699 = vpop.xlane.xlu0 %2698
      %v2700 = vsel %vm555, %v2686, 0.0
      %2701 = vadd.xlane.f32.xlu0 %v2700
      %v2702 = vpop.xlane.xlu0 %2701
      %v2703 = vsel %vm555, %v2687, 0.0
      %2704 = vadd.xlane.f32.xlu0 %v2703
      %v2705 = vpop.xlane.xlu0 %2704
      %v2706 = vsel %vm555, %v2688, 0.0
      %2707 = vadd.xlane.f32.xlu0 %v2706
      %v2708 = vpop.xlane.xlu0 %2707
      %v2709 = vsel %vm555, %v2689, 0.0
      %2710 = vadd.xlane.f32.xlu0 %v2709
      %v2711 = vpop.xlane.xlu0 %2710
      %v2712 = vsel %vm555, %v2690, 0.0
      %2713 = vadd.xlane.f32.xlu0 %v2712
      %v2714 = vpop.xlane.xlu0 %2713
      %v2715 = vmul.f32 %v2693, %v2666
      %v2716 = vmul.f32 %v2696, %v2666
      %v2717 = vmul.f32 %v2699, %v2666
      %v2718 = vmul.f32 %v2702, %v2666
      %v2719 = vmul.f32 %v2705, %v2666
      %v2720 = vmul.f32 %v2708, %v2666
      %v2721 = vmul.f32 %v2711, %v2666
      %v2722 = vmul.f32 %v2714, %v2666
      %v2723 = vadd.f32 %v2715, 1e-12
      %v2724 = vadd.f32 %v2716, 1e-12
      %v2725 = vadd.f32 %v2717, 1e-12
      %v2726 = vadd.f32 %v2718, 1e-12
      %v2727 = vadd.f32 %v2719, 1e-12
      %v2728 = vadd.f32 %v2720, 1e-12
      %v2729 = vadd.f32 %v2721, 1e-12
      %v2730 = vadd.f32 %v2722, 1e-12
      %v2731 = vrsqrt.pop %v2723
      %v2732 = vrsqrt.pop %v2724
      %v2733 = vrsqrt.pop %v2725
      %v2734 = vrsqrt.pop %v2726
      %v2735 = vrsqrt.pop %v2727
      %v2736 = vrsqrt.pop %v2728
      %v2737 = vrsqrt.pop %v2729
      %v2738 = vrsqrt.pop %v2730
      %v2739 = vmul.f32 %v2675, %v2731
      %v2740 = vmul.f32 %v2676, %v2732
      %v2741 = vmul.f32 %v2677, %v2733
      %v2742 = vmul.f32 %v2678, %v2734
      %v2743 = vmul.f32 %v2679, %v2735
      %v2744 = vmul.f32 %v2680, %v2736
      %v2745 = vmul.f32 %v2681, %v2737
      %v2746 = vmul.f32 %v2682, %v2738
      %v2748 = vlaneseq
      %v2749 = vshrl.u32 %v2748, 7
      %v2750 = vsub.s32 0, %v2749
      %v2751 = vrot.slane %v2640, %v2750
      %v2753 = vmul.f32 %v2739, %v2751
      %v2754 = vmul.f32 %v2740, %v2751
      %v2755 = vmul.f32 %v2741, %v2751
      %v2756 = vmul.f32 %v2742, %v2751
      %v2757 = vmul.f32 %v2743, %v2751
      %v2758 = vmul.f32 %v2744, %v2751
      %v2759 = vmul.f32 %v2745, %v2751
      %v2760 = vmul.f32 %v2746, %v2751
      %v2762 = vlaneseq
      %v2763 = vshrl.u32 %v2762, 7
      %v2764 = vsub.s32 0, %v2763
      %v2765 = vrot.slane %v2641, %v2764
      %v2767 = vadd.f32 %v2753, %v2765
      %v2768 = vadd.f32 %v2754, %v2765
      %v2769 = vadd.f32 %v2755, %v2765
      %v2770 = vadd.f32 %v2756, %v2765
      %v2771 = vadd.f32 %v2757, %v2765
      %v2772 = vadd.f32 %v2758, %v2765
      %v2773 = vadd.f32 %v2759, %v2765
      %v2774 = vadd.f32 %v2760, %v2765
      %v2775 = vld [vmem:[%s8] sm:$0xff]
      %v2776 = vld [vmem:[%s8 + $0x8] sm:$0xff]
      %v2777 = vld [vmem:[%s8 + $0x10] sm:$0xff]
      %v2778 = vld [vmem:[%s8 + $0x18] sm:$0xff]
      %v2779 = vld [vmem:[%s9] sm:$0x1]
      %v2781 = vlaneseq
      %v2782 = vshrl.u32 %v2781, 7
      %v2783 = vsub.s32 0, %v2782
      %v2784 = vrot.slane %v2779, %v2783
      %v2787 = vsel %vm555, %v2767, 0
      %v2790 = vsel %vm555, %v2768, 0
      %v2793 = vsel %vm555, %v2769, 0
      %v2796 = vsel %vm555, %v2770, 0
      %v2799 = vsel %vm555, %v2771, 0
      %v2802 = vsel %vm555, %v2772, 0
      %v2805 = vsel %vm555, %v2773, 0
      %v2808 = vsel %vm555, %v2774, 0
      %2810 = vmatprep.subr.mxu0 0.0
      %2811 = vmatpush1.msra.mxu0 %v2775
      %2812 = vmatprep.subr.mxu0 0.0
      %2813 = vmatpush1.msra.mxu0 %v2776
      %2814 = vmatprep.subr.mxu0 0.0
      %2815 = vmatpush1.msra.mxu0 %v2777
      %2816 = vmatprep.subr.mxu0 0.0
      %2817 = vmatpush1.msra.mxu0 %v2778
      %2818 = vmatprep.subr.mxu0 0.0
      %2819 = vmatpush1.msra.mxu0 0.0
      %2820 = vmatprep.subr.mxu0 0.0
      %2821 = vmatpush1.msra.mxu0 0.0
      %2822 = vmatprep.subr.mxu0 0.0
      %2823 = vmatpush1.msra.mxu0 0.0
      %2824 = vmatprep.subr.mxu0 0.0
      %2825 = vmatpush1.msra.mxu0 0.0
      %2826 = vmatprep.subr.mxu0 0.0
      %2827 = vmatpush1.msra.mxu0 0.0
      %2828 = vmatprep.subr.mxu0 0.0
      %2829 = vmatpush1.msra.mxu0 0.0
      %2830 = vmatprep.subr.mxu0 0.0
      %2831 = vmatpush1.msra.mxu0 0.0
      %2832 = vmatprep.subr.mxu0 0.0
      %2833 = vmatpush1.msra.mxu0 0.0
      %2834 = vmatprep.subr.mxu0 0.0
      %2835 = vmatpush1.msra.mxu0 0.0
      %2836 = vmatprep.subr.mxu0 0.0
      %2837 = vmatpush1.msra.mxu0 0.0
      %2838 = vmatprep.subr.mxu0 0.0
      %2839 = vmatpush1.msra.mxu0 0.0
      %2840 = vmatprep.subr.mxu0 0.0
      %2841 = vmatpush1.msra.mxu0 0.0
      %2842 = vmatprep.subr.mxu0 0.0
      %2843 = vmatpush1.msra.mxu0 0.0
      %2844 = vmatprep.subr.mxu0 0.0
      %2845 = vmatpush1.msra.mxu0 0.0
      %2846 = vmatprep.subr.mxu0 0.0
      %2847 = vmatpush1.msra.mxu0 0.0
      %2848 = vmatprep.subr.mxu0 0.0
      %2849 = vmatpush1.msra.mxu0 0.0
      %2850 = vmatprep.subr.mxu0 0.0
      %2851 = vmatpush1.msra.mxu0 0.0
      %2852 = vmatprep.subr.mxu0 0.0
      %2853 = vmatpush1.msra.mxu0 0.0
      %2854 = vmatprep.subr.mxu0 0.0
      %2855 = vmatpush1.msra.mxu0 0.0
      %2856 = vmatprep.subr.mxu0 0.0
      %2857 = vmatpush1.msra.mxu0 0.0
      %2858 = vmatprep.subr.mxu0 0.0
      %2859 = vmatpush1.msra.mxu0 0.0
      %2860 = vmatprep.subr.mxu0 0.0
      %2861 = vmatpush1.msra.mxu0 0.0
      %2862 = vmatprep.subr.mxu0 0.0
      %2863 = vmatpush1.msra.mxu0 0.0
      %2864 = vmatprep.subr.mxu0 0.0
      %2865 = vmatpush1.msra.mxu0 0.0
      %2866 = vmatprep.subr.mxu0 0.0
      %2867 = vmatpush1.msra.mxu0 0.0
      %2868 = vmatprep.subr.mxu0 0.0
      %2869 = vmatpush1.msra.mxu0 0.0
      %2870 = vmatprep.subr.mxu0 0.0
      %2871 = vmatpush1.msra.mxu0 0.0
      %2872 = vmatprep.subr.mxu0 0.0
      %2873 = vmatpush1.msra.mxu0 0.0
      %2874 = vmatprep.mubr.f32.mxu0 0.0
      %2875 = vmatmul.mubr.f32.gmra.mrb[0].mxu0 %v2787
      %v2876 = vpop.f32.mrb[0].mxu0
      %v2877 = vadd.f32 %v2784, %v2876
      %v2878 = vpop.f32.mrb[0].mxu0
      %2879 = vmatprep.mubr.f32.mxu0 0.0
      %2880 = vmatmul.mubr.f32.gmra.mrb[0].mxu0 %v2790
      %v2881 = vpop.f32.mrb[0].mxu0
      %v2882 = vadd.f32 %v2784, %v2881
      %v2883 = vpop.f32.mrb[0].mxu0
      %2884 = vmatprep.mubr.f32.mxu0 0.0
      %2885 = vmatmul.mubr.f32.gmra.mrb[0].mxu0 %v2793
      %v2886 = vpop.f32.mrb[0].mxu0
      %v2887 = vadd.f32 %v2784, %v2886
      %v2888 = vpop.f32.mrb[0].mxu0
      %2889 = vmatprep.mubr.f32.mxu0 0.0
      %2890 = vmatmul.mubr.f32.gmra.mrb[0].mxu0 %v2796
      %v2891 = vpop.f32.mrb[0].mxu0
      %v2892 = vadd.f32 %v2784, %v2891
      %v2893 = vpop.f32.mrb[0].mxu0
      %2894 = vmatprep.mubr.f32.mxu0 0.0
      %2895 = vmatmul.mubr.f32.gmra.mrb[0].mxu0 %v2799
      %v2896 = vpop.f32.mrb[0].mxu0
      %v2897 = vadd.f32 %v2784, %v2896
      %v2898 = vpop.f32.mrb[0].mxu0
      %2899 = vmatprep.mubr.f32.mxu0 0.0
      %2900 = vmatmul.mubr.f32.gmra.mrb[0].mxu0 %v2802
      %v2901 = vpop.f32.mrb[0].mxu0
      %v2902 = vadd.f32 %v2784, %v2901
      %v2903 = vpop.f32.mrb[0].mxu0
      %2904 = vmatprep.mubr.f32.mxu0 0.0
      %2905 = vmatmul.mubr.f32.gmra.mrb[0].mxu0 %v2805
      %v2906 = vpop.f32.mrb[0].mxu0
      %v2907 = vadd.f32 %v2784, %v2906
      %v2908 = vpop.f32.mrb[0].mxu0
      %2909 = vmatprep.mubr.f32.mxu0 0.0
      %2910 = vmatmul.mubr.f32.gmra.mrb[0].mxu0 %v2808
      %v2911 = vpop.f32.mrb[0].mxu0
      %v2912 = vadd.f32 %v2784, %v2911
      %v2913 = vpop.f32.mrb[0].mxu0
      %2914 = vdwg.mxu0
      %v2915 = vmul.f32 %v2877, 0.70710677
      %v2916 = vmul.f32 %v2882, 0.70710677
      %v2917 = vmul.f32 %v2887, 0.70710677
      %v2918 = vmul.f32 %v2892, 0.70710677
      %v2919 = vmul.f32 %v2897, 0.70710677
      %v2920 = vmul.f32 %v2902, 0.70710677
      %v2921 = vmul.f32 %v2907, 0.70710677
      %v2922 = vmul.f32 %v2912, 0.70710677
      %v2923 = vand.u32 2147483647, %v2915
      %v2924 = vand.u32 2147483647, %v2916
      %v2925 = vand.u32 2147483647, %v2917
      %v2926 = vand.u32 2147483647, %v2918
      %v2927 = vand.u32 2147483647, %v2919
      %v2928 = vand.u32 2147483647, %v2920
      %v2929 = vand.u32 2147483647, %v2921
      %v2930 = vand.u32 2147483647, %v2922
      %v2931 = vmul.f32 %v2923, 0.3275911
      %v2932 = vmul.f32 %v2924, 0.3275911
      %v2933 = vmul.f32 %v2925, 0.3275911
      %v2934 = vmul.f32 %v2926, 0.3275911
      %v2935 = vmul.f32 %v2927, 0.3275911
      %v2936 = vmul.f32 %v2928, 0.3275911
      %v2937 = vmul.f32 %v2929, 0.3275911
      %v2938 = vmul.f32 %v2930, 0.3275911
      %v2939 = vadd.f32 %v2931, 1.0
      %v2940 = vadd.f32 %v2932, 1.0
      %v2941 = vadd.f32 %v2933, 1.0
      %v2942 = vadd.f32 %v2934, 1.0
      %v2943 = vadd.f32 %v2935, 1.0
      %v2944 = vadd.f32 %v2936, 1.0
      %v2945 = vadd.f32 %v2937, 1.0
      %v2946 = vadd.f32 %v2938, 1.0
      %v2947 = vrcp.pop %v2939
      %v2948 = vmul.f32 1.0, %v2947
      %v2949 = vrcp.pop %v2940
      %v2950 = vmul.f32 1.0, %v2949
      %v2951 = vrcp.pop %v2941
      %v2952 = vmul.f32 1.0, %v2951
      %v2953 = vrcp.pop %v2942
      %v2954 = vmul.f32 1.0, %v2953
      %v2955 = vrcp.pop %v2943
      %v2956 = vmul.f32 1.0, %v2955
      %v2957 = vrcp.pop %v2944
      %v2958 = vmul.f32 1.0, %v2957
      %v2959 = vrcp.pop %v2945
      %v2960 = vmul.f32 1.0, %v2959
      %v2961 = vrcp.pop %v2946
      %v2962 = vmul.f32 1.0, %v2961
      %v2963 = vmul.f32 %v2948, 1.0614054
      %v2964 = vmul.f32 %v2950, 1.0614054
      %v2965 = vmul.f32 %v2952, 1.0614054
      %v2966 = vmul.f32 %v2954, 1.0614054
      %v2967 = vmul.f32 %v2956, 1.0614054
      %v2968 = vmul.f32 %v2958, 1.0614054
      %v2969 = vmul.f32 %v2960, 1.0614054
      %v2970 = vmul.f32 %v2962, 1.0614054
      %v2971 = vadd.f32 %v2963, -1.4531521
      %v2972 = vadd.f32 %v2964, -1.4531521
      %v2973 = vadd.f32 %v2965, -1.4531521
      %v2974 = vadd.f32 %v2966, -1.4531521
      %v2975 = vadd.f32 %v2967, -1.4531521
      %v2976 = vadd.f32 %v2968, -1.4531521
      %v2977 = vadd.f32 %v2969, -1.4531521
      %v2978 = vadd.f32 %v2970, -1.4531521
      %v2979 = vmul.f32 %v2948, %v2971
      %v2980 = vmul.f32 %v2950, %v2972
      %v2981 = vmul.f32 %v2952, %v2973
      %v2982 = vmul.f32 %v2954, %v2974
      %v2983 = vmul.f32 %v2956, %v2975
      %v2984 = vmul.f32 %v2958, %v2976
      %v2985 = vmul.f32 %v2960, %v2977
      %v2986 = vmul.f32 %v2962, %v2978
      %v2987 = vadd.f32 %v2979, 1.4214138
      %v2988 = vadd.f32 %v2980, 1.4214138
      %v2989 = vadd.f32 %v2981, 1.4214138
      %v2990 = vadd.f32 %v2982, 1.4214138
      %v2991 = vadd.f32 %v2983, 1.4214138
      %v2992 = vadd.f32 %v2984, 1.4214138
      %v2993 = vadd.f32 %v2985, 1.4214138
      %v2994 = vadd.f32 %v2986, 1.4214138
      %v2995 = vmul.f32 %v2948, %v2987
      %v2996 = vmul.f32 %v2950, %v2988
      %v2997 = vmul.f32 %v2952, %v2989
      %v2998 = vmul.f32 %v2954, %v2990
      %v2999 = vmul.f32 %v2956, %v2991
      %v3000 = vmul.f32 %v2958, %v2992
      %v3001 = vmul.f32 %v2960, %v2993
      %v3002 = vmul.f32 %v2962, %v2994
      %v3003 = vadd.f32 %v2995, -0.28449672
      %v3004 = vadd.f32 %v2996, -0.28449672
      %v3005 = vadd.f32 %v2997, -0.28449672
      %v3006 = vadd.f32 %v2998, -0.28449672
      %v3007 = vadd.f32 %v2999, -0.28449672
      %v3008 = vadd.f32 %v3000, -0.28449672
      %v3009 = vadd.f32 %v3001, -0.28449672
      %v3010 = vadd.f32 %v3002, -0.28449672
      %v3011 = vmul.f32 %v2948, %v3003
      %v3012 = vmul.f32 %v2950, %v3004
      %v3013 = vmul.f32 %v2952, %v3005
      %v3014 = vmul.f32 %v2954, %v3006
      %v3015 = vmul.f32 %v2956, %v3007
      %v3016 = vmul.f32 %v2958, %v3008
      %v3017 = vmul.f32 %v2960, %v3009
      %v3018 = vmul.f32 %v2962, %v3010
      %v3019 = vadd.f32 %v3011, 0.2548296
      %v3020 = vadd.f32 %v3012, 0.2548296
      %v3021 = vadd.f32 %v3013, 0.2548296
      %v3022 = vadd.f32 %v3014, 0.2548296
      %v3023 = vadd.f32 %v3015, 0.2548296
      %v3024 = vadd.f32 %v3016, 0.2548296
      %v3025 = vadd.f32 %v3017, 0.2548296
      %v3026 = vadd.f32 %v3018, 0.2548296
      %v3027 = vmul.f32 %v2948, %v3019
      %v3028 = vmul.f32 %v2950, %v3020
      %v3029 = vmul.f32 %v2952, %v3021
      %v3030 = vmul.f32 %v2954, %v3022
      %v3031 = vmul.f32 %v2956, %v3023
      %v3032 = vmul.f32 %v2958, %v3024
      %v3033 = vmul.f32 %v2960, %v3025
      %v3034 = vmul.f32 %v2962, %v3026
      %v3035 = vsub.f32 0.0, %v2923
      %v3036 = vsub.f32 0.0, %v2924
      %v3037 = vsub.f32 0.0, %v2925
      %v3038 = vsub.f32 0.0, %v2926
      %v3039 = vsub.f32 0.0, %v2927
      %v3040 = vsub.f32 0.0, %v2928
      %v3041 = vsub.f32 0.0, %v2929
      %v3042 = vsub.f32 0.0, %v2930
      %v3043 = vmul.f32 %v3035, %v2923
      %v3044 = vmul.f32 %v3036, %v2924
      %v3045 = vmul.f32 %v3037, %v2925
      %v3046 = vmul.f32 %v3038, %v2926
      %v3047 = vmul.f32 %v3039, %v2927
      %v3048 = vmul.f32 %v3040, %v2928
      %v3049 = vmul.f32 %v3041, %v2929
      %v3050 = vmul.f32 %v3042, %v2930
      %v3051 = vmul.f32 %v3043, 1.442695
      %v3052 = vpow.pop %v3051
      %v3053 = vmul.f32 %v3044, 1.442695
      %v3054 = vpow.pop %v3053
      %v3055 = vmul.f32 %v3045, 1.442695
      %v3056 = vpow.pop %v3055
      %v3057 = vmul.f32 %v3046, 1.442695
      %v3058 = vpow.pop %v3057
      %v3059 = vmul.f32 %v3047, 1.442695
      %v3060 = vpow.pop %v3059
      %v3061 = vmul.f32 %v3048, 1.442695
      %v3062 = vpow.pop %v3061
      %v3063 = vmul.f32 %v3049, 1.442695
      %v3064 = vpow.pop %v3063
      %v3065 = vmul.f32 %v3050, 1.442695
      %v3066 = vpow.pop %v3065
      %v3067 = vmul.f32 %v3027, %v3052
      %v3068 = vmul.f32 %v3028, %v3054
      %v3069 = vmul.f32 %v3029, %v3056
      %v3070 = vmul.f32 %v3030, %v3058
      %v3071 = vmul.f32 %v3031, %v3060
      %v3072 = vmul.f32 %v3032, %v3062
      %v3073 = vmul.f32 %v3033, %v3064
      %v3074 = vmul.f32 %v3034, %v3066
      %v3075 = vsub.f32 1.0, %v3067
      %v3076 = vsub.f32 1.0, %v3068
      %v3077 = vsub.f32 1.0, %v3069
      %v3078 = vsub.f32 1.0, %v3070
      %v3079 = vsub.f32 1.0, %v3071
      %v3080 = vsub.f32 1.0, %v3072
      %v3081 = vsub.f32 1.0, %v3073
      %v3082 = vsub.f32 1.0, %v3074
      %vm3083 = vcmp.ge.f32.partialorder %v2915, 0.0
      %vm3084 = vcmp.ge.f32.partialorder %v2916, 0.0
      %vm3085 = vcmp.ge.f32.partialorder %v2917, 0.0
      %vm3086 = vcmp.ge.f32.partialorder %v2918, 0.0
      %vm3087 = vcmp.ge.f32.partialorder %v2919, 0.0
      %vm3088 = vcmp.ge.f32.partialorder %v2920, 0.0
      %vm3089 = vcmp.ge.f32.partialorder %v2921, 0.0
      %vm3090 = vcmp.ge.f32.partialorder %v2922, 0.0
      %v3091 = vsub.f32 0.0, %v3075
      %v3092 = vsub.f32 0.0, %v3076
      %v3093 = vsub.f32 0.0, %v3077
      %v3094 = vsub.f32 0.0, %v3078
      %v3095 = vsub.f32 0.0, %v3079
      %v3096 = vsub.f32 0.0, %v3080
      %v3097 = vsub.f32 0.0, %v3081
      %v3098 = vsub.f32 0.0, %v3082
      %v3099 = vsel %vm3083, %v3075, %v3091
      %v3100 = vsel %vm3084, %v3076, %v3092
      %v3101 = vsel %vm3085, %v3077, %v3093
      %v3102 = vsel %vm3086, %v3078, %v3094
      %v3103 = vsel %vm3087, %v3079, %v3095
      %v3104 = vsel %vm3088, %v3080, %v3096
      %v3105 = vsel %vm3089, %v3081, %v3097
      %v3106 = vsel %vm3090, %v3082, %v3098
      %v3107 = vmul.f32 %v2877, 0.5
      %v3108 = vmul.f32 %v2882, 0.5
      %v3109 = vmul.f32 %v2887, 0.5
      %v3110 = vmul.f32 %v2892, 0.5
      %v3111 = vmul.f32 %v2897, 0.5
      %v3112 = vmul.f32 %v2902, 0.5
      %v3113 = vmul.f32 %v2907, 0.5
      %v3114 = vmul.f32 %v2912, 0.5
      %v3115 = vadd.f32 %v3099, 1.0
      %v3116 = vadd.f32 %v3100, 1.0
      %v3117 = vadd.f32 %v3101, 1.0
      %v3118 = vadd.f32 %v3102, 1.0
      %v3119 = vadd.f32 %v3103, 1.0
      %v3120 = vadd.f32 %v3104, 1.0
      %v3121 = vadd.f32 %v3105, 1.0
      %v3122 = vadd.f32 %v3106, 1.0
      %v3123 = vmul.f32 %v3107, %v3115
      %v3124 = vmul.f32 %v3108, %v3116
      %v3125 = vmul.f32 %v3109, %v3117
      %v3126 = vmul.f32 %v3110, %v3118
      %v3127 = vmul.f32 %v3111, %v3119
      %v3128 = vmul.f32 %v3112, %v3120
      %v3129 = vmul.f32 %v3113, %v3121
      %v3130 = vmul.f32 %v3114, %v3122
      %v3131 = vld [vmem:[%s10] sm:$0xff]
      %v3132 = vld [vmem:[%s10 + $0x8] sm:$0xff]
      %v3133 = vld [vmem:[%s10 + $0x10] sm:$0xff]
      %v3134 = vld [vmem:[%s10 + $0x18] sm:$0xff]
      %v3135 = vld [vmem:[%s10 + $0x20] sm:$0xff]
      %v3136 = vld [vmem:[%s10 + $0x28] sm:$0xff]
      %v3137 = vld [vmem:[%s10 + $0x30] sm:$0xff]
      %v3138 = vld [vmem:[%s10 + $0x38] sm:$0xff]
      %v3139 = vld [vmem:[%s11] sm:$0x1]
      %v3141 = vlaneseq
      %v3142 = vshrl.u32 %v3141, 7
      %v3143 = vsub.s32 0, %v3142
      %v3144 = vrot.slane %v3139, %v3143
      %v3147 = vsel %vm863, %v3123, 0
      %v3150 = vsel %vm863, %v3124, 0
      %v3153 = vsel %vm863, %v3125, 0
      %v3156 = vsel %vm863, %v3126, 0
      %v3159 = vsel %vm863, %v3127, 0
      %v3162 = vsel %vm863, %v3128, 0
      %v3165 = vsel %vm863, %v3129, 0
      %v3168 = vsel %vm863, %v3130, 0
      %3170 = vmatprep.subr.mxu0 0.0
      %3171 = vmatpush1.msra.mxu0 %v3131
      %3172 = vmatprep.subr.mxu0 0.0
      %3173 = vmatpush1.msra.mxu0 %v3132
      %3174 = vmatprep.subr.mxu0 0.0
      %3175 = vmatpush1.msra.mxu0 %v3133
      %3176 = vmatprep.subr.mxu0 0.0
      %3177 = vmatpush1.msra.mxu0 %v3134
      %3178 = vmatprep.subr.mxu0 0.0
      %3179 = vmatpush1.msra.mxu0 %v3135
      %3180 = vmatprep.subr.mxu0 0.0
      %3181 = vmatpush1.msra.mxu0 %v3136
      %3182 = vmatprep.subr.mxu0 0.0
      %3183 = vmatpush1.msra.mxu0 %v3137
      %3184 = vmatprep.subr.mxu0 0.0
      %3185 = vmatpush1.msra.mxu0 %v3138
      %3186 = vmatprep.subr.mxu0 0.0
      %3187 = vmatpush1.msra.mxu0 0.0
      %3188 = vmatprep.subr.mxu0 0.0
      %3189 = vmatpush1.msra.mxu0 0.0
      %3190 = vmatprep.subr.mxu0 0.0
      %3191 = vmatpush1.msra.mxu0 0.0
      %3192 = vmatprep.subr.mxu0 0.0
      %3193 = vmatpush1.msra.mxu0 0.0
      %3194 = vmatprep.subr.mxu0 0.0
      %3195 = vmatpush1.msra.mxu0 0.0
      %3196 = vmatprep.subr.mxu0 0.0
      %3197 = vmatpush1.msra.mxu0 0.0
      %3198 = vmatprep.subr.mxu0 0.0
      %3199 = vmatpush1.msra.mxu0 0.0
      %3200 = vmatprep.subr.mxu0 0.0
      %3201 = vmatpush1.msra.mxu0 0.0
      %3202 = vmatprep.subr.mxu0 0.0
      %3203 = vmatpush1.msra.mxu0 0.0
      %3204 = vmatprep.subr.mxu0 0.0
      %3205 = vmatpush1.msra.mxu0 0.0
      %3206 = vmatprep.subr.mxu0 0.0
      %3207 = vmatpush1.msra.mxu0 0.0
      %3208 = vmatprep.subr.mxu0 0.0
      %3209 = vmatpush1.msra.mxu0 0.0
      %3210 = vmatprep.subr.mxu0 0.0
      %3211 = vmatpush1.msra.mxu0 0.0
      %3212 = vmatprep.subr.mxu0 0.0
      %3213 = vmatpush1.msra.mxu0 0.0
      %3214 = vmatprep.subr.mxu0 0.0
      %3215 = vmatpush1.msra.mxu0 0.0
      %3216 = vmatprep.subr.mxu0 0.0
      %3217 = vmatpush1.msra.mxu0 0.0
      %3218 = vmatprep.subr.mxu0 0.0
      %3219 = vmatpush1.msra.mxu0 0.0
      %3220 = vmatprep.subr.mxu0 0.0
      %3221 = vmatpush1.msra.mxu0 0.0
      %3222 = vmatprep.subr.mxu0 0.0
      %3223 = vmatpush1.msra.mxu0 0.0
      %3224 = vmatprep.subr.mxu0 0.0
      %3225 = vmatpush1.msra.mxu0 0.0
      %3226 = vmatprep.subr.mxu0 0.0
      %3227 = vmatpush1.msra.mxu0 0.0
      %3228 = vmatprep.subr.mxu0 0.0
      %3229 = vmatpush1.msra.mxu0 0.0
      %3230 = vmatprep.subr.mxu0 0.0
      %3231 = vmatpush1.msra.mxu0 0.0
      %3232 = vmatprep.subr.mxu0 0.0
      %3233 = vmatpush1.msra.mxu0 0.0
      %3234 = vmatprep.mubr.f32.mxu0 0.0
      %3235 = vmatmul.mubr.f32.gmra.mrb[0].mxu0 %v3147
      %v3236 = vpop.f32.mrb[0].mxu0
      %v3237 = vadd.f32 %v3144, %v3236
      %v3238 = vpop.f32.mrb[0].mxu0
      %3239 = vmatprep.mubr.f32.mxu0 0.0
      %3240 = vmatmul.mubr.f32.gmra.mrb[0].mxu0 %v3150
      %v3241 = vpop.f32.mrb[0].mxu0
      %v3242 = vadd.f32 %v3144, %v3241
      %v3243 = vpop.f32.mrb[0].mxu0
      %3244 = vmatprep.mubr.f32.mxu0 0.0
      %3245 = vmatmul.mubr.f32.gmra.mrb[0].mxu0 %v3153
      %v3246 = vpop.f32.mrb[0].mxu0
      %v3247 = vadd.f32 %v3144, %v3246
      %v3248 = vpop.f32.mrb[0].mxu0
      %3249 = vmatprep.mubr.f32.mxu0 0.0
      %3250 = vmatmul.mubr.f32.gmra.mrb[0].mxu0 %v3156
      %v3251 = vpop.f32.mrb[0].mxu0
      %v3252 = vadd.f32 %v3144, %v3251
      %v3253 = vpop.f32.mrb[0].mxu0
      %3254 = vmatprep.mubr.f32.mxu0 0.0
      %3255 = vmatmul.mubr.f32.gmra.mrb[0].mxu0 %v3159
      %v3256 = vpop.f32.mrb[0].mxu0
      %v3257 = vadd.f32 %v3144, %v3256
      %v3258 = vpop.f32.mrb[0].mxu0
      %3259 = vmatprep.mubr.f32.mxu0 0.0
      %3260 = vmatmul.mubr.f32.gmra.mrb[0].mxu0 %v3162
      %v3261 = vpop.f32.mrb[0].mxu0
      %v3262 = vadd.f32 %v3144, %v3261
      %v3263 = vpop.f32.mrb[0].mxu0
      %3264 = vmatprep.mubr.f32.mxu0 0.0
      %3265 = vmatmul.mubr.f32.gmra.mrb[0].mxu0 %v3165
      %v3266 = vpop.f32.mrb[0].mxu0
      %v3267 = vadd.f32 %v3144, %v3266
      %v3268 = vpop.f32.mrb[0].mxu0
      %3269 = vmatprep.mubr.f32.mxu0 0.0
      %3270 = vmatmul.mubr.f32.gmra.mrb[0].mxu0 %v3168
      %v3271 = vpop.f32.mrb[0].mxu0
      %v3272 = vadd.f32 %v3144, %v3271
      %v3273 = vpop.f32.mrb[0].mxu0
      %3274 = vdwg.mxu0
      %v3275 = vadd.f32 %v3237, %v2767
      %v3276 = vadd.f32 %v3242, %v2768
      %v3277 = vadd.f32 %v3247, %v2769
      %v3278 = vadd.f32 %v3252, %v2770
      %v3279 = vadd.f32 %v3257, %v2771
      %v3280 = vadd.f32 %v3262, %v2772
      %v3281 = vadd.f32 %v3267, %v2773
      %v3282 = vadd.f32 %v3272, %v2774
      %v3283 = vld [vmem:[%s12] sm:$0x1]
      %v3284 = vld [vmem:[%s13] sm:$0x1]
      %v3285 = vsel %vm555, %v3275, 0.0
      %3286 = vadd.xlane.f32.xlu0 %v3285
      %v3287 = vpop.xlane.xlu0 %3286
      %v3288 = vsel %vm555, %v3276, 0.0
      %3289 = vadd.xlane.f32.xlu0 %v3288
      %v3290 = vpop.xlane.xlu0 %3289
      %v3291 = vsel %vm555, %v3277, 0.0
      %3292 = vadd.xlane.f32.xlu0 %v3291
      %v3293 = vpop.xlane.xlu0 %3292
      %v3294 = vsel %vm555, %v3278, 0.0
      %3295 = vadd.xlane.f32.xlu0 %v3294
      %v3296 = vpop.xlane.xlu0 %3295
      %v3297 = vsel %vm555, %v3279, 0.0
      %3298 = vadd.xlane.f32.xlu0 %v3297
      %v3299 = vpop.xlane.xlu0 %3298
      %v3300 = vsel %vm555, %v3280, 0.0
      %3301 = vadd.xlane.f32.xlu0 %v3300
      %v3302 = vpop.xlane.xlu0 %3301
      %v3303 = vsel %vm555, %v3281, 0.0
      %3304 = vadd.xlane.f32.xlu0 %v3303
      %v3305 = vpop.xlane.xlu0 %3304
      %v3306 = vsel %vm555, %v3282, 0.0
      %3307 = vadd.xlane.f32.xlu0 %v3306
      %v3308 = vpop.xlane.xlu0 %3307
      %v3309 = vmul.f32 %v3287, %v2666
      %v3310 = vmul.f32 %v3290, %v2666
      %v3311 = vmul.f32 %v3293, %v2666
      %v3312 = vmul.f32 %v3296, %v2666
      %v3313 = vmul.f32 %v3299, %v2666
      %v3314 = vmul.f32 %v3302, %v2666
      %v3315 = vmul.f32 %v3305, %v2666
      %v3316 = vmul.f32 %v3308, %v2666
      %v3317 = vsub.f32 %v3275, %v3309
      %v3318 = vsub.f32 %v3276, %v3310
      %v3319 = vsub.f32 %v3277, %v3311
      %v3320 = vsub.f32 %v3278, %v3312
      %v3321 = vsub.f32 %v3279, %v3313
      %v3322 = vsub.f32 %v3280, %v3314
      %v3323 = vsub.f32 %v3281, %v3315
      %v3324 = vsub.f32 %v3282, %v3316
      %v3325 = vmul.f32 %v3317, %v3317
      %v3326 = vmul.f32 %v3318, %v3318
      %v3327 = vmul.f32 %v3319, %v3319
      %v3328 = vmul.f32 %v3320, %v3320
      %v3329 = vmul.f32 %v3321, %v3321
      %v3330 = vmul.f32 %v3322, %v3322
      %v3331 = vmul.f32 %v3323, %v3323
      %v3332 = vmul.f32 %v3324, %v3324
      %v3333 = vsel %vm555, %v3325, 0.0
      %3334 = vadd.xlane.f32.xlu0 %v3333
      %v3335 = vpop.xlane.xlu0 %3334
      %v3336 = vsel %vm555, %v3326, 0.0
      %3337 = vadd.xlane.f32.xlu0 %v3336
      %v3338 = vpop.xlane.xlu0 %3337
      %v3339 = vsel %vm555, %v3327, 0.0
      %3340 = vadd.xlane.f32.xlu0 %v3339
      %v3341 = vpop.xlane.xlu0 %3340
      %v3342 = vsel %vm555, %v3328, 0.0
      %3343 = vadd.xlane.f32.xlu0 %v3342
      %v3344 = vpop.xlane.xlu0 %3343
      %v3345 = vsel %vm555, %v3329, 0.0
      %3346 = vadd.xlane.f32.xlu0 %v3345
      %v3347 = vpop.xlane.xlu0 %3346
      %v3348 = vsel %vm555, %v3330, 0.0
      %3349 = vadd.xlane.f32.xlu0 %v3348
      %v3350 = vpop.xlane.xlu0 %3349
      %v3351 = vsel %vm555, %v3331, 0.0
      %3352 = vadd.xlane.f32.xlu0 %v3351
      %v3353 = vpop.xlane.xlu0 %3352
      %v3354 = vsel %vm555, %v3332, 0.0
      %3355 = vadd.xlane.f32.xlu0 %v3354
      %v3356 = vpop.xlane.xlu0 %3355
      %v3357 = vmul.f32 %v3335, %v2666
      %v3358 = vmul.f32 %v3338, %v2666
      %v3359 = vmul.f32 %v3341, %v2666
      %v3360 = vmul.f32 %v3344, %v2666
      %v3361 = vmul.f32 %v3347, %v2666
      %v3362 = vmul.f32 %v3350, %v2666
      %v3363 = vmul.f32 %v3353, %v2666
      %v3364 = vmul.f32 %v3356, %v2666
      %v3365 = vadd.f32 %v3357, 1e-12
      %v3366 = vadd.f32 %v3358, 1e-12
      %v3367 = vadd.f32 %v3359, 1e-12
      %v3368 = vadd.f32 %v3360, 1e-12
      %v3369 = vadd.f32 %v3361, 1e-12
      %v3370 = vadd.f32 %v3362, 1e-12
      %v3371 = vadd.f32 %v3363, 1e-12
      %v3372 = vadd.f32 %v3364, 1e-12
      %v3373 = vrsqrt.pop %v3365
      %v3374 = vrsqrt.pop %v3366
      %v3375 = vrsqrt.pop %v3367
      %v3376 = vrsqrt.pop %v3368
      %v3377 = vrsqrt.pop %v3369
      %v3378 = vrsqrt.pop %v3370
      %v3379 = vrsqrt.pop %v3371
      %v3380 = vrsqrt.pop %v3372
      %v3381 = vmul.f32 %v3317, %v3373
      %v3382 = vmul.f32 %v3318, %v3374
      %v3383 = vmul.f32 %v3319, %v3375
      %v3384 = vmul.f32 %v3320, %v3376
      %v3385 = vmul.f32 %v3321, %v3377
      %v3386 = vmul.f32 %v3322, %v3378
      %v3387 = vmul.f32 %v3323, %v3379
      %v3388 = vmul.f32 %v3324, %v3380
      %v3390 = vlaneseq
      %v3391 = vshrl.u32 %v3390, 7
      %v3392 = vsub.s32 0, %v3391
      %v3393 = vrot.slane %v3283, %v3392
      %v3395 = vmul.f32 %v3381, %v3393
      %v3396 = vmul.f32 %v3382, %v3393
      %v3397 = vmul.f32 %v3383, %v3393
      %v3398 = vmul.f32 %v3384, %v3393
      %v3399 = vmul.f32 %v3385, %v3393
      %v3400 = vmul.f32 %v3386, %v3393
      %v3401 = vmul.f32 %v3387, %v3393
      %v3402 = vmul.f32 %v3388, %v3393
      %v3404 = vlaneseq
      %v3405 = vshrl.u32 %v3404, 7
      %v3406 = vsub.s32 0, %v3405
      %v3407 = vrot.slane %v3284, %v3406
      %v3409 = vadd.f32 %v3395, %v3407
      %v3410 = vadd.f32 %v3396, %v3407
      %v3411 = vadd.f32 %v3397, %v3407
      %v3412 = vadd.f32 %v3398, %v3407
      %v3413 = vadd.f32 %v3399, %v3407
      %v3414 = vadd.f32 %v3400, %v3407
      %v3415 = vadd.f32 %v3401, %v3407
      %v3416 = vadd.f32 %v3402, %v3407
      %3417 = vst.msk [vmem:[%s527] sm:$0xff] %vm555, %v3409
      %3418 = vst.msk [vmem:[%s527 + $0x8] sm:$0xff] %vm555, %v3410
      %3419 = vst.msk [vmem:[%s527 + $0x10] sm:$0xff] %vm555, %v3411
      %3420 = vst.msk [vmem:[%s527 + $0x18] sm:$0xff] %vm555, %v3412
      %3421 = vst.msk [vmem:[%s527 + $0x20] sm:$0xff] %vm555, %v3413
      %3422 = vst.msk [vmem:[%s527 + $0x28] sm:$0xff] %vm555, %v3414
      %3423 = vst.msk [vmem:[%s527 + $0x30] sm:$0xff] %vm555, %v3415
      %3424 = vst.msk [vmem:[%s527 + $0x38] sm:$0xff] %vm555, %v3416
      %p3425 = scmp.lt.s32.totalorder %s27, 1
      %s3426 = scalar_select %p3425, %s27, 1
      %s3427 = smul.addr %s3426, 32
      %s3428 = smul.addr %s3427, 8
      %s3429 = scalar_lea.vmem %s14, %s3428
      %p3430 = scmp.lt.s32.totalorder %s27, 1
      %s3431 = scalar_select %p3430, %s27, 1
      %s3432 = smul.addr %s3431, 8
      %s3433 = smul.addr %s3432, 8
      %s3434 = scalar_lea.vmem %s15, %s3433
      // Predicated region
      $region77: #{vqa_forward.9} parent=75 // pred_check
        %p3435 = pneg %p349
      $region78: #{vqa_forward.9} parent=75 // pred_check_branch
        %3437 = sbr.rel (%p3435) target = $region80
      $region79: #{vqa_forward.9} parent=75 // pred_region
        _
      $region80: #{vqa_forward.9} parent=75 // pred_fallthru
        _
      // Predicated region
      $region81: #{vqa_forward.9} parent=75 // pred_check
        %p3438 = pneg %p375
      $region82: #{vqa_forward.9} parent=75 // pred_check_branch
        %3440 = sbr.rel (%p3438) target = $region84
      $region83: #{vqa_forward.9} parent=75 // pred_region
        _
      $region84: #{vqa_forward.9} parent=75 // pred_fallthru
        _
    $region76: #{vqa_forward.9} parent=5 // pred_fallthru
      _
    %p3441 = scmp.le.s32.totalorder 2, %s22
    // Predicated region
    $region85: #{vqa_forward.9} parent=5 // pred_check
      %p3442 = pneg %p3441
    $region86: #{vqa_forward.9} parent=5 // pred_check_branch
      %3444 = sbr.rel (%p3442) target = $region88
    $region87: #{vqa_forward.9} parent=5 // pred_region
      %s3445 = ssub.s32 %s22, 2
      // Predicated region
      $region89: #{vqa_forward.9} parent=87 // pred_check
        %p3446 = pneg %p355
      $region90: #{vqa_forward.9} parent=87 // pred_check_branch
        %3448 = sbr.rel (%p3446) target = $region92
      $region91: #{vqa_forward.9} parent=87 // pred_region
        %p3449 = scmp.lt.s32.totalorder %s28, 1
        %s3450 = scalar_select %p3449, %s28, 1
        %s3451 = smul.addr %s3450, 32
        %s3452 = smul.addr %s3451, 8
        %s3453 = scalar_lea.vmem %s14, %s3452
      $region92: #{vqa_forward.9} parent=87 // pred_fallthru
        _
      // Predicated region
      $region93: #{vqa_forward.9} parent=87 // pred_check
        %p3454 = pneg %p381
      $region94: #{vqa_forward.9} parent=87 // pred_check_branch
        %3456 = sbr.rel (%p3454) target = $region96
      $region95: #{vqa_forward.9} parent=87 // pred_region
        %p3457 = scmp.lt.s32.totalorder %s28, 1
        %s3458 = scalar_select %p3457, %s28, 1
        %s3459 = smul.addr %s3458, 8
        %s3460 = smul.addr %s3459, 8
        %s3461 = scalar_lea.vmem %s15, %s3460
      $region96: #{vqa_forward.9} parent=87 // pred_fallthru
        _
    $region88: #{vqa_forward.9} parent=5 // pred_fallthru
      _
  $region6: #{vqa_forward.9} parent=0 // loop_footer
    %s26 = sadd.s32 1, %s22
  $region7: #{vqa_forward.9} parent=0 // loop_footer_branch
    %21 = sbr.rel target = $region3
  $region8: #{vqa_forward.9} parent=0 // loop_exit
    _

</llo_original>
